<compile_context>
chip_gen: v5e
topology: v5e:2x2
jax: 0.10.0
libtpu: 0.0.40
codegen_flags: <defaults>
</compile_context>

<pallas_src>
import functools

import numpy as np
import jax
import jax.numpy as jnp
from jax.experimental import pallas as pl
from jax.experimental.pallas import tpu as pltpu


def _satt2_kernel(x_ref, w1_ref, w2_ref, o_ref, *, L, N, c_in, groups):
    """One batch element.

    x_ref : (L*N, c_in)         input rows ordered l-major / n-minor
    w1_ref: (groups, c_in, C4)  conv1 weight, regrouped + pre-transposed (wrapper)
    w2_ref: (groups, c_in, C4)  conv2 weight, regrouped + pre-transposed (wrapper)
    o_ref : (L, N, N)           mean_m sigmoid(Q_m K_m^T) per timestep
    """
    C4 = c_in // groups
    x2d = x_ref[...]                                              # (L*N, c_in)

    acc = jnp.zeros((L, N, N), jnp.float32)
    for m in range(groups):                                       # static unroll (4)
        # 1x1 conv projections for this group's output channels -> MXU matmuls.
        q = jnp.dot(x2d, w1_ref[m], preferred_element_type=jnp.float32)   # (L*N, C4)
        k = jnp.dot(x2d, w2_ref[m], preferred_element_type=jnp.float32)   # (L*N, C4)
        q3 = q.reshape(L, N, C4)   # tile-aligned leading-dim split (N % 8 == 0 here)
        k3 = k.reshape(L, N, C4)
        # Per-timestep attention logits: batched MXU matmul over l.
        s = jnp.einsum('lnc,lqc->lnq', q3, k3,
                       preferred_element_type=jnp.float32)        # (L, N, N)
        acc = acc + 1.0 / (1.0 + jnp.exp(-s))                     # sigmoid on EUP

    o_ref[...] = (acc * (1.0 / groups)).astype(o_ref.dtype)       # mean over groups


def satt_2(seq, w1, w2, *, groups=4):
    """SATT_2 forward.  seq: [B, c_in, N, L]; w1, w2: [c_in, c_in] (1x1 conv, no bias).
    Returns [B, L, N, N]."""
    B, c_in, N, L = seq.shape
    assert c_in % groups == 0, "c_in must be divisible by 4 (group count)"
    C4 = c_in // groups

    # Lane-friendly input layout: (B, L*N, c_in), rows l-major / n-minor.
    x_t = jnp.transpose(seq, (0, 3, 2, 1)).reshape(B, L * N, c_in)

    # Regroup 1x1-conv weights by attention group m (out-channel index = c*groups+m)
    # and pre-transpose so the kernel computes x @ W^T as a plain dot.
    # result[m, i, c] = w[c*groups + m, i]  ->  (groups, c_in, C4)
    def regroup(w):
        return jnp.asarray(w, seq.dtype).reshape(C4, groups, c_in).transpose(1, 2, 0)

    w1g = regroup(w1)
    w2g = regroup(w2)

    kernel = functools.partial(_satt2_kernel, L=L, N=N, c_in=c_in, groups=groups)

    # Advisory cost estimate (per review): conv matmuls + grouped attention + sigmoid.
    conv_flops = groups * 2 * (2 * (L * N) * c_in * C4)      # q and k per group
    attn_flops = groups * (2 * L * N * N * C4)
    flops = B * (conv_flops + attn_flops)
    transcendentals = B * groups * L * N * N
    bytes_accessed = 4 * (B * L * N * c_in + B * L * N * N + 2 * groups * c_in * C4)

    return pl.pallas_call(
        kernel,
        out_shape=jax.ShapeDtypeStruct((B, L, N, N), seq.dtype),
        grid=(B,),
        in_specs=[
            pl.BlockSpec((None, L * N, c_in), lambda b: (b, 0, 0)),
            pl.BlockSpec((groups, c_in, C4), lambda b: (0, 0, 0)),
            pl.BlockSpec((groups, c_in, C4), lambda b: (0, 0, 0)),
        ],
        out_specs=pl.BlockSpec((None, L, N, N), lambda b: (b, 0, 0, 0)),
        compiler_params=pltpu.CompilerParams(dimension_semantics=("parallel",)),
        cost_estimate=pl.CostEstimate(flops=flops,
                                      transcendentals=transcendentals,
                                      bytes_accessed=bytes_accessed),
    )(x_t, w1g, w2g)


def satt_2_ref(seq, w1, w2):
    """Pure-JAX reference mirroring the PyTorch forward exactly."""
    B, c_in, N, L = seq.shape
    q = jnp.einsum('oi,binl->bonl', w1, seq)                 # conv1 (1x1, no bias)
    k = jnp.einsum('oi,binl->bonl', w2, seq)                 # conv2
    f1 = q.reshape(B, c_in // 4, 4, N, L).transpose(0, 3, 1, 4, 2)   # b n c l m
    f2 = k.reshape(B, c_in // 4, 4, N, L).transpose(0, 1, 3, 4, 2)   # b c q l m
    logits = jnp.einsum('bnclm,bcqlm->bnqlm', f1, f2)
    logits = logits.transpose(0, 3, 1, 2, 4)                 # b l n q m
    logits = jax.nn.sigmoid(logits)
    return jnp.mean(logits, axis=-1)                         # (B, L, N, N)


if __name__ == "__main__":
    key = jax.random.PRNGKey(0)
    B, c_in, N, L = 2, 16, 16, 12                            # L=12 per the module's LayerNorm hint

    k1, k2, k3 = jax.random.split(key, 3)
    seq = jax.random.normal(k1, (B, c_in, N, L), dtype=jnp.float32)

    # Conv2d(kernel=(1,1), bias=False) default init: uniform(+-1/sqrt(fan_in)), fan_in=c_in.
    bound = 1.0 / np.sqrt(c_in)
    w1 = jax.random.uniform(k2, (c_in, c_in), dtype=jnp.float32, minval=-bound, maxval=bound)
    w2 = jax.random.uniform(k3, (c_in, c_in), dtype=jnp.float32, minval=-bound, maxval=bound)

    out = satt_2(seq, w1, w2)
    out = jax.block_until_ready(out)

    ref = satt_2_ref(seq, w1, w2)
    assert out.shape == (B, L, N, N), out.shape
    np.testing.assert_allclose(np.asarray(out), np.asarray(ref), rtol=1e-3, atol=1e-3)

    print("KERNEL_OK")
</pallas_src>

<mosaic_0001>
module attributes {stable_mosaic.version = 11 : i64} {
  func.func @_satt2_kernel(%arg0: i32, %arg1: memref<1x192x16xf32, #tpu.memory_space<vmem>>, %arg2: memref<4x16x4xf32, #tpu.memory_space<vmem>>, %arg3: memref<4x16x4xf32, #tpu.memory_space<vmem>>, %arg4: memref<1x12x16x16xf32, #tpu.memory_space<vmem>>) attributes {dimension_semantics = [#tpu.dimension_semantics<parallel>], iteration_bounds = array<i64: 2>, scalar_prefetch = 0 : i64, scratch_operands = 0 : i64, tpu.core_type = #tpu.core_type<tc>, window_params = [{transform_indices = @transform_0, window_bounds = array<i64: 1, 192, 16>}, {pipeline_mode = #tpu.pipeline_mode<synchronous>, transform_indices = @transform_1, window_bounds = array<i64: 4, 16, 4>}, {pipeline_mode = #tpu.pipeline_mode<synchronous>, transform_indices = @transform_2, window_bounds = array<i64: 4, 16, 4>}, {transform_indices = @transform_3, window_bounds = array<i64: 1, 12, 16, 16>}]} {
    %c0 = arith.constant 0 : index
    %c0_0 = arith.constant 0 : index
    %c0_1 = arith.constant 0 : index
    %0 = vector.load %arg1[%c0, %c0_0, %c0_1] : memref<1x192x16xf32, #tpu.memory_space<vmem>>, vector<1x192x16xf32>
    %1 = vector.shape_cast %0 : vector<1x192x16xf32> to vector<192x16xf32>
    %cst = arith.constant 0.000000e+00 : f32
    %2 = vector.broadcast %cst : f32 to vector<12x16x16xf32>
    %c0_2 = arith.constant 0 : index
    %c0_3 = arith.constant 0 : index
    %c0_4 = arith.constant 0 : index
    %3 = vector.load %arg2[%c0_2, %c0_3, %c0_4] : memref<4x16x4xf32, #tpu.memory_space<vmem>>, vector<1x16x4xf32>
    %4 = vector.shape_cast %3 : vector<1x16x4xf32> to vector<16x4xf32>
    %cst_5 = arith.constant dense<0.000000e+00> : vector<192x4xf32>
    %5 = tpu.matmul %1, %4, %cst_5 {dimension_numbers = #tpu.dot_dimension_numbers<[1], [0], [0], [1], [0, 0, 1, 1], [], []>} : vector<192x16xf32>, vector<16x4xf32>, vector<192x4xf32> -> vector<192x4xf32>
    %c0_6 = arith.constant 0 : index
    %c0_7 = arith.constant 0 : index
    %c0_8 = arith.constant 0 : index
    %6 = vector.load %arg3[%c0_6, %c0_7, %c0_8] : memref<4x16x4xf32, #tpu.memory_space<vmem>>, vector<1x16x4xf32>
    %7 = vector.shape_cast %6 : vector<1x16x4xf32> to vector<16x4xf32>
    %cst_9 = arith.constant dense<0.000000e+00> : vector<192x4xf32>
    %8 = tpu.matmul %1, %7, %cst_9 {dimension_numbers = #tpu.dot_dimension_numbers<[1], [0], [0], [1], [0, 0, 1, 1], [], []>} : vector<192x16xf32>, vector<16x4xf32>, vector<192x4xf32> -> vector<192x4xf32>
    %9 = vector.shape_cast %5 : vector<192x4xf32> to vector<12x16x4xf32>
    %10 = vector.shape_cast %8 : vector<192x4xf32> to vector<12x16x4xf32>
    "tpu.trace_start"() <{level = 10 : i32, message = "lnc,lqc->lnq"}> : () -> ()
    %cst_10 = arith.constant dense<0.000000e+00> : vector<12x16x16xf32>
    %11 = tpu.matmul %9, %10, %cst_10 {dimension_numbers = #tpu.dot_dimension_numbers<[2], [2], [1], [1], [0, 0, 0, 1, 1, 1], [0], [0]>} : vector<12x16x4xf32>, vector<12x16x4xf32>, vector<12x16x16xf32> -> vector<12x16x16xf32>
    "tpu.trace_stop"() : () -> ()
    %cst_11 = arith.constant 0.000000e+00 : f32
    %12 = vector.broadcast %cst_11 : f32 to vector<12x16x16xf32>
    %13 = arith.subf %12, %11 : vector<12x16x16xf32>
    %14 = math.exp %13 : vector<12x16x16xf32>
    %cst_12 = arith.constant 1.000000e+00 : f32
    %15 = vector.broadcast %cst_12 : f32 to vector<12x16x16xf32>
    %16 = arith.addf %15, %14 : vector<12x16x16xf32>
    %cst_13 = arith.constant 1.000000e+00 : f32
    %17 = vector.broadcast %cst_13 : f32 to vector<12x16x16xf32>
    %18 = arith.divf %17, %16 : vector<12x16x16xf32>
    %19 = arith.addf %2, %18 : vector<12x16x16xf32>
    %c1 = arith.constant 1 : index
    %c0_14 = arith.constant 0 : index
    %c0_15 = arith.constant 0 : index
    %20 = vector.load %arg2[%c1, %c0_14, %c0_15] : memref<4x16x4xf32, #tpu.memory_space<vmem>>, vector<1x16x4xf32>
    %21 = vector.shape_cast %20 : vector<1x16x4xf32> to vector<16x4xf32>
    %cst_16 = arith.constant dense<0.000000e+00> : vector<192x4xf32>
    %22 = tpu.matmul %1, %21, %cst_16 {dimension_numbers = #tpu.dot_dimension_numbers<[1], [0], [0], [1], [0, 0, 1, 1], [], []>} : vector<192x16xf32>, vector<16x4xf32>, vector<192x4xf32> -> vector<192x4xf32>
    %c1_17 = arith.constant 1 : index
    %c0_18 = arith.constant 0 : index
    %c0_19 = arith.constant 0 : index
    %23 = vector.load %arg3[%c1_17, %c0_18, %c0_19] : memref<4x16x4xf32, #tpu.memory_space<vmem>>, vector<1x16x4xf32>
    %24 = vector.shape_cast %23 : vector<1x16x4xf32> to vector<16x4xf32>
    %cst_20 = arith.constant dense<0.000000e+00> : vector<192x4xf32>
    %25 = tpu.matmul %1, %24, %cst_20 {dimension_numbers = #tpu.dot_dimension_numbers<[1], [0], [0], [1], [0, 0, 1, 1], [], []>} : vector<192x16xf32>, vector<16x4xf32>, vector<192x4xf32> -> vector<192x4xf32>
    %26 = vector.shape_cast %22 : vector<192x4xf32> to vector<12x16x4xf32>
    %27 = vector.shape_cast %25 : vector<192x4xf32> to vector<12x16x4xf32>
    "tpu.trace_start"() <{level = 10 : i32, message = "lnc,lqc->lnq"}> : () -> ()
    %cst_21 = arith.constant dense<0.000000e+00> : vector<12x16x16xf32>
    %28 = tpu.matmul %26, %27, %cst_21 {dimension_numbers = #tpu.dot_dimension_numbers<[2], [2], [1], [1], [0, 0, 0, 1, 1, 1], [0], [0]>} : vector<12x16x4xf32>, vector<12x16x4xf32>, vector<12x16x16xf32> -> vector<12x16x16xf32>
    "tpu.trace_stop"() : () -> ()
    %cst_22 = arith.constant 0.000000e+00 : f32
    %29 = vector.broadcast %cst_22 : f32 to vector<12x16x16xf32>
    %30 = arith.subf %29, %28 : vector<12x16x16xf32>
    %31 = math.exp %30 : vector<12x16x16xf32>
    %cst_23 = arith.constant 1.000000e+00 : f32
    %32 = vector.broadcast %cst_23 : f32 to vector<12x16x16xf32>
    %33 = arith.addf %32, %31 : vector<12x16x16xf32>
    %cst_24 = arith.constant 1.000000e+00 : f32
    %34 = vector.broadcast %cst_24 : f32 to vector<12x16x16xf32>
    %35 = arith.divf %34, %33 : vector<12x16x16xf32>
    %36 = arith.addf %19, %35 : vector<12x16x16xf32>
    %c2 = arith.constant 2 : index
    %c0_25 = arith.constant 0 : index
    %c0_26 = arith.constant 0 : index
    %37 = vector.load %arg2[%c2, %c0_25, %c0_26] : memref<4x16x4xf32, #tpu.memory_space<vmem>>, vector<1x16x4xf32>
    %38 = vector.shape_cast %37 : vector<1x16x4xf32> to vector<16x4xf32>
    %cst_27 = arith.constant dense<0.000000e+00> : vector<192x4xf32>
    %39 = tpu.matmul %1, %38, %cst_27 {dimension_numbers = #tpu.dot_dimension_numbers<[1], [0], [0], [1], [0, 0, 1, 1], [], []>} : vector<192x16xf32>, vector<16x4xf32>, vector<192x4xf32> -> vector<192x4xf32>
    %c2_28 = arith.constant 2 : index
    %c0_29 = arith.constant 0 : index
    %c0_30 = arith.constant 0 : index
    %40 = vector.load %arg3[%c2_28, %c0_29, %c0_30] : memref<4x16x4xf32, #tpu.memory_space<vmem>>, vector<1x16x4xf32>
    %41 = vector.shape_cast %40 : vector<1x16x4xf32> to vector<16x4xf32>
    %cst_31 = arith.constant dense<0.000000e+00> : vector<192x4xf32>
    %42 = tpu.matmul %1, %41, %cst_31 {dimension_numbers = #tpu.dot_dimension_numbers<[1], [0], [0], [1], [0, 0, 1, 1], [], []>} : vector<192x16xf32>, vector<16x4xf32>, vector<192x4xf32> -> vector<192x4xf32>
    %43 = vector.shape_cast %39 : vector<192x4xf32> to vector<12x16x4xf32>
    %44 = vector.shape_cast %42 : vector<192x4xf32> to vector<12x16x4xf32>
    "tpu.trace_start"() <{level = 10 : i32, message = "lnc,lqc->lnq"}> : () -> ()
    %cst_32 = arith.constant dense<0.000000e+00> : vector<12x16x16xf32>
    %45 = tpu.matmul %43, %44, %cst_32 {dimension_numbers = #tpu.dot_dimension_numbers<[2], [2], [1], [1], [0, 0, 0, 1, 1, 1], [0], [0]>} : vector<12x16x4xf32>, vector<12x16x4xf32>, vector<12x16x16xf32> -> vector<12x16x16xf32>
    "tpu.trace_stop"() : () -> ()
    %cst_33 = arith.constant 0.000000e+00 : f32
    %46 = vector.broadcast %cst_33 : f32 to vector<12x16x16xf32>
    %47 = arith.subf %46, %45 : vector<12x16x16xf32>
    %48 = math.exp %47 : vector<12x16x16xf32>
    %cst_34 = arith.constant 1.000000e+00 : f32
    %49 = vector.broadcast %cst_34 : f32 to vector<12x16x16xf32>
    %50 = arith.addf %49, %48 : vector<12x16x16xf32>
    %cst_35 = arith.constant 1.000000e+00 : f32
    %51 = vector.broadcast %cst_35 : f32 to vector<12x16x16xf32>
    %52 = arith.divf %51, %50 : vector<12x16x16xf32>
    %53 = arith.addf %36, %52 : vector<12x16x16xf32>
    %c3 = arith.constant 3 : index
    %c0_36 = arith.constant 0 : index
    %c0_37 = arith.constant 0 : index
    %54 = vector.load %arg2[%c3, %c0_36, %c0_37] : memref<4x16x4xf32, #tpu.memory_space<vmem>>, vector<1x16x4xf32>
    %55 = vector.shape_cast %54 : vector<1x16x4xf32> to vector<16x4xf32>
    %cst_38 = arith.constant dense<0.000000e+00> : vector<192x4xf32>
    %56 = tpu.matmul %1, %55, %cst_38 {dimension_numbers = #tpu.dot_dimension_numbers<[1], [0], [0], [1], [0, 0, 1, 1], [], []>} : vector<192x16xf32>, vector<16x4xf32>, vector<192x4xf32> -> vector<192x4xf32>
    %c3_39 = arith.constant 3 : index
    %c0_40 = arith.constant 0 : index
    %c0_41 = arith.constant 0 : index
    %57 = vector.load %arg3[%c3_39, %c0_40, %c0_41] : memref<4x16x4xf32, #tpu.memory_space<vmem>>, vector<1x16x4xf32>
    %58 = vector.shape_cast %57 : vector<1x16x4xf32> to vector<16x4xf32>
    %cst_42 = arith.constant dense<0.000000e+00> : vector<192x4xf32>
    %59 = tpu.matmul %1, %58, %cst_42 {dimension_numbers = #tpu.dot_dimension_numbers<[1], [0], [0], [1], [0, 0, 1, 1], [], []>} : vector<192x16xf32>, vector<16x4xf32>, vector<192x4xf32> -> vector<192x4xf32>
    %60 = vector.shape_cast %56 : vector<192x4xf32> to vector<12x16x4xf32>
    %61 = vector.shape_cast %59 : vector<192x4xf32> to vector<12x16x4xf32>
    "tpu.trace_start"() <{level = 10 : i32, message = "lnc,lqc->lnq"}> : () -> ()
    %cst_43 = arith.constant dense<0.000000e+00> : vector<12x16x16xf32>
    %62 = tpu.matmul %60, %61, %cst_43 {dimension_numbers = #tpu.dot_dimension_numbers<[2], [2], [1], [1], [0, 0, 0, 1, 1, 1], [0], [0]>} : vector<12x16x4xf32>, vector<12x16x4xf32>, vector<12x16x16xf32> -> vector<12x16x16xf32>
    "tpu.trace_stop"() : () -> ()
    %cst_44 = arith.constant 0.000000e+00 : f32
    %63 = vector.broadcast %cst_44 : f32 to vector<12x16x16xf32>
    %64 = arith.subf %63, %62 : vector<12x16x16xf32>
    %65 = math.exp %64 : vector<12x16x16xf32>
    %cst_45 = arith.constant 1.000000e+00 : f32
    %66 = vector.broadcast %cst_45 : f32 to vector<12x16x16xf32>
    %67 = arith.addf %66, %65 : vector<12x16x16xf32>
    %cst_46 = arith.constant 1.000000e+00 : f32
    %68 = vector.broadcast %cst_46 : f32 to vector<12x16x16xf32>
    %69 = arith.divf %68, %67 : vector<12x16x16xf32>
    %70 = arith.addf %53, %69 : vector<12x16x16xf32>
    %cst_47 = arith.constant 2.500000e-01 : f32
    %71 = vector.broadcast %cst_47 : f32 to vector<12x16x16xf32>
    %72 = arith.mulf %70, %71 : vector<12x16x16xf32>
    %c0_48 = arith.constant 0 : index
    %c0_49 = arith.constant 0 : index
    %c0_50 = arith.constant 0 : index
    %c0_51 = arith.constant 0 : index
    %73 = vector.load %arg4[%c0_48, %c0_49, %c0_50, %c0_51] : memref<1x12x16x16xf32, #tpu.memory_space<vmem>>, vector<1x12x16x16xf32>
    %74 = vector.shape_cast %73 : vector<1x12x16x16xf32> to vector<12x16x16xf32>
    %75 = vector.shape_cast %72 : vector<12x16x16xf32> to vector<1x12x16x16xf32>
    tpu.vector_store %arg4[%c0_48, %c0_49, %c0_50, %c0_51], %75 {strides = array<i32>} : memref<1x12x16x16xf32, #tpu.memory_space<vmem>>, vector<1x12x16x16xf32>,
    return
  }
  func.func @transform_0(%arg0: i32) -> (i32, i32, i32) {
    %c0_i32 = arith.constant 0 : i32
    %c0_i32_0 = arith.constant 0 : i32
    %c0_i32_1 = arith.constant 0 : i32
    return %arg0, %c0_i32, %c0_i32_0 : i32, i32, i32
  }
  func.func @transform_1(%arg0: i32) -> (i32, i32, i32) {
    %c0_i32 = arith.constant 0 : i32
    %c0_i32_0 = arith.constant 0 : i32
    %c0_i32_1 = arith.constant 0 : i32
    %c0_i32_2 = arith.constant 0 : i32
    return %c0_i32, %c0_i32_0, %c0_i32_1 : i32, i32, i32
  }
  func.func @transform_2(%arg0: i32) -> (i32, i32, i32) {
    %c0_i32 = arith.constant 0 : i32
    %c0_i32_0 = arith.constant 0 : i32
    %c0_i32_1 = arith.constant 0 : i32
    %c0_i32_2 = arith.constant 0 : i32
    return %c0_i32, %c0_i32_0, %c0_i32_1 : i32, i32, i32
  }
  func.func @transform_3(%arg0: i32) -> (i32, i32, i32, i32) {
    %c0_i32 = arith.constant 0 : i32
    %c0_i32_0 = arith.constant 0 : i32
    %c0_i32_1 = arith.constant 0 : i32
    %c0_i32_2 = arith.constant 0 : i32
    return %arg0, %c0_i32, %c0_i32_0, %c0_i32_1 : i32, i32, i32, i32
  }
}

</mosaic_0001>

<llo_original>
// kernel: tpu_custom_call.1
$region0: #{tpu_custom_call.1}
  #allocation0 [shape = 'u32[]', space=smem, size = 0x4, offset = 0x4, fixed_abs, tag = 'smem constant byte address 0x4 - core index']
  #allocation1 [shape = 'u32[72,128]{1,0:T(1,128)}', space=vmem, size = 0x9000, scoped, tag = 'internal scratch']
  %s0 = inlined_call_operand.vmem [shape: f32[2,192,16], index: 0, kind: input, shape index: {}]
  %s1 = inlined_call_operand.vmem [shape: f32[4,16,4], index: 1, kind: input, shape index: {}]
  %s2 = inlined_call_operand.vmem [shape: f32[4,16,4], index: 2, kind: input, shape index: {}]
  %s3 = inlined_call_operand.hbm [shape: f32[2,12,16,16], index: 3, kind: output, shape index: {}]
  %s4 = sld [smem:[#allocation0]]
  $region45: #{tpu_custom_call.1} parent=0
    _
  %s6 = ssub.s32 1, %s4
  %s7 = scalar_select 0, %s6, %s4
  $region1: #{tpu_custom_call.1} parent=0
    #allocation2 [shape = 'u8[196608]{0}', space=vmem, size = 0x30000, scoped, tag = 'output window, operand 0']
    #allocation3 [shape = 's32[2]{0}', space=sflag, size = 0x8, scoped, tag = 'scoped memory for tpu_custom_call.1']
    %8 = vsyncpa [#allocation3], 0
    %s9 = scalar_lea.sflag [#allocation3], 1
    %10 = vsyncpa %s9, 0
    loop: start=0, step=1, limit=4
    $region2: #{tpu_custom_call.1} parent=1 // loop_pre_header
      _
    $region3: #{tpu_custom_call.1} parent=1 // loop_header
      %s12 = sphi 0, %s16
      %p13 = scmp.ge.s32.totalorder %s12, 4
      %s22 = sphi 0, %s24
      %s25 = sphi 0, %s22
      %s26 = sphi 0, %s25
      %s42 = sphi 0, %s26
      %s46 = sphi 0, %s46
      %s48 = sphi 0, %s46
      %s49 = sphi 0, %s48
      %s63 = sphi 0, %s49
      %s67 = sphi 0, %s67
      %s69 = sphi 0, %s67
      %s70 = sphi 0, %s69
      %s84 = sphi 0, %s70
      %s90 = sphi 0, %s92
      %s93 = sphi 0, %s90
      %s94 = sphi 0, %s93
      %s110 = sphi 0, %s94
    $region4: #{tpu_custom_call.1} parent=1 // loop_header_branch
      %15 = sbr.rel (%p13) target = $region8
    $region5: #{tpu_custom_call.1} parent=1 // loop_body
      %s17 = ssub.s32 %s12, 1
      %s18 = ssub.s32 %s12, 2
      %s19 = sadd.s32 %s12, 1
      %s20 = ssub.s32 %s12, %s19
      %p21 = scmp.eq.s32.totalorder %s20, 0
      %s23 = sadd.s32 %s22, 1
      %s24 = scalar_select %p21, %s22, %s23
      %p27 = pneg %p21
      %p28 = scmp.eq.s32.totalorder %s12, 1
      %p29 = por %p27, %p28
      %p30 = scmp.ne.s32.totalorder %s22, %s25
      %p31 = scmp.eq.s32.totalorder %s12, 0
      %p32 = por %p30, %p31
      %p33 = scmp.ne.s32.totalorder %s22, %s25
      %p34 = scmp.eq.s32.totalorder %s17, 1
      %p35 = por %p33, %p34
      %p36 = scmp.ne.s32.totalorder %s25, %s26
      %p37 = scmp.eq.s32.totalorder %s17, 0
      %p38 = por %p36, %p37
      %p39 = scmp.ne.s32.totalorder %s25, %s26
      %p40 = scmp.eq.s32.totalorder %s18, 1
      %p41 = por %p39, %p40
      %p43 = scmp.ne.s32.totalorder %s26, %s42
      %p44 = scmp.eq.s32.totalorder %s18, 0
      %p45 = por %p43, %p44
      %s47 = sadd.s32 %s46, 1
      %p50 = scmp.eq.s32.totalorder %s12, 1
      %p51 = scmp.ne.s32.totalorder %s46, %s48
      %p52 = scmp.eq.s32.totalorder %s12, 0
      %p53 = por %p51, %p52
      %p54 = scmp.ne.s32.totalorder %s46, %s48
      %p55 = scmp.eq.s32.totalorder %s17, 1
      %p56 = por %p54, %p55
      %p57 = scmp.ne.s32.totalorder %s48, %s49
      %p58 = scmp.eq.s32.totalorder %s17, 0
      %p59 = por %p57, %p58
      %p60 = scmp.ne.s32.totalorder %s48, %s49
      %p61 = scmp.eq.s32.totalorder %s18, 1
      %p62 = por %p60, %p61
      %p64 = scmp.ne.s32.totalorder %s49, %s63
      %p65 = scmp.eq.s32.totalorder %s18, 0
      %p66 = por %p64, %p65
      %s68 = sadd.s32 %s67, 1
      %p71 = scmp.eq.s32.totalorder %s12, 1
      %p72 = scmp.ne.s32.totalorder %s67, %s69
      %p73 = scmp.eq.s32.totalorder %s12, 0
      %p74 = por %p72, %p73
      %p75 = scmp.ne.s32.totalorder %s67, %s69
      %p76 = scmp.eq.s32.totalorder %s17, 1
      %p77 = por %p75, %p76
      %p78 = scmp.ne.s32.totalorder %s69, %s70
      %p79 = scmp.eq.s32.totalorder %s17, 0
      %p80 = por %p78, %p79
      %p81 = scmp.ne.s32.totalorder %s69, %s70
      %p82 = scmp.eq.s32.totalorder %s18, 1
      %p83 = por %p81, %p82
      %p85 = scmp.ne.s32.totalorder %s70, %s84
      %p86 = scmp.eq.s32.totalorder %s18, 0
      %p87 = por %p85, %p86
      %s88 = ssub.s32 %s12, %s19
      %p89 = scmp.eq.s32.totalorder %s88, 0
      %s91 = sadd.s32 %s90, 1
      %s92 = scalar_select %p89, %s90, %s91
      %p95 = pneg %p89
      %p96 = scmp.eq.s32.totalorder %s12, 1
      %p97 = por %p95, %p96
      %p98 = scmp.ne.s32.totalorder %s90, %s93
      %p99 = scmp.eq.s32.totalorder %s12, 0
      %p100 = por %p98, %p99
      %p101 = scmp.ne.s32.totalorder %s90, %s93
      %p102 = scmp.eq.s32.totalorder %s17, 1
      %p103 = por %p101, %p102
      %p104 = scmp.ne.s32.totalorder %s93, %s94
      %p105 = scmp.eq.s32.totalorder %s17, 0
      %p106 = por %p104, %p105
      %p107 = scmp.ne.s32.totalorder %s93, %s94
      %p108 = scmp.eq.s32.totalorder %s18, 1
      %p109 = por %p107, %p108
      %p111 = scmp.ne.s32.totalorder %s94, %s110
      %p112 = scmp.eq.s32.totalorder %s18, 0
      %p113 = por %p111, %p112
      %p114 = scmp.le.s32.totalorder 1, %s12
      %p115 = scmp.lt.s32.totalorder %s12, 3
      %p116 = pnand %p114, %p115
      %p117 = pneg %p116
      // Predicated region
      $region9: #{tpu_custom_call.1} parent=5 // pred_check
        _
      $region10: #{tpu_custom_call.1} parent=5 // pred_check_branch
        %119 = sbr.rel (%p116) target = $region12
      $region11: #{tpu_custom_call.1} parent=5 // pred_region
        %s120 = ssub.s32 %s12, 1
        // Predicated region
        $region13: #{tpu_custom_call.1} parent=11 // pred_check
          %p121 = pneg %p59
        $region14: #{tpu_custom_call.1} parent=11 // pred_check_branch
          %123 = sbr.rel (%p121) target = $region16
        $region15: #{tpu_custom_call.1} parent=11 // pred_region
          _
        $region16: #{tpu_custom_call.1} parent=11 // pred_fallthru
          _
        // Predicated region
        $region17: #{tpu_custom_call.1} parent=11 // pred_check
          %p124 = pneg %p80
        $region18: #{tpu_custom_call.1} parent=11 // pred_check_branch
          %126 = sbr.rel (%p124) target = $region20
        $region19: #{tpu_custom_call.1} parent=11 // pred_region
          _
        $region20: #{tpu_custom_call.1} parent=11 // pred_fallthru
          _
      $region12: #{tpu_custom_call.1} parent=5 // pred_fallthru
        _
      %p127 = scmp.lt.s32.totalorder %s12, 2
      // Predicated region
      $region21: #{tpu_custom_call.1} parent=5 // pred_check
        %p128 = pneg %p127
      $region22: #{tpu_custom_call.1} parent=5 // pred_check_branch
        %130 = sbr.rel (%p128) target = $region24
      $region23: #{tpu_custom_call.1} parent=5 // pred_region
        // Predicated region
        $region25: #{tpu_custom_call.1} parent=23 // pred_check
          %p131 = pneg %p32
        $region26: #{tpu_custom_call.1} parent=23 // pred_check_branch
          %133 = sbr.rel (%p131) target = $region28
        $region27: #{tpu_custom_call.1} parent=23 // pred_region
          %p134 = scmp.lt.s32.totalorder %s12, 1
          %s135 = scalar_select %p134, %s12, 1
          %s136 = smul.addr %s135, 24
          %s137 = smul.addr %s136, 8
          %s138 = scalar_lea.vmem %s0, %s137
        $region28: #{tpu_custom_call.1} parent=23 // pred_fallthru
          _
      $region24: #{tpu_custom_call.1} parent=5 // pred_fallthru
        _
      %p139 = scmp.le.s32.totalorder 1, %s12
      %p140 = scmp.lt.s32.totalorder %s12, 3
      %p141 = pnand %p139, %p140
      %p142 = pneg %p141
      // Predicated region
      $region29: #{tpu_custom_call.1} parent=5 // pred_check
        _
      $region30: #{tpu_custom_call.1} parent=5 // pred_check_branch
        %144 = sbr.rel (%p141) target = $region32
      $region31: #{tpu_custom_call.1} parent=5 // pred_region
        %s145 = ssub.s32 %s12, 1
        %p146 = scmp.lt.s32.totalorder %s17, 1
        %s147 = scalar_select %p146, %s17, 1
        %s148 = smul.addr %s147, 24
        %s149 = smul.addr %s148, 8
        %s150 = scalar_lea.vmem %s0, %s149
        %p151 = pneg %p38
        %p152 = pneg %p35
        %p153 = pneg %p59
        %p154 = pneg %p56
        %p155 = pneg %p80
        %p156 = pneg %p77
        %p157 = pneg %p106
        %p158 = pneg %p103
        %s159 = sand.u32 %s93, 1
        %s160 = scalar_lea.sflag [#allocation3], %s159
        %s161 = sand.u32 %s93, 1
        %s162 = smul.addr %s161, 192
        %s163 = scalar_lea.vmem [#allocation2], %s162
        %p164 = scmp.lt.s32.totalorder %s17, 1
        %s165 = scalar_select %p164, %s17, 1
        %s166 = smul.addr %s165, 24
        %s167 = smul.addr %s166, 8
        %s168 = scalar_lea.vmem %s0, %s167
        %v169 = vld [vmem:[%s168] sm:$0xff]
        %v170 = vld [vmem:[%s168 + $0x8] sm:$0xff]
        %v171 = vld [vmem:[%s168 + $0x10] sm:$0xff]
        %v172 = vld [vmem:[%s168 + $0x18] sm:$0xff]
        %v173 = vld [vmem:[%s168 + $0x20] sm:$0xff]
        %v174 = vld [vmem:[%s168 + $0x28] sm:$0xff]
        %v175 = vld [vmem:[%s168 + $0x30] sm:$0xff]
        %v176 = vld [vmem:[%s168 + $0x38] sm:$0xff]
        %v177 = vld [vmem:[%s168 + $0x40] sm:$0xff]
        %v178 = vld [vmem:[%s168 + $0x48] sm:$0xff]
        %v179 = vld [vmem:[%s168 + $0x50] sm:$0xff]
        %v180 = vld [vmem:[%s168 + $0x58] sm:$0xff]
        %v181 = vld [vmem:[%s168 + $0x60] sm:$0xff]
        %v182 = vld [vmem:[%s168 + $0x68] sm:$0xff]
        %v183 = vld [vmem:[%s168 + $0x70] sm:$0xff]
        %v184 = vld [vmem:[%s168 + $0x78] sm:$0xff]
        %v185 = vld [vmem:[%s168 + $0x80] sm:$0xff]
        %v186 = vld [vmem:[%s168 + $0x88] sm:$0xff]
        %v187 = vld [vmem:[%s168 + $0x90] sm:$0xff]
        %v188 = vld [vmem:[%s168 + $0x98] sm:$0xff]
        %v189 = vld [vmem:[%s168 + $0xa0] sm:$0xff]
        %v190 = vld [vmem:[%s168 + $0xa8] sm:$0xff]
        %v191 = vld [vmem:[%s168 + $0xb0] sm:$0xff]
        %v192 = vld [vmem:[%s168 + $0xb8] sm:$0xff]
        %v193 = vld [vmem:[%s1] sm:$0xff]
        %v194 = vld [vmem:[%s1 + $0x8] sm:$0xff]
        %vm195 = vcmask 130048
        %v197 = vsel %vm195, %v169, 0
        %v200 = vsel %vm195, %v170, 0
        %v203 = vsel %vm195, %v171, 0
        %v206 = vsel %vm195, %v172, 0
        %v209 = vsel %vm195, %v173, 0
        %v212 = vsel %vm195, %v174, 0
        %v215 = vsel %vm195, %v175, 0
        %v218 = vsel %vm195, %v176, 0
        %v221 = vsel %vm195, %v177, 0
        %v224 = vsel %vm195, %v178, 0
        %v227 = vsel %vm195, %v179, 0
        %v230 = vsel %vm195, %v180, 0
        %v233 = vsel %vm195, %v181, 0
        %v236 = vsel %vm195, %v182, 0
        %v239 = vsel %vm195, %v183, 0
        %v242 = vsel %vm195, %v184, 0
        %v245 = vsel %vm195, %v185, 0
        %v248 = vsel %vm195, %v186, 0
        %v251 = vsel %vm195, %v187, 0
        %v254 = vsel %vm195, %v188, 0
        %v257 = vsel %vm195, %v189, 0
        %v260 = vsel %vm195, %v190, 0
        %v263 = vsel %vm195, %v191, 0
        %v266 = vsel %vm195, %v192, 0
        %268 = vmatpush.msra.mxu0 0.0
        %269 = vmatpush.msra.mxu0 0.0
        %270 = vmatpush.msra.mxu0 0.0
        %271 = vmatpush.msra.mxu0 0.0
        %272 = vmatpush.msra.mxu0 0.0
        %273 = vmatpush.msra.mxu0 0.0
        %274 = vmatpush.msra.mxu0 0.0
        %275 = vmatpush.msra.mxu0 0.0
        %276 = vmatpush.msra.mxu0 0.0
        %277 = vmatpush.msra.mxu0 0.0
        %278 = vmatpush.msra.mxu0 0.0
        %279 = vmatpush.msra.mxu0 0.0
        %280 = vmatpush.msra.mxu0 0.0
        %281 = vmatpush.msra.mxu0 0.0
        %282 = vmatpush.msra.mxu0 %v194
        %283 = vmatpush.msra.mxu0 %v193
        %284 = vmatmul.f32.gmra.mxu0 %v197
        %v285 = vpop.f32.mrf.mxu0
        %v286 = vadd.f32 0.0, %v285
        %287 = vmatmul.f32.gmra.mxu0 %v200
        %v288 = vpop.f32.mrf.mxu0
        %v289 = vadd.f32 0.0, %v288
        %290 = vmatmul.f32.gmra.mxu0 %v203
        %v291 = vpop.f32.mrf.mxu0
        %v292 = vadd.f32 0.0, %v291
        %293 = vmatmul.f32.gmra.mxu0 %v206
        %v294 = vpop.f32.mrf.mxu0
        %v295 = vadd.f32 0.0, %v294
        %296 = vmatmul.f32.gmra.mxu0 %v209
        %v297 = vpop.f32.mrf.mxu0
        %v298 = vadd.f32 0.0, %v297
        %299 = vmatmul.f32.gmra.mxu0 %v212
        %v300 = vpop.f32.mrf.mxu0
        %v301 = vadd.f32 0.0, %v300
        %302 = vmatmul.f32.gmra.mxu0 %v215
        %v303 = vpop.f32.mrf.mxu0
        %v304 = vadd.f32 0.0, %v303
        %305 = vmatmul.f32.gmra.mxu0 %v218
        %v306 = vpop.f32.mrf.mxu0
        %v307 = vadd.f32 0.0, %v306
        %308 = vmatmul.f32.gmra.mxu0 %v221
        %v309 = vpop.f32.mrf.mxu0
        %v310 = vadd.f32 0.0, %v309
        %311 = vmatmul.f32.gmra.mxu0 %v224
        %v312 = vpop.f32.mrf.mxu0
        %v313 = vadd.f32 0.0, %v312
        %314 = vmatmul.f32.gmra.mxu0 %v227
        %v315 = vpop.f32.mrf.mxu0
        %v316 = vadd.f32 0.0, %v315
        %317 = vmatmul.f32.gmra.mxu0 %v230
        %v318 = vpop.f32.mrf.mxu0
        %v319 = vadd.f32 0.0, %v318
        %320 = vmatmul.f32.gmra.mxu0 %v233
        %v321 = vpop.f32.mrf.mxu0
        %v322 = vadd.f32 0.0, %v321
        %323 = vmatmul.f32.gmra.mxu0 %v236
        %v324 = vpop.f32.mrf.mxu0
        %v325 = vadd.f32 0.0, %v324
        %326 = vmatmul.f32.gmra.mxu0 %v239
        %v327 = vpop.f32.mrf.mxu0
        %v328 = vadd.f32 0.0, %v327
        %329 = vmatmul.f32.gmra.mxu0 %v242
        %v330 = vpop.f32.mrf.mxu0
        %v331 = vadd.f32 0.0, %v330
        %332 = vmatmul.f32.gmra.mxu0 %v245
        %v333 = vpop.f32.mrf.mxu0
        %v334 = vadd.f32 0.0, %v333
        %335 = vmatmul.f32.gmra.mxu0 %v248
        %v336 = vpop.f32.mrf.mxu0
        %v337 = vadd.f32 0.0, %v336
        %338 = vmatmul.f32.gmra.mxu0 %v251
        %v339 = vpop.f32.mrf.mxu0
        %v340 = vadd.f32 0.0, %v339
        %341 = vmatmul.f32.gmra.mxu0 %v254
        %v342 = vpop.f32.mrf.mxu0
        %v343 = vadd.f32 0.0, %v342
        %344 = vmatmul.f32.gmra.mxu0 %v257
        %v345 = vpop.f32.mrf.mxu0
        %v346 = vadd.f32 0.0, %v345
        %347 = vmatmul.f32.gmra.mxu0 %v260
        %v348 = vpop.f32.mrf.mxu0
        %v349 = vadd.f32 0.0, %v348
        %350 = vmatmul.f32.gmra.mxu0 %v263
        %v351 = vpop.f32.mrf.mxu0
        %v352 = vadd.f32 0.0, %v351
        %353 = vmatmul.f32.gmra.mxu0 %v266
        %v354 = vpop.f32.mrf.mxu0
        %v355 = vadd.f32 0.0, %v354
        %356 = vdwg.mxu0
        %v357 = vld [vmem:[%s2] sm:$0xff]
        %v358 = vld [vmem:[%s2 + $0x8] sm:$0xff]
        %359 = vmatpush.msra.mxu0 0.0
        %360 = vmatpush.msra.mxu0 0.0
        %361 = vmatpush.msra.mxu0 0.0
        %362 = vmatpush.msra.mxu0 0.0
        %363 = vmatpush.msra.mxu0 0.0
        %364 = vmatpush.msra.mxu0 0.0
        %365 = vmatpush.msra.mxu0 0.0
        %366 = vmatpush.msra.mxu0 0.0
        %367 = vmatpush.msra.mxu0 0.0
        %368 = vmatpush.msra.mxu0 0.0
        %369 = vmatpush.msra.mxu0 0.0
        %370 = vmatpush.msra.mxu0 0.0
        %371 = vmatpush.msra.mxu0 0.0
        %372 = vmatpush.msra.mxu0 0.0
        %373 = vmatpush.msra.mxu0 %v358
        %374 = vmatpush.msra.mxu0 %v357
        %375 = vmatmul.f32.gmra.mxu0 %v197
        %v376 = vpop.f32.mrf.mxu0
        %v377 = vadd.f32 0.0, %v376
        %378 = vmatmul.f32.gmra.mxu0 %v200
        %v379 = vpop.f32.mrf.mxu0
        %v380 = vadd.f32 0.0, %v379
        %381 = vmatmul.f32.gmra.mxu0 %v203
        %v382 = vpop.f32.mrf.mxu0
        %v383 = vadd.f32 0.0, %v382
        %384 = vmatmul.f32.gmra.mxu0 %v206
        %v385 = vpop.f32.mrf.mxu0
        %v386 = vadd.f32 0.0, %v385
        %387 = vmatmul.f32.gmra.mxu0 %v209
        %v388 = vpop.f32.mrf.mxu0
        %v389 = vadd.f32 0.0, %v388
        %390 = vmatmul.f32.gmra.mxu0 %v212
        %v391 = vpop.f32.mrf.mxu0
        %v392 = vadd.f32 0.0, %v391
        %393 = vmatmul.f32.gmra.mxu0 %v215
        %v394 = vpop.f32.mrf.mxu0
        %v395 = vadd.f32 0.0, %v394
        %396 = vmatmul.f32.gmra.mxu0 %v218
        %v397 = vpop.f32.mrf.mxu0
        %v398 = vadd.f32 0.0, %v397
        %399 = vmatmul.f32.gmra.mxu0 %v221
        %v400 = vpop.f32.mrf.mxu0
        %v401 = vadd.f32 0.0, %v400
        %402 = vmatmul.f32.gmra.mxu0 %v224
        %v403 = vpop.f32.mrf.mxu0
        %v404 = vadd.f32 0.0, %v403
        %405 = vmatmul.f32.gmra.mxu0 %v227
        %v406 = vpop.f32.mrf.mxu0
        %v407 = vadd.f32 0.0, %v406
        %408 = vmatmul.f32.gmra.mxu0 %v230
        %v409 = vpop.f32.mrf.mxu0
        %v410 = vadd.f32 0.0, %v409
        %411 = vmatmul.f32.gmra.mxu0 %v233
        %v412 = vpop.f32.mrf.mxu0
        %v413 = vadd.f32 0.0, %v412
        %414 = vmatmul.f32.gmra.mxu0 %v236
        %v415 = vpop.f32.mrf.mxu0
        %v416 = vadd.f32 0.0, %v415
        %417 = vmatmul.f32.gmra.mxu0 %v239
        %v418 = vpop.f32.mrf.mxu0
        %v419 = vadd.f32 0.0, %v418
        %420 = vmatmul.f32.gmra.mxu0 %v242
        %v421 = vpop.f32.mrf.mxu0
        %v422 = vadd.f32 0.0, %v421
        %423 = vmatmul.f32.gmra.mxu0 %v245
        %v424 = vpop.f32.mrf.mxu0
        %v425 = vadd.f32 0.0, %v424
        %426 = vmatmul.f32.gmra.mxu0 %v248
        %v427 = vpop.f32.mrf.mxu0
        %v428 = vadd.f32 0.0, %v427
        %429 = vmatmul.f32.gmra.mxu0 %v251
        %v430 = vpop.f32.mrf.mxu0
        %v431 = vadd.f32 0.0, %v430
        %432 = vmatmul.f32.gmra.mxu0 %v254
        %v433 = vpop.f32.mrf.mxu0
        %v434 = vadd.f32 0.0, %v433
        %435 = vmatmul.f32.gmra.mxu0 %v257
        %v436 = vpop.f32.mrf.mxu0
        %v437 = vadd.f32 0.0, %v436
        %438 = vmatmul.f32.gmra.mxu0 %v260
        %v439 = vpop.f32.mrf.mxu0
        %v440 = vadd.f32 0.0, %v439
        %441 = vmatmul.f32.gmra.mxu0 %v263
        %v442 = vpop.f32.mrf.mxu0
        %v443 = vadd.f32 0.0, %v442
        %444 = vmatmul.f32.gmra.mxu0 %v266
        %v445 = vpop.f32.mrf.mxu0
        %v446 = vadd.f32 0.0, %v445
        %447 = vdwg.mxu0
        %vm448 = vcmask 31744
        %v450 = vsel %vm448, %v286, 0
        %v453 = vsel %vm448, %v289, 0
        %v456 = vsel %vm448, %v377, 0
        %v459 = vsel %vm448, %v380, 0
        %461 = vmatpush.xpose.msra.mxu0 0.0
        %462 = vmatpush.xpose.msra.mxu0 0.0
        %463 = vmatpush.xpose.msra.mxu0 0.0
        %464 = vmatpush.xpose.msra.mxu0 0.0
        %465 = vmatpush.xpose.msra.mxu0 0.0
        %466 = vmatpush.xpose.msra.mxu0 0.0
        %467 = vmatpush.xpose.msra.mxu0 0.0
        %468 = vmatpush.xpose.msra.mxu0 0.0
        %469 = vmatpush.xpose.msra.mxu0 0.0
        %470 = vmatpush.xpose.msra.mxu0 0.0
        %471 = vmatpush.xpose.msra.mxu0 0.0
        %472 = vmatpush.xpose.msra.mxu0 0.0
        %473 = vmatpush.xpose.msra.mxu0 0.0
        %474 = vmatpush.xpose.msra.mxu0 0.0
        %475 = vmatpush.xpose.msra.mxu0 %v459
        %476 = vmatpush.xpose.msra.mxu0 %v456
        %477 = vmatmul.f32.gmra.mxu0 %v450
        %v478 = vpop.f32.mrf.mxu0
        %v479 = vadd.f32 0.0, %v478
        %480 = vmatmul.f32.gmra.mxu0 %v453
        %v481 = vpop.f32.mrf.mxu0
        %v482 = vadd.f32 0.0, %v481
        %483 = vdwg.mxu0
        %v485 = vsel %vm448, %v292, 0
        %v488 = vsel %vm448, %v295, 0
        %v491 = vsel %vm448, %v383, 0
        %v494 = vsel %vm448, %v386, 0
        %496 = vmatpush.xpose.msra.mxu0 0.0
        %497 = vmatpush.xpose.msra.mxu0 0.0
        %498 = vmatpush.xpose.msra.mxu0 0.0
        %499 = vmatpush.xpose.msra.mxu0 0.0
        %500 = vmatpush.xpose.msra.mxu0 0.0
        %501 = vmatpush.xpose.msra.mxu0 0.0
        %502 = vmatpush.xpose.msra.mxu0 0.0
        %503 = vmatpush.xpose.msra.mxu0 0.0
        %504 = vmatpush.xpose.msra.mxu0 0.0
        %505 = vmatpush.xpose.msra.mxu0 0.0
        %506 = vmatpush.xpose.msra.mxu0 0.0
        %507 = vmatpush.xpose.msra.mxu0 0.0
        %508 = vmatpush.xpose.msra.mxu0 0.0
        %509 = vmatpush.xpose.msra.mxu0 0.0
        %510 = vmatpush.xpose.msra.mxu0 %v494
        %511 = vmatpush.xpose.msra.mxu0 %v491
        %512 = vmatmul.f32.gmra.mxu0 %v485
        %v513 = vpop.f32.mrf.mxu0
        %v514 = vadd.f32 0.0, %v513
        %515 = vmatmul.f32.gmra.mxu0 %v488
        %v516 = vpop.f32.mrf.mxu0
        %v517 = vadd.f32 0.0, %v516
        %518 = vdwg.mxu0
        %v520 = vsel %vm448, %v298, 0
        %v523 = vsel %vm448, %v301, 0
        %v526 = vsel %vm448, %v389, 0
        %v529 = vsel %vm448, %v392, 0
        %531 = vmatpush.xpose.msra.mxu0 0.0
        %532 = vmatpush.xpose.msra.mxu0 0.0
        %533 = vmatpush.xpose.msra.mxu0 0.0
        %534 = vmatpush.xpose.msra.mxu0 0.0
        %535 = vmatpush.xpose.msra.mxu0 0.0
        %536 = vmatpush.xpose.msra.mxu0 0.0
        %537 = vmatpush.xpose.msra.mxu0 0.0
        %538 = vmatpush.xpose.msra.mxu0 0.0
        %539 = vmatpush.xpose.msra.mxu0 0.0
        %540 = vmatpush.xpose.msra.mxu0 0.0
        %541 = vmatpush.xpose.msra.mxu0 0.0
        %542 = vmatpush.xpose.msra.mxu0 0.0
        %543 = vmatpush.xpose.msra.mxu0 0.0
        %544 = vmatpush.xpose.msra.mxu0 0.0
        %545 = vmatpush.xpose.msra.mxu0 %v529
        %546 = vmatpush.xpose.msra.mxu0 %v526
        %547 = vmatmul.f32.gmra.mxu0 %v520
        %v548 = vpop.f32.mrf.mxu0
        %v549 = vadd.f32 0.0, %v548
        %550 = vmatmul.f32.gmra.mxu0 %v523
        %v551 = vpop.f32.mrf.mxu0
        %v552 = vadd.f32 0.0, %v551
        %553 = vdwg.mxu0
        %v555 = vsel %vm448, %v304, 0
        %v558 = vsel %vm448, %v307, 0
        %v561 = vsel %vm448, %v395, 0
        %v564 = vsel %vm448, %v398, 0
        %566 = vmatpush.xpose.msra.mxu0 0.0
        %567 = vmatpush.xpose.msra.mxu0 0.0
        %568 = vmatpush.xpose.msra.mxu0 0.0
        %569 = vmatpush.xpose.msra.mxu0 0.0
        %570 = vmatpush.xpose.msra.mxu0 0.0
        %571 = vmatpush.xpose.msra.mxu0 0.0
        %572 = vmatpush.xpose.msra.mxu0 0.0
        %573 = vmatpush.xpose.msra.mxu0 0.0
        %574 = vmatpush.xpose.msra.mxu0 0.0
        %575 = vmatpush.xpose.msra.mxu0 0.0
        %576 = vmatpush.xpose.msra.mxu0 0.0
        %577 = vmatpush.xpose.msra.mxu0 0.0
        %578 = vmatpush.xpose.msra.mxu0 0.0
        %579 = vmatpush.xpose.msra.mxu0 0.0
        %580 = vmatpush.xpose.msra.mxu0 %v564
        %581 = vmatpush.xpose.msra.mxu0 %v561
        %582 = vmatmul.f32.gmra.mxu0 %v555
        %v583 = vpop.f32.mrf.mxu0
        %v584 = vadd.f32 0.0, %v583
        %585 = vmatmul.f32.gmra.mxu0 %v558
        %v586 = vpop.f32.mrf.mxu0
        %v587 = vadd.f32 0.0, %v586
        %588 = vdwg.mxu0
        %v590 = vsel %vm448, %v310, 0
        %v593 = vsel %vm448, %v313, 0
        %v596 = vsel %vm448, %v401, 0
        %v599 = vsel %vm448, %v404, 0
        %601 = vmatpush.xpose.msra.mxu0 0.0
        %602 = vmatpush.xpose.msra.mxu0 0.0
        %603 = vmatpush.xpose.msra.mxu0 0.0
        %604 = vmatpush.xpose.msra.mxu0 0.0
        %605 = vmatpush.xpose.msra.mxu0 0.0
        %606 = vmatpush.xpose.msra.mxu0 0.0
        %607 = vmatpush.xpose.msra.mxu0 0.0
        %608 = vmatpush.xpose.msra.mxu0 0.0
        %609 = vmatpush.xpose.msra.mxu0 0.0
        %610 = vmatpush.xpose.msra.mxu0 0.0
        %611 = vmatpush.xpose.msra.mxu0 0.0
        %612 = vmatpush.xpose.msra.mxu0 0.0
        %613 = vmatpush.xpose.msra.mxu0 0.0
        %614 = vmatpush.xpose.msra.mxu0 0.0
        %615 = vmatpush.xpose.msra.mxu0 %v599
        %616 = vmatpush.xpose.msra.mxu0 %v596
        %617 = vmatmul.f32.gmra.mxu0 %v590
        %v618 = vpop.f32.mrf.mxu0
        %v619 = vadd.f32 0.0, %v618
        %620 = vmatmul.f32.gmra.mxu0 %v593
        %v621 = vpop.f32.mrf.mxu0
        %v622 = vadd.f32 0.0, %v621
        %623 = vdwg.mxu0
        %v625 = vsel %vm448, %v316, 0
        %v628 = vsel %vm448, %v319, 0
        %v631 = vsel %vm448, %v407, 0
        %v634 = vsel %vm448, %v410, 0
        %636 = vmatpush.xpose.msra.mxu0 0.0
        %637 = vmatpush.xpose.msra.mxu0 0.0
        %638 = vmatpush.xpose.msra.mxu0 0.0
        %639 = vmatpush.xpose.msra.mxu0 0.0
        %640 = vmatpush.xpose.msra.mxu0 0.0
        %641 = vmatpush.xpose.msra.mxu0 0.0
        %642 = vmatpush.xpose.msra.mxu0 0.0
        %643 = vmatpush.xpose.msra.mxu0 0.0
        %644 = vmatpush.xpose.msra.mxu0 0.0
        %645 = vmatpush.xpose.msra.mxu0 0.0
        %646 = vmatpush.xpose.msra.mxu0 0.0
        %647 = vmatpush.xpose.msra.mxu0 0.0
        %648 = vmatpush.xpose.msra.mxu0 0.0
        %649 = vmatpush.xpose.msra.mxu0 0.0
        %650 = vmatpush.xpose.msra.mxu0 %v634
        %651 = vmatpush.xpose.msra.mxu0 %v631
        %652 = vmatmul.f32.gmra.mxu0 %v625
        %v653 = vpop.f32.mrf.mxu0
        %v654 = vadd.f32 0.0, %v653
        %655 = vmatmul.f32.gmra.mxu0 %v628
        %v656 = vpop.f32.mrf.mxu0
        %v657 = vadd.f32 0.0, %v656
        %658 = vdwg.mxu0
        %v660 = vsel %vm448, %v322, 0
        %v663 = vsel %vm448, %v325, 0
        %v666 = vsel %vm448, %v413, 0
        %v669 = vsel %vm448, %v416, 0
        %671 = vmatpush.xpose.msra.mxu0 0.0
        %672 = vmatpush.xpose.msra.mxu0 0.0
        %673 = vmatpush.xpose.msra.mxu0 0.0
        %674 = vmatpush.xpose.msra.mxu0 0.0
        %675 = vmatpush.xpose.msra.mxu0 0.0
        %676 = vmatpush.xpose.msra.mxu0 0.0
        %677 = vmatpush.xpose.msra.mxu0 0.0
        %678 = vmatpush.xpose.msra.mxu0 0.0
        %679 = vmatpush.xpose.msra.mxu0 0.0
        %680 = vmatpush.xpose.msra.mxu0 0.0
        %681 = vmatpush.xpose.msra.mxu0 0.0
        %682 = vmatpush.xpose.msra.mxu0 0.0
        %683 = vmatpush.xpose.msra.mxu0 0.0
        %684 = vmatpush.xpose.msra.mxu0 0.0
        %685 = vmatpush.xpose.msra.mxu0 %v669
        %686 = vmatpush.xpose.msra.mxu0 %v666
        %687 = vmatmul.f32.gmra.mxu0 %v660
        %v688 = vpop.f32.mrf.mxu0
        %v689 = vadd.f32 0.0, %v688
        %690 = vmatmul.f32.gmra.mxu0 %v663
        %v691 = vpop.f32.mrf.mxu0
        %v692 = vadd.f32 0.0, %v691
        %693 = vdwg.mxu0
        %v695 = vsel %vm448, %v328, 0
        %v698 = vsel %vm448, %v331, 0
        %v701 = vsel %vm448, %v419, 0
        %v704 = vsel %vm448, %v422, 0
        %706 = vmatpush.xpose.msra.mxu0 0.0
        %707 = vmatpush.xpose.msra.mxu0 0.0
        %708 = vmatpush.xpose.msra.mxu0 0.0
        %709 = vmatpush.xpose.msra.mxu0 0.0
        %710 = vmatpush.xpose.msra.mxu0 0.0
        %711 = vmatpush.xpose.msra.mxu0 0.0
        %712 = vmatpush.xpose.msra.mxu0 0.0
        %713 = vmatpush.xpose.msra.mxu0 0.0
        %714 = vmatpush.xpose.msra.mxu0 0.0
        %715 = vmatpush.xpose.msra.mxu0 0.0
        %716 = vmatpush.xpose.msra.mxu0 0.0
        %717 = vmatpush.xpose.msra.mxu0 0.0
        %718 = vmatpush.xpose.msra.mxu0 0.0
        %719 = vmatpush.xpose.msra.mxu0 0.0
        %720 = vmatpush.xpose.msra.mxu0 %v704
        %721 = vmatpush.xpose.msra.mxu0 %v701
        %722 = vmatmul.f32.gmra.mxu0 %v695
        %v723 = vpop.f32.mrf.mxu0
        %v724 = vadd.f32 0.0, %v723
        %725 = vmatmul.f32.gmra.mxu0 %v698
        %v726 = vpop.f32.mrf.mxu0
        %v727 = vadd.f32 0.0, %v726
        %728 = vdwg.mxu0
        %v730 = vsel %vm448, %v334, 0
        %v733 = vsel %vm448, %v337, 0
        %v736 = vsel %vm448, %v425, 0
        %v739 = vsel %vm448, %v428, 0
        %741 = vmatpush.xpose.msra.mxu0 0.0
        %742 = vmatpush.xpose.msra.mxu0 0.0
        %743 = vmatpush.xpose.msra.mxu0 0.0
        %744 = vmatpush.xpose.msra.mxu0 0.0
        %745 = vmatpush.xpose.msra.mxu0 0.0
        %746 = vmatpush.xpose.msra.mxu0 0.0
        %747 = vmatpush.xpose.msra.mxu0 0.0
        %748 = vmatpush.xpose.msra.mxu0 0.0
        %749 = vmatpush.xpose.msra.mxu0 0.0
        %750 = vmatpush.xpose.msra.mxu0 0.0
        %751 = vmatpush.xpose.msra.mxu0 0.0
        %752 = vmatpush.xpose.msra.mxu0 0.0
        %753 = vmatpush.xpose.msra.mxu0 0.0
        %754 = vmatpush.xpose.msra.mxu0 0.0
        %755 = vmatpush.xpose.msra.mxu0 %v739
        %756 = vmatpush.xpose.msra.mxu0 %v736
        %757 = vmatmul.f32.gmra.mxu0 %v730
        %v758 = vpop.f32.mrf.mxu0
        %v759 = vadd.f32 0.0, %v758
        %760 = vmatmul.f32.gmra.mxu0 %v733
        %v761 = vpop.f32.mrf.mxu0
        %v762 = vadd.f32 0.0, %v761
        %763 = vdwg.mxu0
        %v765 = vsel %vm448, %v340, 0
        %v768 = vsel %vm448, %v343, 0
        %v771 = vsel %vm448, %v431, 0
        %v774 = vsel %vm448, %v434, 0
        %776 = vmatpush.xpose.msra.mxu0 0.0
        %777 = vmatpush.xpose.msra.mxu0 0.0
        %778 = vmatpush.xpose.msra.mxu0 0.0
        %779 = vmatpush.xpose.msra.mxu0 0.0
        %780 = vmatpush.xpose.msra.mxu0 0.0
        %781 = vmatpush.xpose.msra.mxu0 0.0
        %782 = vmatpush.xpose.msra.mxu0 0.0
        %783 = vmatpush.xpose.msra.mxu0 0.0
        %784 = vmatpush.xpose.msra.mxu0 0.0
        %785 = vmatpush.xpose.msra.mxu0 0.0
        %786 = vmatpush.xpose.msra.mxu0 0.0
        %787 = vmatpush.xpose.msra.mxu0 0.0
        %788 = vmatpush.xpose.msra.mxu0 0.0
        %789 = vmatpush.xpose.msra.mxu0 0.0
        %790 = vmatpush.xpose.msra.mxu0 %v774
        %791 = vmatpush.xpose.msra.mxu0 %v771
        %792 = vmatmul.f32.gmra.mxu0 %v765
        %v793 = vpop.f32.mrf.mxu0
        %v794 = vadd.f32 0.0, %v793
        %795 = vmatmul.f32.gmra.mxu0 %v768
        %v796 = vpop.f32.mrf.mxu0
        %v797 = vadd.f32 0.0, %v796
        %798 = vdwg.mxu0
        %v800 = vsel %vm448, %v346, 0
        %v803 = vsel %vm448, %v349, 0
        %v806 = vsel %vm448, %v437, 0
        %v809 = vsel %vm448, %v440, 0
        %811 = vmatpush.xpose.msra.mxu0 0.0
        %812 = vmatpush.xpose.msra.mxu0 0.0
        %813 = vmatpush.xpose.msra.mxu0 0.0
        %814 = vmatpush.xpose.msra.mxu0 0.0
        %815 = vmatpush.xpose.msra.mxu0 0.0
        %816 = vmatpush.xpose.msra.mxu0 0.0
        %817 = vmatpush.xpose.msra.mxu0 0.0
        %818 = vmatpush.xpose.msra.mxu0 0.0
        %819 = vmatpush.xpose.msra.mxu0 0.0
        %820 = vmatpush.xpose.msra.mxu0 0.0
        %821 = vmatpush.xpose.msra.mxu0 0.0
        %822 = vmatpush.xpose.msra.mxu0 0.0
        %823 = vmatpush.xpose.msra.mxu0 0.0
        %824 = vmatpush.xpose.msra.mxu0 0.0
        %825 = vmatpush.xpose.msra.mxu0 %v809
        %826 = vmatpush.xpose.msra.mxu0 %v806
        %827 = vmatmul.f32.gmra.mxu0 %v800
        %v828 = vpop.f32.mrf.mxu0
        %v829 = vadd.f32 0.0, %v828
        %830 = vmatmul.f32.gmra.mxu0 %v803
        %v831 = vpop.f32.mrf.mxu0
        %v832 = vadd.f32 0.0, %v831
        %833 = vdwg.mxu0
        %v835 = vsel %vm448, %v352, 0
        %v838 = vsel %vm448, %v355, 0
        %v841 = vsel %vm448, %v443, 0
        %v844 = vsel %vm448, %v446, 0
        %846 = vmatpush.xpose.msra.mxu0 0.0
        %847 = vmatpush.xpose.msra.mxu0 0.0
        %848 = vmatpush.xpose.msra.mxu0 0.0
        %849 = vmatpush.xpose.msra.mxu0 0.0
        %850 = vmatpush.xpose.msra.mxu0 0.0
        %851 = vmatpush.xpose.msra.mxu0 0.0
        %852 = vmatpush.xpose.msra.mxu0 0.0
        %853 = vmatpush.xpose.msra.mxu0 0.0
        %854 = vmatpush.xpose.msra.mxu0 0.0
        %855 = vmatpush.xpose.msra.mxu0 0.0
        %856 = vmatpush.xpose.msra.mxu0 0.0
        %857 = vmatpush.xpose.msra.mxu0 0.0
        %858 = vmatpush.xpose.msra.mxu0 0.0
        %859 = vmatpush.xpose.msra.mxu0 0.0
        %860 = vmatpush.xpose.msra.mxu0 %v844
        %861 = vmatpush.xpose.msra.mxu0 %v841
        %862 = vmatmul.f32.gmra.mxu0 %v835
        %v863 = vpop.f32.mrf.mxu0
        %v864 = vadd.f32 0.0, %v863
        %865 = vmatmul.f32.gmra.mxu0 %v838
        %v866 = vpop.f32.mrf.mxu0
        %v867 = vadd.f32 0.0, %v866
        %868 = vdwg.mxu0
        %v869 = vsub.f32 0.0, %v479
        %v870 = vsub.f32 0.0, %v482
        %v871 = vsub.f32 0.0, %v514
        %v872 = vsub.f32 0.0, %v517
        %v873 = vsub.f32 0.0, %v549
        %v874 = vsub.f32 0.0, %v552
        %v875 = vsub.f32 0.0, %v584
        %v876 = vsub.f32 0.0, %v587
        %v877 = vsub.f32 0.0, %v619
        %v878 = vsub.f32 0.0, %v622
        %v879 = vsub.f32 0.0, %v654
        %v880 = vsub.f32 0.0, %v657
        %v881 = vsub.f32 0.0, %v689
        %v882 = vsub.f32 0.0, %v692
        %v883 = vsub.f32 0.0, %v724
        %v884 = vsub.f32 0.0, %v727
        %v885 = vsub.f32 0.0, %v759
        %v886 = vsub.f32 0.0, %v762
        %v887 = vsub.f32 0.0, %v794
        %v888 = vsub.f32 0.0, %v797
        %v889 = vsub.f32 0.0, %v829
        %v890 = vsub.f32 0.0, %v832
        %v891 = vsub.f32 0.0, %v864
        %v892 = vsub.f32 0.0, %v867
        %v893 = vmul.f32 %v869, 1.442695
        %v894 = vpow.pop %v893
        %v895 = vmul.f32 %v870, 1.442695
        %v896 = vpow.pop %v895
        %v897 = vmul.f32 %v871, 1.442695
        %v898 = vpow.pop %v897
        %v899 = vmul.f32 %v872, 1.442695
        %v900 = vpow.pop %v899
        %v901 = vmul.f32 %v873, 1.442695
        %v902 = vpow.pop %v901
        %v903 = vmul.f32 %v874, 1.442695
        %v904 = vpow.pop %v903
        %v905 = vmul.f32 %v875, 1.442695
        %v906 = vpow.pop %v905
        %v907 = vmul.f32 %v876, 1.442695
        %v908 = vpow.pop %v907
        %v909 = vmul.f32 %v877, 1.442695
        %v910 = vpow.pop %v909
        %v911 = vmul.f32 %v878, 1.442695
        %v912 = vpow.pop %v911
        %v913 = vmul.f32 %v879, 1.442695
        %v914 = vpow.pop %v913
        %v915 = vmul.f32 %v880, 1.442695
        %v916 = vpow.pop %v915
        %v917 = vmul.f32 %v881, 1.442695
        %v918 = vpow.pop %v917
        %v919 = vmul.f32 %v882, 1.442695
        %v920 = vpow.pop %v919
        %v921 = vmul.f32 %v883, 1.442695
        %v922 = vpow.pop %v921
        %v923 = vmul.f32 %v884, 1.442695
        %v924 = vpow.pop %v923
        %v925 = vmul.f32 %v885, 1.442695
        %v926 = vpow.pop %v925
        %v927 = vmul.f32 %v886, 1.442695
        %v928 = vpow.pop %v927
        %v929 = vmul.f32 %v887, 1.442695
        %v930 = vpow.pop %v929
        %v931 = vmul.f32 %v888, 1.442695
        %v932 = vpow.pop %v931
        %v933 = vmul.f32 %v889, 1.442695
        %v934 = vpow.pop %v933
        %v935 = vmul.f32 %v890, 1.442695
        %v936 = vpow.pop %v935
        %v937 = vmul.f32 %v891, 1.442695
        %v938 = vpow.pop %v937
        %v939 = vmul.f32 %v892, 1.442695
        %v940 = vpow.pop %v939
        %v941 = vadd.f32 %v894, 1.0
        %v942 = vadd.f32 %v896, 1.0
        %v943 = vadd.f32 %v898, 1.0
        %v944 = vadd.f32 %v900, 1.0
        %v945 = vadd.f32 %v902, 1.0
        %v946 = vadd.f32 %v904, 1.0
        %v947 = vadd.f32 %v906, 1.0
        %v948 = vadd.f32 %v908, 1.0
        %v949 = vadd.f32 %v910, 1.0
        %v950 = vadd.f32 %v912, 1.0
        %v951 = vadd.f32 %v914, 1.0
        %v952 = vadd.f32 %v916, 1.0
        %v953 = vadd.f32 %v918, 1.0
        %v954 = vadd.f32 %v920, 1.0
        %v955 = vadd.f32 %v922, 1.0
        %v956 = vadd.f32 %v924, 1.0
        %v957 = vadd.f32 %v926, 1.0
        %v958 = vadd.f32 %v928, 1.0
        %v959 = vadd.f32 %v930, 1.0
        %v960 = vadd.f32 %v932, 1.0
        %v961 = vadd.f32 %v934, 1.0
        %v962 = vadd.f32 %v936, 1.0
        %v963 = vadd.f32 %v938, 1.0
        %v964 = vadd.f32 %v940, 1.0
        %v965 = vrcp.pop %v941
        %v966 = vmul.f32 %v941, %v965
        %v967 = vsub.f32 1.0, %v966
        %v968 = vmul.f32 %v965, %v967
        %v969 = vadd.f32 %v965, %v968
        %vm970 = vweird.f32 %v941
        %vm971 = vweird.f32 %v965
        %vm972 = vmor %vm970, %vm971
        %v973 = vsel %vm972, %v965, %v969
        %v974 = vand.u32 2147483647, %v941
        %vm975 = vcmp.eq.f32.partialorder %v974, 8.507059e+37
        %v976 = vand.u32 %v941, 2147483648
        %v977 = vor.u32 1.1754944e-38, %v976
        %v978 = vsel %vm975, %v977, %v973
        %v979 = vmul.f32 1.0, %v978
        %v980 = vrcp.pop %v942
        %v981 = vmul.f32 %v942, %v980
        %v982 = vsub.f32 1.0, %v981
        %v983 = vmul.f32 %v980, %v982
        %v984 = vadd.f32 %v980, %v983
        %vm985 = vweird.f32 %v942
        %vm986 = vweird.f32 %v980
        %vm987 = vmor %vm985, %vm986
        %v988 = vsel %vm987, %v980, %v984
        %v989 = vand.u32 2147483647, %v942
        %vm990 = vcmp.eq.f32.partialorder %v989, 8.507059e+37
        %v991 = vand.u32 %v942, 2147483648
        %v992 = vor.u32 1.1754944e-38, %v991
        %v993 = vsel %vm990, %v992, %v988
        %v994 = vmul.f32 1.0, %v993
        %v995 = vrcp.pop %v943
        %v996 = vmul.f32 %v943, %v995
        %v997 = vsub.f32 1.0, %v996
        %v998 = vmul.f32 %v995, %v997
        %v999 = vadd.f32 %v995, %v998
        %vm1000 = vweird.f32 %v943
        %vm1001 = vweird.f32 %v995
        %vm1002 = vmor %vm1000, %vm1001
        %v1003 = vsel %vm1002, %v995, %v999
        %v1004 = vand.u32 2147483647, %v943
        %vm1005 = vcmp.eq.f32.partialorder %v1004, 8.507059e+37
        %v1006 = vand.u32 %v943, 2147483648
        %v1007 = vor.u32 1.1754944e-38, %v1006
        %v1008 = vsel %vm1005, %v1007, %v1003
        %v1009 = vmul.f32 1.0, %v1008
        %v1010 = vrcp.pop %v944
        %v1011 = vmul.f32 %v944, %v1010
        %v1012 = vsub.f32 1.0, %v1011
        %v1013 = vmul.f32 %v1010, %v1012
        %v1014 = vadd.f32 %v1010, %v1013
        %vm1015 = vweird.f32 %v944
        %vm1016 = vweird.f32 %v1010
        %vm1017 = vmor %vm1015, %vm1016
        %v1018 = vsel %vm1017, %v1010, %v1014
        %v1019 = vand.u32 2147483647, %v944
        %vm1020 = vcmp.eq.f32.partialorder %v1019, 8.507059e+37
        %v1021 = vand.u32 %v944, 2147483648
        %v1022 = vor.u32 1.1754944e-38, %v1021
        %v1023 = vsel %vm1020, %v1022, %v1018
        %v1024 = vmul.f32 1.0, %v1023
        %v1025 = vrcp.pop %v945
        %v1026 = vmul.f32 %v945, %v1025
        %v1027 = vsub.f32 1.0, %v1026
        %v1028 = vmul.f32 %v1025, %v1027
        %v1029 = vadd.f32 %v1025, %v1028
        %vm1030 = vweird.f32 %v945
        %vm1031 = vweird.f32 %v1025
        %vm1032 = vmor %vm1030, %vm1031
        %v1033 = vsel %vm1032, %v1025, %v1029
        %v1034 = vand.u32 2147483647, %v945
        %vm1035 = vcmp.eq.f32.partialorder %v1034, 8.507059e+37
        %v1036 = vand.u32 %v945, 2147483648
        %v1037 = vor.u32 1.1754944e-38, %v1036
        %v1038 = vsel %vm1035, %v1037, %v1033
        %v1039 = vmul.f32 1.0, %v1038
        %v1040 = vrcp.pop %v946
        %v1041 = vmul.f32 %v946, %v1040
        %v1042 = vsub.f32 1.0, %v1041
        %v1043 = vmul.f32 %v1040, %v1042
        %v1044 = vadd.f32 %v1040, %v1043
        %vm1045 = vweird.f32 %v946
        %vm1046 = vweird.f32 %v1040
        %vm1047 = vmor %vm1045, %vm1046
        %v1048 = vsel %vm1047, %v1040, %v1044
        %v1049 = vand.u32 2147483647, %v946
        %vm1050 = vcmp.eq.f32.partialorder %v1049, 8.507059e+37
        %v1051 = vand.u32 %v946, 2147483648
        %v1052 = vor.u32 1.1754944e-38, %v1051
        %v1053 = vsel %vm1050, %v1052, %v1048
        %v1054 = vmul.f32 1.0, %v1053
        %v1055 = vrcp.pop %v947
        %v1056 = vmul.f32 %v947, %v1055
        %v1057 = vsub.f32 1.0, %v1056
        %v1058 = vmul.f32 %v1055, %v1057
        %v1059 = vadd.f32 %v1055, %v1058
        %vm1060 = vweird.f32 %v947
        %vm1061 = vweird.f32 %v1055
        %vm1062 = vmor %vm1060, %vm1061
        %v1063 = vsel %vm1062, %v1055, %v1059
        %v1064 = vand.u32 2147483647, %v947
        %vm1065 = vcmp.eq.f32.partialorder %v1064, 8.507059e+37
        %v1066 = vand.u32 %v947, 2147483648
        %v1067 = vor.u32 1.1754944e-38, %v1066
        %v1068 = vsel %vm1065, %v1067, %v1063
        %v1069 = vmul.f32 1.0, %v1068
        %v1070 = vrcp.pop %v948
        %v1071 = vmul.f32 %v948, %v1070
        %v1072 = vsub.f32 1.0, %v1071
        %v1073 = vmul.f32 %v1070, %v1072
        %v1074 = vadd.f32 %v1070, %v1073
        %vm1075 = vweird.f32 %v948
        %vm1076 = vweird.f32 %v1070
        %vm1077 = vmor %vm1075, %vm1076
        %v1078 = vsel %vm1077, %v1070, %v1074
        %v1079 = vand.u32 2147483647, %v948
        %vm1080 = vcmp.eq.f32.partialorder %v1079, 8.507059e+37
        %v1081 = vand.u32 %v948, 2147483648
        %v1082 = vor.u32 1.1754944e-38, %v1081
        %v1083 = vsel %vm1080, %v1082, %v1078
        %v1084 = vmul.f32 1.0, %v1083
        %v1085 = vrcp.pop %v949
        %v1086 = vmul.f32 %v949, %v1085
        %v1087 = vsub.f32 1.0, %v1086
        %v1088 = vmul.f32 %v1085, %v1087
        %v1089 = vadd.f32 %v1085, %v1088
        %vm1090 = vweird.f32 %v949
        %vm1091 = vweird.f32 %v1085
        %vm1092 = vmor %vm1090, %vm1091
        %v1093 = vsel %vm1092, %v1085, %v1089
        %v1094 = vand.u32 2147483647, %v949
        %vm1095 = vcmp.eq.f32.partialorder %v1094, 8.507059e+37
        %v1096 = vand.u32 %v949, 2147483648
        %v1097 = vor.u32 1.1754944e-38, %v1096
        %v1098 = vsel %vm1095, %v1097, %v1093
        %v1099 = vmul.f32 1.0, %v1098
        %v1100 = vrcp.pop %v950
        %v1101 = vmul.f32 %v950, %v1100
        %v1102 = vsub.f32 1.0, %v1101
        %v1103 = vmul.f32 %v1100, %v1102
        %v1104 = vadd.f32 %v1100, %v1103
        %vm1105 = vweird.f32 %v950
        %vm1106 = vweird.f32 %v1100
        %vm1107 = vmor %vm1105, %vm1106
        %v1108 = vsel %vm1107, %v1100, %v1104
        %v1109 = vand.u32 2147483647, %v950
        %vm1110 = vcmp.eq.f32.partialorder %v1109, 8.507059e+37
        %v1111 = vand.u32 %v950, 2147483648
        %v1112 = vor.u32 1.1754944e-38, %v1111
        %v1113 = vsel %vm1110, %v1112, %v1108
        %v1114 = vmul.f32 1.0, %v1113
        %v1115 = vrcp.pop %v951
        %v1116 = vmul.f32 %v951, %v1115
        %v1117 = vsub.f32 1.0, %v1116
        %v1118 = vmul.f32 %v1115, %v1117
        %v1119 = vadd.f32 %v1115, %v1118
        %vm1120 = vweird.f32 %v951
        %vm1121 = vweird.f32 %v1115
        %vm1122 = vmor %vm1120, %vm1121
        %v1123 = vsel %vm1122, %v1115, %v1119
        %v1124 = vand.u32 2147483647, %v951
        %vm1125 = vcmp.eq.f32.partialorder %v1124, 8.507059e+37
        %v1126 = vand.u32 %v951, 2147483648
        %v1127 = vor.u32 1.1754944e-38, %v1126
        %v1128 = vsel %vm1125, %v1127, %v1123
        %v1129 = vmul.f32 1.0, %v1128
        %v1130 = vrcp.pop %v952
        %v1131 = vmul.f32 %v952, %v1130
        %v1132 = vsub.f32 1.0, %v1131
        %v1133 = vmul.f32 %v1130, %v1132
        %v1134 = vadd.f32 %v1130, %v1133
        %vm1135 = vweird.f32 %v952
        %vm1136 = vweird.f32 %v1130
        %vm1137 = vmor %vm1135, %vm1136
        %v1138 = vsel %vm1137, %v1130, %v1134
        %v1139 = vand.u32 2147483647, %v952
        %vm1140 = vcmp.eq.f32.partialorder %v1139, 8.507059e+37
        %v1141 = vand.u32 %v952, 2147483648
        %v1142 = vor.u32 1.1754944e-38, %v1141
        %v1143 = vsel %vm1140, %v1142, %v1138
        %v1144 = vmul.f32 1.0, %v1143
        %v1145 = vrcp.pop %v953
        %v1146 = vmul.f32 %v953, %v1145
        %v1147 = vsub.f32 1.0, %v1146
        %v1148 = vmul.f32 %v1145, %v1147
        %v1149 = vadd.f32 %v1145, %v1148
        %vm1150 = vweird.f32 %v953
        %vm1151 = vweird.f32 %v1145
        %vm1152 = vmor %vm1150, %vm1151
        %v1153 = vsel %vm1152, %v1145, %v1149
        %v1154 = vand.u32 2147483647, %v953
        %vm1155 = vcmp.eq.f32.partialorder %v1154, 8.507059e+37
        %v1156 = vand.u32 %v953, 2147483648
        %v1157 = vor.u32 1.1754944e-38, %v1156
        %v1158 = vsel %vm1155, %v1157, %v1153
        %v1159 = vmul.f32 1.0, %v1158
        %v1160 = vrcp.pop %v954
        %v1161 = vmul.f32 %v954, %v1160
        %v1162 = vsub.f32 1.0, %v1161
        %v1163 = vmul.f32 %v1160, %v1162
        %v1164 = vadd.f32 %v1160, %v1163
        %vm1165 = vweird.f32 %v954
        %vm1166 = vweird.f32 %v1160
        %vm1167 = vmor %vm1165, %vm1166
        %v1168 = vsel %vm1167, %v1160, %v1164
        %v1169 = vand.u32 2147483647, %v954
        %vm1170 = vcmp.eq.f32.partialorder %v1169, 8.507059e+37
        %v1171 = vand.u32 %v954, 2147483648
        %v1172 = vor.u32 1.1754944e-38, %v1171
        %v1173 = vsel %vm1170, %v1172, %v1168
        %v1174 = vmul.f32 1.0, %v1173
        %v1175 = vrcp.pop %v955
        %v1176 = vmul.f32 %v955, %v1175
        %v1177 = vsub.f32 1.0, %v1176
        %v1178 = vmul.f32 %v1175, %v1177
        %v1179 = vadd.f32 %v1175, %v1178
        %vm1180 = vweird.f32 %v955
        %vm1181 = vweird.f32 %v1175
        %vm1182 = vmor %vm1180, %vm1181
        %v1183 = vsel %vm1182, %v1175, %v1179
        %v1184 = vand.u32 2147483647, %v955
        %vm1185 = vcmp.eq.f32.partialorder %v1184, 8.507059e+37
        %v1186 = vand.u32 %v955, 2147483648
        %v1187 = vor.u32 1.1754944e-38, %v1186
        %v1188 = vsel %vm1185, %v1187, %v1183
        %v1189 = vmul.f32 1.0, %v1188
        %v1190 = vrcp.pop %v956
        %v1191 = vmul.f32 %v956, %v1190
        %v1192 = vsub.f32 1.0, %v1191
        %v1193 = vmul.f32 %v1190, %v1192
        %v1194 = vadd.f32 %v1190, %v1193
        %vm1195 = vweird.f32 %v956
        %vm1196 = vweird.f32 %v1190
        %vm1197 = vmor %vm1195, %vm1196
        %v1198 = vsel %vm1197, %v1190, %v1194
        %v1199 = vand.u32 2147483647, %v956
        %vm1200 = vcmp.eq.f32.partialorder %v1199, 8.507059e+37
        %v1201 = vand.u32 %v956, 2147483648
        %v1202 = vor.u32 1.1754944e-38, %v1201
        %v1203 = vsel %vm1200, %v1202, %v1198
        %v1204 = vmul.f32 1.0, %v1203
        %v1205 = vrcp.pop %v957
        %v1206 = vmul.f32 %v957, %v1205
        %v1207 = vsub.f32 1.0, %v1206
        %v1208 = vmul.f32 %v1205, %v1207
        %v1209 = vadd.f32 %v1205, %v1208
        %vm1210 = vweird.f32 %v957
        %vm1211 = vweird.f32 %v1205
        %vm1212 = vmor %vm1210, %vm1211
        %v1213 = vsel %vm1212, %v1205, %v1209
        %v1214 = vand.u32 2147483647, %v957
        %vm1215 = vcmp.eq.f32.partialorder %v1214, 8.507059e+37
        %v1216 = vand.u32 %v957, 2147483648
        %v1217 = vor.u32 1.1754944e-38, %v1216
        %v1218 = vsel %vm1215, %v1217, %v1213
        %v1219 = vmul.f32 1.0, %v1218
        %v1220 = vrcp.pop %v958
        %v1221 = vmul.f32 %v958, %v1220
        %v1222 = vsub.f32 1.0, %v1221
        %v1223 = vmul.f32 %v1220, %v1222
        %v1224 = vadd.f32 %v1220, %v1223
        %vm1225 = vweird.f32 %v958
        %vm1226 = vweird.f32 %v1220
        %vm1227 = vmor %vm1225, %vm1226
        %v1228 = vsel %vm1227, %v1220, %v1224
        %v1229 = vand.u32 2147483647, %v958
        %vm1230 = vcmp.eq.f32.partialorder %v1229, 8.507059e+37
        %v1231 = vand.u32 %v958, 2147483648
        %v1232 = vor.u32 1.1754944e-38, %v1231
        %v1233 = vsel %vm1230, %v1232, %v1228
        %v1234 = vmul.f32 1.0, %v1233
        %v1235 = vrcp.pop %v959
        %v1236 = vmul.f32 %v959, %v1235
        %v1237 = vsub.f32 1.0, %v1236
        %v1238 = vmul.f32 %v1235, %v1237
        %v1239 = vadd.f32 %v1235, %v1238
        %vm1240 = vweird.f32 %v959
        %vm1241 = vweird.f32 %v1235
        %vm1242 = vmor %vm1240, %vm1241
        %v1243 = vsel %vm1242, %v1235, %v1239
        %v1244 = vand.u32 2147483647, %v959
        %vm1245 = vcmp.eq.f32.partialorder %v1244, 8.507059e+37
        %v1246 = vand.u32 %v959, 2147483648
        %v1247 = vor.u32 1.1754944e-38, %v1246
        %v1248 = vsel %vm1245, %v1247, %v1243
        %v1249 = vmul.f32 1.0, %v1248
        %v1250 = vrcp.pop %v960
        %v1251 = vmul.f32 %v960, %v1250
        %v1252 = vsub.f32 1.0, %v1251
        %v1253 = vmul.f32 %v1250, %v1252
        %v1254 = vadd.f32 %v1250, %v1253
        %vm1255 = vweird.f32 %v960
        %vm1256 = vweird.f32 %v1250
        %vm1257 = vmor %vm1255, %vm1256
        %v1258 = vsel %vm1257, %v1250, %v1254
        %v1259 = vand.u32 2147483647, %v960
        %vm1260 = vcmp.eq.f32.partialorder %v1259, 8.507059e+37
        %v1261 = vand.u32 %v960, 2147483648
        %v1262 = vor.u32 1.1754944e-38, %v1261
        %v1263 = vsel %vm1260, %v1262, %v1258
        %v1264 = vmul.f32 1.0, %v1263
        %v1265 = vrcp.pop %v961
        %v1266 = vmul.f32 %v961, %v1265
        %v1267 = vsub.f32 1.0, %v1266
        %v1268 = vmul.f32 %v1265, %v1267
        %v1269 = vadd.f32 %v1265, %v1268
        %vm1270 = vweird.f32 %v961
        %vm1271 = vweird.f32 %v1265
        %vm1272 = vmor %vm1270, %vm1271
        %v1273 = vsel %vm1272, %v1265, %v1269
        %v1274 = vand.u32 2147483647, %v961
        %vm1275 = vcmp.eq.f32.partialorder %v1274, 8.507059e+37
        %v1276 = vand.u32 %v961, 2147483648
        %v1277 = vor.u32 1.1754944e-38, %v1276
        %v1278 = vsel %vm1275, %v1277, %v1273
        %v1279 = vmul.f32 1.0, %v1278
        %v1280 = vrcp.pop %v962
        %v1281 = vmul.f32 %v962, %v1280
        %v1282 = vsub.f32 1.0, %v1281
        %v1283 = vmul.f32 %v1280, %v1282
        %v1284 = vadd.f32 %v1280, %v1283
        %vm1285 = vweird.f32 %v962
        %vm1286 = vweird.f32 %v1280
        %vm1287 = vmor %vm1285, %vm1286
        %v1288 = vsel %vm1287, %v1280, %v1284
        %v1289 = vand.u32 2147483647, %v962
        %vm1290 = vcmp.eq.f32.partialorder %v1289, 8.507059e+37
        %v1291 = vand.u32 %v962, 2147483648
        %v1292 = vor.u32 1.1754944e-38, %v1291
        %v1293 = vsel %vm1290, %v1292, %v1288
        %v1294 = vmul.f32 1.0, %v1293
        %v1295 = vrcp.pop %v963
        %v1296 = vmul.f32 %v963, %v1295
        %v1297 = vsub.f32 1.0, %v1296
        %v1298 = vmul.f32 %v1295, %v1297
        %v1299 = vadd.f32 %v1295, %v1298
        %vm1300 = vweird.f32 %v963
        %vm1301 = vweird.f32 %v1295
        %vm1302 = vmor %vm1300, %vm1301
        %v1303 = vsel %vm1302, %v1295, %v1299
        %v1304 = vand.u32 2147483647, %v963
        %vm1305 = vcmp.eq.f32.partialorder %v1304, 8.507059e+37
        %v1306 = vand.u32 %v963, 2147483648
        %v1307 = vor.u32 1.1754944e-38, %v1306
        %v1308 = vsel %vm1305, %v1307, %v1303
        %v1309 = vmul.f32 1.0, %v1308
        %v1310 = vrcp.pop %v964
        %v1311 = vmul.f32 %v964, %v1310
        %v1312 = vsub.f32 1.0, %v1311
        %v1313 = vmul.f32 %v1310, %v1312
        %v1314 = vadd.f32 %v1310, %v1313
        %vm1315 = vweird.f32 %v964
        %vm1316 = vweird.f32 %v1310
        %vm1317 = vmor %vm1315, %vm1316
        %v1318 = vsel %vm1317, %v1310, %v1314
        %v1319 = vand.u32 2147483647, %v964
        %vm1320 = vcmp.eq.f32.partialorder %v1319, 8.507059e+37
        %v1321 = vand.u32 %v964, 2147483648
        %v1322 = vor.u32 1.1754944e-38, %v1321
        %v1323 = vsel %vm1320, %v1322, %v1318
        %v1324 = vmul.f32 1.0, %v1323
        %v1325 = vadd.f32 %v979, 0.0
        %v1326 = vadd.f32 %v994, 0.0
        %v1327 = vadd.f32 %v1009, 0.0
        %v1328 = vadd.f32 %v1024, 0.0
        %v1329 = vadd.f32 %v1039, 0.0
        %v1330 = vadd.f32 %v1054, 0.0
        %v1331 = vadd.f32 %v1069, 0.0
        %v1332 = vadd.f32 %v1084, 0.0
        %v1333 = vadd.f32 %v1099, 0.0
        %v1334 = vadd.f32 %v1114, 0.0
        %v1335 = vadd.f32 %v1129, 0.0
        %v1336 = vadd.f32 %v1144, 0.0
        %v1337 = vadd.f32 %v1159, 0.0
        %v1338 = vadd.f32 %v1174, 0.0
        %v1339 = vadd.f32 %v1189, 0.0
        %v1340 = vadd.f32 %v1204, 0.0
        %v1341 = vadd.f32 %v1219, 0.0
        %v1342 = vadd.f32 %v1234, 0.0
        %v1343 = vadd.f32 %v1249, 0.0
        %v1344 = vadd.f32 %v1264, 0.0
        %v1345 = vadd.f32 %v1279, 0.0
        %v1346 = vadd.f32 %v1294, 0.0
        %v1347 = vadd.f32 %v1309, 0.0
        %v1348 = vadd.f32 %v1324, 0.0
        %s1349 = scalar_lea.vmem %s1, 16
        %v1350 = vld [vmem:[%s1349] sm:$0xff]
        %v1351 = vld [vmem:[%s1349 + $0x8] sm:$0xff]
        %1352 = vmatpush.msra.mxu0 0.0
        %1353 = vmatpush.msra.mxu0 0.0
        %1354 = vmatpush.msra.mxu0 0.0
        %1355 = vmatpush.msra.mxu0 0.0
        %1356 = vmatpush.msra.mxu0 0.0
        %1357 = vmatpush.msra.mxu0 0.0
        %1358 = vmatpush.msra.mxu0 0.0
        %1359 = vmatpush.msra.mxu0 0.0
        %1360 = vmatpush.msra.mxu0 0.0
        %1361 = vmatpush.msra.mxu0 0.0
        %1362 = vmatpush.msra.mxu0 0.0
        %1363 = vmatpush.msra.mxu0 0.0
        %1364 = vmatpush.msra.mxu0 0.0
        %1365 = vmatpush.msra.mxu0 0.0
        %1366 = vmatpush.msra.mxu0 %v1351
        %1367 = vmatpush.msra.mxu0 %v1350
        %1368 = vmatmul.f32.gmra.mxu0 %v197
        %v1369 = vpop.f32.mrf.mxu0
        %v1370 = vadd.f32 0.0, %v1369
        %1371 = vmatmul.f32.gmra.mxu0 %v200
        %v1372 = vpop.f32.mrf.mxu0
        %v1373 = vadd.f32 0.0, %v1372
        %1374 = vmatmul.f32.gmra.mxu0 %v203
        %v1375 = vpop.f32.mrf.mxu0
        %v1376 = vadd.f32 0.0, %v1375
        %1377 = vmatmul.f32.gmra.mxu0 %v206
        %v1378 = vpop.f32.mrf.mxu0
        %v1379 = vadd.f32 0.0, %v1378
        %1380 = vmatmul.f32.gmra.mxu0 %v209
        %v1381 = vpop.f32.mrf.mxu0
        %v1382 = vadd.f32 0.0, %v1381
        %1383 = vmatmul.f32.gmra.mxu0 %v212
        %v1384 = vpop.f32.mrf.mxu0
        %v1385 = vadd.f32 0.0, %v1384
        %1386 = vmatmul.f32.gmra.mxu0 %v215
        %v1387 = vpop.f32.mrf.mxu0
        %v1388 = vadd.f32 0.0, %v1387
        %1389 = vmatmul.f32.gmra.mxu0 %v218
        %v1390 = vpop.f32.mrf.mxu0
        %v1391 = vadd.f32 0.0, %v1390
        %1392 = vmatmul.f32.gmra.mxu0 %v221
        %v1393 = vpop.f32.mrf.mxu0
        %v1394 = vadd.f32 0.0, %v1393
        %1395 = vmatmul.f32.gmra.mxu0 %v224
        %v1396 = vpop.f32.mrf.mxu0
        %v1397 = vadd.f32 0.0, %v1396
        %1398 = vmatmul.f32.gmra.mxu0 %v227
        %v1399 = vpop.f32.mrf.mxu0
        %v1400 = vadd.f32 0.0, %v1399
        %1401 = vmatmul.f32.gmra.mxu0 %v230
        %v1402 = vpop.f32.mrf.mxu0
        %v1403 = vadd.f32 0.0, %v1402
        %1404 = vmatmul.f32.gmra.mxu0 %v233
        %v1405 = vpop.f32.mrf.mxu0
        %v1406 = vadd.f32 0.0, %v1405
        %1407 = vmatmul.f32.gmra.mxu0 %v236
        %v1408 = vpop.f32.mrf.mxu0
        %v1409 = vadd.f32 0.0, %v1408
        %1410 = vmatmul.f32.gmra.mxu0 %v239
        %v1411 = vpop.f32.mrf.mxu0
        %v1412 = vadd.f32 0.0, %v1411
        %1413 = vmatmul.f32.gmra.mxu0 %v242
        %v1414 = vpop.f32.mrf.mxu0
        %v1415 = vadd.f32 0.0, %v1414
        %1416 = vmatmul.f32.gmra.mxu0 %v245
        %v1417 = vpop.f32.mrf.mxu0
        %v1418 = vadd.f32 0.0, %v1417
        %1419 = vmatmul.f32.gmra.mxu0 %v248
        %v1420 = vpop.f32.mrf.mxu0
        %v1421 = vadd.f32 0.0, %v1420
        %1422 = vmatmul.f32.gmra.mxu0 %v251
        %v1423 = vpop.f32.mrf.mxu0
        %v1424 = vadd.f32 0.0, %v1423
        %1425 = vmatmul.f32.gmra.mxu0 %v254
        %v1426 = vpop.f32.mrf.mxu0
        %v1427 = vadd.f32 0.0, %v1426
        %1428 = vmatmul.f32.gmra.mxu0 %v257
        %v1429 = vpop.f32.mrf.mxu0
        %v1430 = vadd.f32 0.0, %v1429
        %1431 = vmatmul.f32.gmra.mxu0 %v260
        %v1432 = vpop.f32.mrf.mxu0
        %v1433 = vadd.f32 0.0, %v1432
        %1434 = vmatmul.f32.gmra.mxu0 %v263
        %v1435 = vpop.f32.mrf.mxu0
        %v1436 = vadd.f32 0.0, %v1435
        %1437 = vmatmul.f32.gmra.mxu0 %v266
        %v1438 = vpop.f32.mrf.mxu0
        %v1439 = vadd.f32 0.0, %v1438
        %1440 = vdwg.mxu0
        %s1441 = scalar_lea.vmem %s2, 16
        %v1442 = vld [vmem:[%s1441] sm:$0xff]
        %v1443 = vld [vmem:[%s1441 + $0x8] sm:$0xff]
        %1444 = vmatpush.msra.mxu0 0.0
        %1445 = vmatpush.msra.mxu0 0.0
        %1446 = vmatpush.msra.mxu0 0.0
        %1447 = vmatpush.msra.mxu0 0.0
        %1448 = vmatpush.msra.mxu0 0.0
        %1449 = vmatpush.msra.mxu0 0.0
        %1450 = vmatpush.msra.mxu0 0.0
        %1451 = vmatpush.msra.mxu0 0.0
        %1452 = vmatpush.msra.mxu0 0.0
        %1453 = vmatpush.msra.mxu0 0.0
        %1454 = vmatpush.msra.mxu0 0.0
        %1455 = vmatpush.msra.mxu0 0.0
        %1456 = vmatpush.msra.mxu0 0.0
        %1457 = vmatpush.msra.mxu0 0.0
        %1458 = vmatpush.msra.mxu0 %v1443
        %1459 = vmatpush.msra.mxu0 %v1442
        %1460 = vmatmul.f32.gmra.mxu0 %v197
        %v1461 = vpop.f32.mrf.mxu0
        %v1462 = vadd.f32 0.0, %v1461
        %1463 = vmatmul.f32.gmra.mxu0 %v200
        %v1464 = vpop.f32.mrf.mxu0
        %v1465 = vadd.f32 0.0, %v1464
        %1466 = vmatmul.f32.gmra.mxu0 %v203
        %v1467 = vpop.f32.mrf.mxu0
        %v1468 = vadd.f32 0.0, %v1467
        %1469 = vmatmul.f32.gmra.mxu0 %v206
        %v1470 = vpop.f32.mrf.mxu0
        %v1471 = vadd.f32 0.0, %v1470
        %1472 = vmatmul.f32.gmra.mxu0 %v209
        %v1473 = vpop.f32.mrf.mxu0
        %v1474 = vadd.f32 0.0, %v1473
        %1475 = vmatmul.f32.gmra.mxu0 %v212
        %v1476 = vpop.f32.mrf.mxu0
        %v1477 = vadd.f32 0.0, %v1476
        %1478 = vmatmul.f32.gmra.mxu0 %v215
        %v1479 = vpop.f32.mrf.mxu0
        %v1480 = vadd.f32 0.0, %v1479
        %1481 = vmatmul.f32.gmra.mxu0 %v218
        %v1482 = vpop.f32.mrf.mxu0
        %v1483 = vadd.f32 0.0, %v1482
        %1484 = vmatmul.f32.gmra.mxu0 %v221
        %v1485 = vpop.f32.mrf.mxu0
        %v1486 = vadd.f32 0.0, %v1485
        %1487 = vmatmul.f32.gmra.mxu0 %v224
        %v1488 = vpop.f32.mrf.mxu0
        %v1489 = vadd.f32 0.0, %v1488
        %1490 = vmatmul.f32.gmra.mxu0 %v227
        %v1491 = vpop.f32.mrf.mxu0
        %v1492 = vadd.f32 0.0, %v1491
        %1493 = vmatmul.f32.gmra.mxu0 %v230
        %v1494 = vpop.f32.mrf.mxu0
        %v1495 = vadd.f32 0.0, %v1494
        %1496 = vmatmul.f32.gmra.mxu0 %v233
        %v1497 = vpop.f32.mrf.mxu0
        %v1498 = vadd.f32 0.0, %v1497
        %1499 = vmatmul.f32.gmra.mxu0 %v236
        %v1500 = vpop.f32.mrf.mxu0
        %v1501 = vadd.f32 0.0, %v1500
        %1502 = vmatmul.f32.gmra.mxu0 %v239
        %v1503 = vpop.f32.mrf.mxu0
        %v1504 = vadd.f32 0.0, %v1503
        %1505 = vmatmul.f32.gmra.mxu0 %v242
        %v1506 = vpop.f32.mrf.mxu0
        %v1507 = vadd.f32 0.0, %v1506
        %1508 = vmatmul.f32.gmra.mxu0 %v245
        %v1509 = vpop.f32.mrf.mxu0
        %v1510 = vadd.f32 0.0, %v1509
        %1511 = vmatmul.f32.gmra.mxu0 %v248
        %v1512 = vpop.f32.mrf.mxu0
        %v1513 = vadd.f32 0.0, %v1512
        %1514 = vmatmul.f32.gmra.mxu0 %v251
        %v1515 = vpop.f32.mrf.mxu0
        %v1516 = vadd.f32 0.0, %v1515
        %1517 = vmatmul.f32.gmra.mxu0 %v254
        %v1518 = vpop.f32.mrf.mxu0
        %v1519 = vadd.f32 0.0, %v1518
        %1520 = vmatmul.f32.gmra.mxu0 %v257
        %v1521 = vpop.f32.mrf.mxu0
        %v1522 = vadd.f32 0.0, %v1521
        %1523 = vmatmul.f32.gmra.mxu0 %v260
        %v1524 = vpop.f32.mrf.mxu0
        %v1525 = vadd.f32 0.0, %v1524
        %1526 = vmatmul.f32.gmra.mxu0 %v263
        %v1527 = vpop.f32.mrf.mxu0
        %v1528 = vadd.f32 0.0, %v1527
        %1529 = vmatmul.f32.gmra.mxu0 %v266
        %v1530 = vpop.f32.mrf.mxu0
        %v1531 = vadd.f32 0.0, %v1530
        %1532 = vdwg.mxu0
        %v1534 = vsel %vm448, %v1370, 0
        %v1537 = vsel %vm448, %v1373, 0
        %v1540 = vsel %vm448, %v1462, 0
        %v1543 = vsel %vm448, %v1465, 0
        %1545 = vmatpush.xpose.msra.mxu0 0.0
        %1546 = vmatpush.xpose.msra.mxu0 0.0
        %1547 = vmatpush.xpose.msra.mxu0 0.0
        %1548 = vmatpush.xpose.msra.mxu0 0.0
        %1549 = vmatpush.xpose.msra.mxu0 0.0
        %1550 = vmatpush.xpose.msra.mxu0 0.0
        %1551 = vmatpush.xpose.msra.mxu0 0.0
        %1552 = vmatpush.xpose.msra.mxu0 0.0
        %1553 = vmatpush.xpose.msra.mxu0 0.0
        %1554 = vmatpush.xpose.msra.mxu0 0.0
        %1555 = vmatpush.xpose.msra.mxu0 0.0
        %1556 = vmatpush.xpose.msra.mxu0 0.0
        %1557 = vmatpush.xpose.msra.mxu0 0.0
        %1558 = vmatpush.xpose.msra.mxu0 0.0
        %1559 = vmatpush.xpose.msra.mxu0 %v1543
        %1560 = vmatpush.xpose.msra.mxu0 %v1540
        %1561 = vmatmul.f32.gmra.mxu0 %v1534
        %v1562 = vpop.f32.mrf.mxu0
        %v1563 = vadd.f32 0.0, %v1562
        %1564 = vmatmul.f32.gmra.mxu0 %v1537
        %v1565 = vpop.f32.mrf.mxu0
        %v1566 = vadd.f32 0.0, %v1565
        %1567 = vdwg.mxu0
        %v1569 = vsel %vm448, %v1376, 0
        %v1572 = vsel %vm448, %v1379, 0
        %v1575 = vsel %vm448, %v1468, 0
        %v1578 = vsel %vm448, %v1471, 0
        %1580 = vmatpush.xpose.msra.mxu0 0.0
        %1581 = vmatpush.xpose.msra.mxu0 0.0
        %1582 = vmatpush.xpose.msra.mxu0 0.0
        %1583 = vmatpush.xpose.msra.mxu0 0.0
        %1584 = vmatpush.xpose.msra.mxu0 0.0
        %1585 = vmatpush.xpose.msra.mxu0 0.0
        %1586 = vmatpush.xpose.msra.mxu0 0.0
        %1587 = vmatpush.xpose.msra.mxu0 0.0
        %1588 = vmatpush.xpose.msra.mxu0 0.0
        %1589 = vmatpush.xpose.msra.mxu0 0.0
        %1590 = vmatpush.xpose.msra.mxu0 0.0
        %1591 = vmatpush.xpose.msra.mxu0 0.0
        %1592 = vmatpush.xpose.msra.mxu0 0.0
        %1593 = vmatpush.xpose.msra.mxu0 0.0
        %1594 = vmatpush.xpose.msra.mxu0 %v1578
        %1595 = vmatpush.xpose.msra.mxu0 %v1575
        %1596 = vmatmul.f32.gmra.mxu0 %v1569
        %v1597 = vpop.f32.mrf.mxu0
        %v1598 = vadd.f32 0.0, %v1597
        %1599 = vmatmul.f32.gmra.mxu0 %v1572
        %v1600 = vpop.f32.mrf.mxu0
        %v1601 = vadd.f32 0.0, %v1600
        %1602 = vdwg.mxu0
        %v1604 = vsel %vm448, %v1382, 0
        %v1607 = vsel %vm448, %v1385, 0
        %v1610 = vsel %vm448, %v1474, 0
        %v1613 = vsel %vm448, %v1477, 0
        %1615 = vmatpush.xpose.msra.mxu0 0.0
        %1616 = vmatpush.xpose.msra.mxu0 0.0
        %1617 = vmatpush.xpose.msra.mxu0 0.0
        %1618 = vmatpush.xpose.msra.mxu0 0.0
        %1619 = vmatpush.xpose.msra.mxu0 0.0
        %1620 = vmatpush.xpose.msra.mxu0 0.0
        %1621 = vmatpush.xpose.msra.mxu0 0.0
        %1622 = vmatpush.xpose.msra.mxu0 0.0
        %1623 = vmatpush.xpose.msra.mxu0 0.0
        %1624 = vmatpush.xpose.msra.mxu0 0.0
        %1625 = vmatpush.xpose.msra.mxu0 0.0
        %1626 = vmatpush.xpose.msra.mxu0 0.0
        %1627 = vmatpush.xpose.msra.mxu0 0.0
        %1628 = vmatpush.xpose.msra.mxu0 0.0
        %1629 = vmatpush.xpose.msra.mxu0 %v1613
        %1630 = vmatpush.xpose.msra.mxu0 %v1610
        %1631 = vmatmul.f32.gmra.mxu0 %v1604
        %v1632 = vpop.f32.mrf.mxu0
        %v1633 = vadd.f32 0.0, %v1632
        %1634 = vmatmul.f32.gmra.mxu0 %v1607
        %v1635 = vpop.f32.mrf.mxu0
        %v1636 = vadd.f32 0.0, %v1635
        %1637 = vdwg.mxu0
        %v1639 = vsel %vm448, %v1388, 0
        %v1642 = vsel %vm448, %v1391, 0
        %v1645 = vsel %vm448, %v1480, 0
        %v1648 = vsel %vm448, %v1483, 0
        %1650 = vmatpush.xpose.msra.mxu0 0.0
        %1651 = vmatpush.xpose.msra.mxu0 0.0
        %1652 = vmatpush.xpose.msra.mxu0 0.0
        %1653 = vmatpush.xpose.msra.mxu0 0.0
        %1654 = vmatpush.xpose.msra.mxu0 0.0
        %1655 = vmatpush.xpose.msra.mxu0 0.0
        %1656 = vmatpush.xpose.msra.mxu0 0.0
        %1657 = vmatpush.xpose.msra.mxu0 0.0
        %1658 = vmatpush.xpose.msra.mxu0 0.0
        %1659 = vmatpush.xpose.msra.mxu0 0.0
        %1660 = vmatpush.xpose.msra.mxu0 0.0
        %1661 = vmatpush.xpose.msra.mxu0 0.0
        %1662 = vmatpush.xpose.msra.mxu0 0.0
        %1663 = vmatpush.xpose.msra.mxu0 0.0
        %1664 = vmatpush.xpose.msra.mxu0 %v1648
        %1665 = vmatpush.xpose.msra.mxu0 %v1645
        %1666 = vmatmul.f32.gmra.mxu0 %v1639
        %v1667 = vpop.f32.mrf.mxu0
        %v1668 = vadd.f32 0.0, %v1667
        %1669 = vmatmul.f32.gmra.mxu0 %v1642
        %v1670 = vpop.f32.mrf.mxu0
        %v1671 = vadd.f32 0.0, %v1670
        %1672 = vdwg.mxu0
        %v1674 = vsel %vm448, %v1394, 0
        %v1677 = vsel %vm448, %v1397, 0
        %v1680 = vsel %vm448, %v1486, 0
        %v1683 = vsel %vm448, %v1489, 0
        %1685 = vmatpush.xpose.msra.mxu0 0.0
        %1686 = vmatpush.xpose.msra.mxu0 0.0
        %1687 = vmatpush.xpose.msra.mxu0 0.0
        %1688 = vmatpush.xpose.msra.mxu0 0.0
        %1689 = vmatpush.xpose.msra.mxu0 0.0
        %1690 = vmatpush.xpose.msra.mxu0 0.0
        %1691 = vmatpush.xpose.msra.mxu0 0.0
        %1692 = vmatpush.xpose.msra.mxu0 0.0
        %1693 = vmatpush.xpose.msra.mxu0 0.0
        %1694 = vmatpush.xpose.msra.mxu0 0.0
        %1695 = vmatpush.xpose.msra.mxu0 0.0
        %1696 = vmatpush.xpose.msra.mxu0 0.0
        %1697 = vmatpush.xpose.msra.mxu0 0.0
        %1698 = vmatpush.xpose.msra.mxu0 0.0
        %1699 = vmatpush.xpose.msra.mxu0 %v1683
        %1700 = vmatpush.xpose.msra.mxu0 %v1680
        %1701 = vmatmul.f32.gmra.mxu0 %v1674
        %v1702 = vpop.f32.mrf.mxu0
        %v1703 = vadd.f32 0.0, %v1702
        %1704 = vmatmul.f32.gmra.mxu0 %v1677
        %v1705 = vpop.f32.mrf.mxu0
        %v1706 = vadd.f32 0.0, %v1705
        %1707 = vdwg.mxu0
        %v1709 = vsel %vm448, %v1400, 0
        %v1712 = vsel %vm448, %v1403, 0
        %v1715 = vsel %vm448, %v1492, 0
        %v1718 = vsel %vm448, %v1495, 0
        %1720 = vmatpush.xpose.msra.mxu0 0.0
        %1721 = vmatpush.xpose.msra.mxu0 0.0
        %1722 = vmatpush.xpose.msra.mxu0 0.0
        %1723 = vmatpush.xpose.msra.mxu0 0.0
        %1724 = vmatpush.xpose.msra.mxu0 0.0
        %1725 = vmatpush.xpose.msra.mxu0 0.0
        %1726 = vmatpush.xpose.msra.mxu0 0.0
        %1727 = vmatpush.xpose.msra.mxu0 0.0
        %1728 = vmatpush.xpose.msra.mxu0 0.0
        %1729 = vmatpush.xpose.msra.mxu0 0.0
        %1730 = vmatpush.xpose.msra.mxu0 0.0
        %1731 = vmatpush.xpose.msra.mxu0 0.0
        %1732 = vmatpush.xpose.msra.mxu0 0.0
        %1733 = vmatpush.xpose.msra.mxu0 0.0
        %1734 = vmatpush.xpose.msra.mxu0 %v1718
        %1735 = vmatpush.xpose.msra.mxu0 %v1715
        %1736 = vmatmul.f32.gmra.mxu0 %v1709
        %v1737 = vpop.f32.mrf.mxu0
        %v1738 = vadd.f32 0.0, %v1737
        %1739 = vmatmul.f32.gmra.mxu0 %v1712
        %v1740 = vpop.f32.mrf.mxu0
        %v1741 = vadd.f32 0.0, %v1740
        %1742 = vdwg.mxu0
        %v1744 = vsel %vm448, %v1406, 0
        %v1747 = vsel %vm448, %v1409, 0
        %v1750 = vsel %vm448, %v1498, 0
        %v1753 = vsel %vm448, %v1501, 0
        %1755 = vmatpush.xpose.msra.mxu0 0.0
        %1756 = vmatpush.xpose.msra.mxu0 0.0
        %1757 = vmatpush.xpose.msra.mxu0 0.0
        %1758 = vmatpush.xpose.msra.mxu0 0.0
        %1759 = vmatpush.xpose.msra.mxu0 0.0
        %1760 = vmatpush.xpose.msra.mxu0 0.0
        %1761 = vmatpush.xpose.msra.mxu0 0.0
        %1762 = vmatpush.xpose.msra.mxu0 0.0
        %1763 = vmatpush.xpose.msra.mxu0 0.0
        %1764 = vmatpush.xpose.msra.mxu0 0.0
        %1765 = vmatpush.xpose.msra.mxu0 0.0
        %1766 = vmatpush.xpose.msra.mxu0 0.0
        %1767 = vmatpush.xpose.msra.mxu0 0.0
        %1768 = vmatpush.xpose.msra.mxu0 0.0
        %1769 = vmatpush.xpose.msra.mxu0 %v1753
        %1770 = vmatpush.xpose.msra.mxu0 %v1750
        %1771 = vmatmul.f32.gmra.mxu0 %v1744
        %v1772 = vpop.f32.mrf.mxu0
        %v1773 = vadd.f32 0.0, %v1772
        %1774 = vmatmul.f32.gmra.mxu0 %v1747
        %v1775 = vpop.f32.mrf.mxu0
        %v1776 = vadd.f32 0.0, %v1775
        %1777 = vdwg.mxu0
        %v1779 = vsel %vm448, %v1412, 0
        %v1782 = vsel %vm448, %v1415, 0
        %v1785 = vsel %vm448, %v1504, 0
        %v1788 = vsel %vm448, %v1507, 0
        %1790 = vmatpush.xpose.msra.mxu0 0.0
        %1791 = vmatpush.xpose.msra.mxu0 0.0
        %1792 = vmatpush.xpose.msra.mxu0 0.0
        %1793 = vmatpush.xpose.msra.mxu0 0.0
        %1794 = vmatpush.xpose.msra.mxu0 0.0
        %1795 = vmatpush.xpose.msra.mxu0 0.0
        %1796 = vmatpush.xpose.msra.mxu0 0.0
        %1797 = vmatpush.xpose.msra.mxu0 0.0
        %1798 = vmatpush.xpose.msra.mxu0 0.0
        %1799 = vmatpush.xpose.msra.mxu0 0.0
        %1800 = vmatpush.xpose.msra.mxu0 0.0
        %1801 = vmatpush.xpose.msra.mxu0 0.0
        %1802 = vmatpush.xpose.msra.mxu0 0.0
        %1803 = vmatpush.xpose.msra.mxu0 0.0
        %1804 = vmatpush.xpose.msra.mxu0 %v1788
        %1805 = vmatpush.xpose.msra.mxu0 %v1785
        %1806 = vmatmul.f32.gmra.mxu0 %v1779
        %v1807 = vpop.f32.mrf.mxu0
        %v1808 = vadd.f32 0.0, %v1807
        %1809 = vmatmul.f32.gmra.mxu0 %v1782
        %v1810 = vpop.f32.mrf.mxu0
        %v1811 = vadd.f32 0.0, %v1810
        %1812 = vdwg.mxu0
        %v1814 = vsel %vm448, %v1418, 0
        %v1817 = vsel %vm448, %v1421, 0
        %v1820 = vsel %vm448, %v1510, 0
        %v1823 = vsel %vm448, %v1513, 0
        %1825 = vmatpush.xpose.msra.mxu0 0.0
        %1826 = vmatpush.xpose.msra.mxu0 0.0
        %1827 = vmatpush.xpose.msra.mxu0 0.0
        %1828 = vmatpush.xpose.msra.mxu0 0.0
        %1829 = vmatpush.xpose.msra.mxu0 0.0
        %1830 = vmatpush.xpose.msra.mxu0 0.0
        %1831 = vmatpush.xpose.msra.mxu0 0.0
        %1832 = vmatpush.xpose.msra.mxu0 0.0
        %1833 = vmatpush.xpose.msra.mxu0 0.0
        %1834 = vmatpush.xpose.msra.mxu0 0.0
        %1835 = vmatpush.xpose.msra.mxu0 0.0
        %1836 = vmatpush.xpose.msra.mxu0 0.0
        %1837 = vmatpush.xpose.msra.mxu0 0.0
        %1838 = vmatpush.xpose.msra.mxu0 0.0
        %1839 = vmatpush.xpose.msra.mxu0 %v1823
        %1840 = vmatpush.xpose.msra.mxu0 %v1820
        %1841 = vmatmul.f32.gmra.mxu0 %v1814
        %v1842 = vpop.f32.mrf.mxu0
        %v1843 = vadd.f32 0.0, %v1842
        %1844 = vmatmul.f32.gmra.mxu0 %v1817
        %v1845 = vpop.f32.mrf.mxu0
        %v1846 = vadd.f32 0.0, %v1845
        %1847 = vdwg.mxu0
        %v1849 = vsel %vm448, %v1424, 0
        %v1852 = vsel %vm448, %v1427, 0
        %v1855 = vsel %vm448, %v1516, 0
        %v1858 = vsel %vm448, %v1519, 0
        %1860 = vmatpush.xpose.msra.mxu0 0.0
        %1861 = vmatpush.xpose.msra.mxu0 0.0
        %1862 = vmatpush.xpose.msra.mxu0 0.0
        %1863 = vmatpush.xpose.msra.mxu0 0.0
        %1864 = vmatpush.xpose.msra.mxu0 0.0
        %1865 = vmatpush.xpose.msra.mxu0 0.0
        %1866 = vmatpush.xpose.msra.mxu0 0.0
        %1867 = vmatpush.xpose.msra.mxu0 0.0
        %1868 = vmatpush.xpose.msra.mxu0 0.0
        %1869 = vmatpush.xpose.msra.mxu0 0.0
        %1870 = vmatpush.xpose.msra.mxu0 0.0
        %1871 = vmatpush.xpose.msra.mxu0 0.0
        %1872 = vmatpush.xpose.msra.mxu0 0.0
        %1873 = vmatpush.xpose.msra.mxu0 0.0
        %1874 = vmatpush.xpose.msra.mxu0 %v1858
        %1875 = vmatpush.xpose.msra.mxu0 %v1855
        %1876 = vmatmul.f32.gmra.mxu0 %v1849
        %v1877 = vpop.f32.mrf.mxu0
        %v1878 = vadd.f32 0.0, %v1877
        %1879 = vmatmul.f32.gmra.mxu0 %v1852
        %v1880 = vpop.f32.mrf.mxu0
        %v1881 = vadd.f32 0.0, %v1880
        %1882 = vdwg.mxu0
        %v1884 = vsel %vm448, %v1430, 0
        %v1887 = vsel %vm448, %v1433, 0
        %v1890 = vsel %vm448, %v1522, 0
        %v1893 = vsel %vm448, %v1525, 0
        %1895 = vmatpush.xpose.msra.mxu0 0.0
        %1896 = vmatpush.xpose.msra.mxu0 0.0
        %1897 = vmatpush.xpose.msra.mxu0 0.0
        %1898 = vmatpush.xpose.msra.mxu0 0.0
        %1899 = vmatpush.xpose.msra.mxu0 0.0
        %1900 = vmatpush.xpose.msra.mxu0 0.0
        %1901 = vmatpush.xpose.msra.mxu0 0.0
        %1902 = vmatpush.xpose.msra.mxu0 0.0
        %1903 = vmatpush.xpose.msra.mxu0 0.0
        %1904 = vmatpush.xpose.msra.mxu0 0.0
        %1905 = vmatpush.xpose.msra.mxu0 0.0
        %1906 = vmatpush.xpose.msra.mxu0 0.0
        %1907 = vmatpush.xpose.msra.mxu0 0.0
        %1908 = vmatpush.xpose.msra.mxu0 0.0
        %1909 = vmatpush.xpose.msra.mxu0 %v1893
        %1910 = vmatpush.xpose.msra.mxu0 %v1890
        %1911 = vmatmul.f32.gmra.mxu0 %v1884
        %v1912 = vpop.f32.mrf.mxu0
        %v1913 = vadd.f32 0.0, %v1912
        %1914 = vmatmul.f32.gmra.mxu0 %v1887
        %v1915 = vpop.f32.mrf.mxu0
        %v1916 = vadd.f32 0.0, %v1915
        %1917 = vdwg.mxu0
        %v1919 = vsel %vm448, %v1436, 0
        %v1922 = vsel %vm448, %v1439, 0
        %v1925 = vsel %vm448, %v1528, 0
        %v1928 = vsel %vm448, %v1531, 0
        %1930 = vmatpush.xpose.msra.mxu0 0.0
        %1931 = vmatpush.xpose.msra.mxu0 0.0
        %1932 = vmatpush.xpose.msra.mxu0 0.0
        %1933 = vmatpush.xpose.msra.mxu0 0.0
        %1934 = vmatpush.xpose.msra.mxu0 0.0
        %1935 = vmatpush.xpose.msra.mxu0 0.0
        %1936 = vmatpush.xpose.msra.mxu0 0.0
        %1937 = vmatpush.xpose.msra.mxu0 0.0
        %1938 = vmatpush.xpose.msra.mxu0 0.0
        %1939 = vmatpush.xpose.msra.mxu0 0.0
        %1940 = vmatpush.xpose.msra.mxu0 0.0
        %1941 = vmatpush.xpose.msra.mxu0 0.0
        %1942 = vmatpush.xpose.msra.mxu0 0.0
        %1943 = vmatpush.xpose.msra.mxu0 0.0
        %1944 = vmatpush.xpose.msra.mxu0 %v1928
        %1945 = vmatpush.xpose.msra.mxu0 %v1925
        %1946 = vmatmul.f32.gmra.mxu0 %v1919
        %v1947 = vpop.f32.mrf.mxu0
        %v1948 = vadd.f32 0.0, %v1947
        %1949 = vmatmul.f32.gmra.mxu0 %v1922
        %v1950 = vpop.f32.mrf.mxu0
        %v1951 = vadd.f32 0.0, %v1950
        %1952 = vdwg.mxu0
        %v1953 = vsub.f32 0.0, %v1563
        %v1954 = vsub.f32 0.0, %v1566
        %v1955 = vsub.f32 0.0, %v1598
        %v1956 = vsub.f32 0.0, %v1601
        %v1957 = vsub.f32 0.0, %v1633
        %v1958 = vsub.f32 0.0, %v1636
        %v1959 = vsub.f32 0.0, %v1668
        %v1960 = vsub.f32 0.0, %v1671
        %v1961 = vsub.f32 0.0, %v1703
        %v1962 = vsub.f32 0.0, %v1706
        %v1963 = vsub.f32 0.0, %v1738
        %v1964 = vsub.f32 0.0, %v1741
        %v1965 = vsub.f32 0.0, %v1773
        %v1966 = vsub.f32 0.0, %v1776
        %v1967 = vsub.f32 0.0, %v1808
        %v1968 = vsub.f32 0.0, %v1811
        %v1969 = vsub.f32 0.0, %v1843
        %v1970 = vsub.f32 0.0, %v1846
        %v1971 = vsub.f32 0.0, %v1878
        %v1972 = vsub.f32 0.0, %v1881
        %v1973 = vsub.f32 0.0, %v1913
        %v1974 = vsub.f32 0.0, %v1916
        %v1975 = vsub.f32 0.0, %v1948
        %v1976 = vsub.f32 0.0, %v1951
        %v1977 = vmul.f32 %v1953, 1.442695
        %v1978 = vpow.pop %v1977
        %v1979 = vmul.f32 %v1954, 1.442695
        %v1980 = vpow.pop %v1979
        %v1981 = vmul.f32 %v1955, 1.442695
        %v1982 = vpow.pop %v1981
        %v1983 = vmul.f32 %v1956, 1.442695
        %v1984 = vpow.pop %v1983
        %v1985 = vmul.f32 %v1957, 1.442695
        %v1986 = vpow.pop %v1985
        %v1987 = vmul.f32 %v1958, 1.442695
        %v1988 = vpow.pop %v1987
        %v1989 = vmul.f32 %v1959, 1.442695
        %v1990 = vpow.pop %v1989
        %v1991 = vmul.f32 %v1960, 1.442695
        %v1992 = vpow.pop %v1991
        %v1993 = vmul.f32 %v1961, 1.442695
        %v1994 = vpow.pop %v1993
        %v1995 = vmul.f32 %v1962, 1.442695
        %v1996 = vpow.pop %v1995
        %v1997 = vmul.f32 %v1963, 1.442695
        %v1998 = vpow.pop %v1997
        %v1999 = vmul.f32 %v1964, 1.442695
        %v2000 = vpow.pop %v1999
        %v2001 = vmul.f32 %v1965, 1.442695
        %v2002 = vpow.pop %v2001
        %v2003 = vmul.f32 %v1966, 1.442695
        %v2004 = vpow.pop %v2003
        %v2005 = vmul.f32 %v1967, 1.442695
        %v2006 = vpow.pop %v2005
        %v2007 = vmul.f32 %v1968, 1.442695
        %v2008 = vpow.pop %v2007
        %v2009 = vmul.f32 %v1969, 1.442695
        %v2010 = vpow.pop %v2009
        %v2011 = vmul.f32 %v1970, 1.442695
        %v2012 = vpow.pop %v2011
        %v2013 = vmul.f32 %v1971, 1.442695
        %v2014 = vpow.pop %v2013
        %v2015 = vmul.f32 %v1972, 1.442695
        %v2016 = vpow.pop %v2015
        %v2017 = vmul.f32 %v1973, 1.442695
        %v2018 = vpow.pop %v2017
        %v2019 = vmul.f32 %v1974, 1.442695
        %v2020 = vpow.pop %v2019
        %v2021 = vmul.f32 %v1975, 1.442695
        %v2022 = vpow.pop %v2021
        %v2023 = vmul.f32 %v1976, 1.442695
        %v2024 = vpow.pop %v2023
        %v2025 = vadd.f32 %v1978, 1.0
        %v2026 = vadd.f32 %v1980, 1.0
        %v2027 = vadd.f32 %v1982, 1.0
        %v2028 = vadd.f32 %v1984, 1.0
        %v2029 = vadd.f32 %v1986, 1.0
        %v2030 = vadd.f32 %v1988, 1.0
        %v2031 = vadd.f32 %v1990, 1.0
        %v2032 = vadd.f32 %v1992, 1.0
        %v2033 = vadd.f32 %v1994, 1.0
        %v2034 = vadd.f32 %v1996, 1.0
        %v2035 = vadd.f32 %v1998, 1.0
        %v2036 = vadd.f32 %v2000, 1.0
        %v2037 = vadd.f32 %v2002, 1.0
        %v2038 = vadd.f32 %v2004, 1.0
        %v2039 = vadd.f32 %v2006, 1.0
        %v2040 = vadd.f32 %v2008, 1.0
        %v2041 = vadd.f32 %v2010, 1.0
        %v2042 = vadd.f32 %v2012, 1.0
        %v2043 = vadd.f32 %v2014, 1.0
        %v2044 = vadd.f32 %v2016, 1.0
        %v2045 = vadd.f32 %v2018, 1.0
        %v2046 = vadd.f32 %v2020, 1.0
        %v2047 = vadd.f32 %v2022, 1.0
        %v2048 = vadd.f32 %v2024, 1.0
        %v2049 = vrcp.pop %v2025
        %v2050 = vmul.f32 %v2025, %v2049
        %v2051 = vsub.f32 1.0, %v2050
        %v2052 = vmul.f32 %v2049, %v2051
        %v2053 = vadd.f32 %v2049, %v2052
        %vm2054 = vweird.f32 %v2025
        %vm2055 = vweird.f32 %v2049
        %vm2056 = vmor %vm2054, %vm2055
        %v2057 = vsel %vm2056, %v2049, %v2053
        %v2058 = vand.u32 2147483647, %v2025
        %vm2059 = vcmp.eq.f32.partialorder %v2058, 8.507059e+37
        %v2060 = vand.u32 %v2025, 2147483648
        %v2061 = vor.u32 1.1754944e-38, %v2060
        %v2062 = vsel %vm2059, %v2061, %v2057
        %v2063 = vmul.f32 1.0, %v2062
        %v2064 = vrcp.pop %v2026
        %v2065 = vmul.f32 %v2026, %v2064
        %v2066 = vsub.f32 1.0, %v2065
        %v2067 = vmul.f32 %v2064, %v2066
        %v2068 = vadd.f32 %v2064, %v2067
        %vm2069 = vweird.f32 %v2026
        %vm2070 = vweird.f32 %v2064
        %vm2071 = vmor %vm2069, %vm2070
        %v2072 = vsel %vm2071, %v2064, %v2068
        %v2073 = vand.u32 2147483647, %v2026
        %vm2074 = vcmp.eq.f32.partialorder %v2073, 8.507059e+37
        %v2075 = vand.u32 %v2026, 2147483648
        %v2076 = vor.u32 1.1754944e-38, %v2075
        %v2077 = vsel %vm2074, %v2076, %v2072
        %v2078 = vmul.f32 1.0, %v2077
        %v2079 = vrcp.pop %v2027
        %v2080 = vmul.f32 %v2027, %v2079
        %v2081 = vsub.f32 1.0, %v2080
        %v2082 = vmul.f32 %v2079, %v2081
        %v2083 = vadd.f32 %v2079, %v2082
        %vm2084 = vweird.f32 %v2027
        %vm2085 = vweird.f32 %v2079
        %vm2086 = vmor %vm2084, %vm2085
        %v2087 = vsel %vm2086, %v2079, %v2083
        %v2088 = vand.u32 2147483647, %v2027
        %vm2089 = vcmp.eq.f32.partialorder %v2088, 8.507059e+37
        %v2090 = vand.u32 %v2027, 2147483648
        %v2091 = vor.u32 1.1754944e-38, %v2090
        %v2092 = vsel %vm2089, %v2091, %v2087
        %v2093 = vmul.f32 1.0, %v2092
        %v2094 = vrcp.pop %v2028
        %v2095 = vmul.f32 %v2028, %v2094
        %v2096 = vsub.f32 1.0, %v2095
        %v2097 = vmul.f32 %v2094, %v2096
        %v2098 = vadd.f32 %v2094, %v2097
        %vm2099 = vweird.f32 %v2028
        %vm2100 = vweird.f32 %v2094
        %vm2101 = vmor %vm2099, %vm2100
        %v2102 = vsel %vm2101, %v2094, %v2098
        %v2103 = vand.u32 2147483647, %v2028
        %vm2104 = vcmp.eq.f32.partialorder %v2103, 8.507059e+37
        %v2105 = vand.u32 %v2028, 2147483648
        %v2106 = vor.u32 1.1754944e-38, %v2105
        %v2107 = vsel %vm2104, %v2106, %v2102
        %v2108 = vmul.f32 1.0, %v2107
        %v2109 = vrcp.pop %v2029
        %v2110 = vmul.f32 %v2029, %v2109
        %v2111 = vsub.f32 1.0, %v2110
        %v2112 = vmul.f32 %v2109, %v2111
        %v2113 = vadd.f32 %v2109, %v2112
        %vm2114 = vweird.f32 %v2029
        %vm2115 = vweird.f32 %v2109
        %vm2116 = vmor %vm2114, %vm2115
        %v2117 = vsel %vm2116, %v2109, %v2113
        %v2118 = vand.u32 2147483647, %v2029
        %vm2119 = vcmp.eq.f32.partialorder %v2118, 8.507059e+37
        %v2120 = vand.u32 %v2029, 2147483648
        %v2121 = vor.u32 1.1754944e-38, %v2120
        %v2122 = vsel %vm2119, %v2121, %v2117
        %v2123 = vmul.f32 1.0, %v2122
        %v2124 = vrcp.pop %v2030
        %v2125 = vmul.f32 %v2030, %v2124
        %v2126 = vsub.f32 1.0, %v2125
        %v2127 = vmul.f32 %v2124, %v2126
        %v2128 = vadd.f32 %v2124, %v2127
        %vm2129 = vweird.f32 %v2030
        %vm2130 = vweird.f32 %v2124
        %vm2131 = vmor %vm2129, %vm2130
        %v2132 = vsel %vm2131, %v2124, %v2128
        %v2133 = vand.u32 2147483647, %v2030
        %vm2134 = vcmp.eq.f32.partialorder %v2133, 8.507059e+37
        %v2135 = vand.u32 %v2030, 2147483648
        %v2136 = vor.u32 1.1754944e-38, %v2135
        %v2137 = vsel %vm2134, %v2136, %v2132
        %v2138 = vmul.f32 1.0, %v2137
        %v2139 = vrcp.pop %v2031
        %v2140 = vmul.f32 %v2031, %v2139
        %v2141 = vsub.f32 1.0, %v2140
        %v2142 = vmul.f32 %v2139, %v2141
        %v2143 = vadd.f32 %v2139, %v2142
        %vm2144 = vweird.f32 %v2031
        %vm2145 = vweird.f32 %v2139
        %vm2146 = vmor %vm2144, %vm2145
        %v2147 = vsel %vm2146, %v2139, %v2143
        %v2148 = vand.u32 2147483647, %v2031
        %vm2149 = vcmp.eq.f32.partialorder %v2148, 8.507059e+37
        %v2150 = vand.u32 %v2031, 2147483648
        %v2151 = vor.u32 1.1754944e-38, %v2150
        %v2152 = vsel %vm2149, %v2151, %v2147
        %v2153 = vmul.f32 1.0, %v2152
        %v2154 = vrcp.pop %v2032
        %v2155 = vmul.f32 %v2032, %v2154
        %v2156 = vsub.f32 1.0, %v2155
        %v2157 = vmul.f32 %v2154, %v2156
        %v2158 = vadd.f32 %v2154, %v2157
        %vm2159 = vweird.f32 %v2032
        %vm2160 = vweird.f32 %v2154
        %vm2161 = vmor %vm2159, %vm2160
        %v2162 = vsel %vm2161, %v2154, %v2158
        %v2163 = vand.u32 2147483647, %v2032
        %vm2164 = vcmp.eq.f32.partialorder %v2163, 8.507059e+37
        %v2165 = vand.u32 %v2032, 2147483648
        %v2166 = vor.u32 1.1754944e-38, %v2165
        %v2167 = vsel %vm2164, %v2166, %v2162
        %v2168 = vmul.f32 1.0, %v2167
        %v2169 = vrcp.pop %v2033
        %v2170 = vmul.f32 %v2033, %v2169
        %v2171 = vsub.f32 1.0, %v2170
        %v2172 = vmul.f32 %v2169, %v2171
        %v2173 = vadd.f32 %v2169, %v2172
        %vm2174 = vweird.f32 %v2033
        %vm2175 = vweird.f32 %v2169
        %vm2176 = vmor %vm2174, %vm2175
        %v2177 = vsel %vm2176, %v2169, %v2173
        %v2178 = vand.u32 2147483647, %v2033
        %vm2179 = vcmp.eq.f32.partialorder %v2178, 8.507059e+37
        %v2180 = vand.u32 %v2033, 2147483648
        %v2181 = vor.u32 1.1754944e-38, %v2180
        %v2182 = vsel %vm2179, %v2181, %v2177
        %v2183 = vmul.f32 1.0, %v2182
        %v2184 = vrcp.pop %v2034
        %v2185 = vmul.f32 %v2034, %v2184
        %v2186 = vsub.f32 1.0, %v2185
        %v2187 = vmul.f32 %v2184, %v2186
        %v2188 = vadd.f32 %v2184, %v2187
        %vm2189 = vweird.f32 %v2034
        %vm2190 = vweird.f32 %v2184
        %vm2191 = vmor %vm2189, %vm2190
        %v2192 = vsel %vm2191, %v2184, %v2188
        %v2193 = vand.u32 2147483647, %v2034
        %vm2194 = vcmp.eq.f32.partialorder %v2193, 8.507059e+37
        %v2195 = vand.u32 %v2034, 2147483648
        %v2196 = vor.u32 1.1754944e-38, %v2195
        %v2197 = vsel %vm2194, %v2196, %v2192
        %v2198 = vmul.f32 1.0, %v2197
        %v2199 = vrcp.pop %v2035
        %v2200 = vmul.f32 %v2035, %v2199
        %v2201 = vsub.f32 1.0, %v2200
        %v2202 = vmul.f32 %v2199, %v2201
        %v2203 = vadd.f32 %v2199, %v2202
        %vm2204 = vweird.f32 %v2035
        %vm2205 = vweird.f32 %v2199
        %vm2206 = vmor %vm2204, %vm2205
        %v2207 = vsel %vm2206, %v2199, %v2203
        %v2208 = vand.u32 2147483647, %v2035
        %vm2209 = vcmp.eq.f32.partialorder %v2208, 8.507059e+37
        %v2210 = vand.u32 %v2035, 2147483648
        %v2211 = vor.u32 1.1754944e-38, %v2210
        %v2212 = vsel %vm2209, %v2211, %v2207
        %v2213 = vmul.f32 1.0, %v2212
        %v2214 = vrcp.pop %v2036
        %v2215 = vmul.f32 %v2036, %v2214
        %v2216 = vsub.f32 1.0, %v2215
        %v2217 = vmul.f32 %v2214, %v2216
        %v2218 = vadd.f32 %v2214, %v2217
        %vm2219 = vweird.f32 %v2036
        %vm2220 = vweird.f32 %v2214
        %vm2221 = vmor %vm2219, %vm2220
        %v2222 = vsel %vm2221, %v2214, %v2218
        %v2223 = vand.u32 2147483647, %v2036
        %vm2224 = vcmp.eq.f32.partialorder %v2223, 8.507059e+37
        %v2225 = vand.u32 %v2036, 2147483648
        %v2226 = vor.u32 1.1754944e-38, %v2225
        %v2227 = vsel %vm2224, %v2226, %v2222
        %v2228 = vmul.f32 1.0, %v2227
        %v2229 = vrcp.pop %v2037
        %v2230 = vmul.f32 %v2037, %v2229
        %v2231 = vsub.f32 1.0, %v2230
        %v2232 = vmul.f32 %v2229, %v2231
        %v2233 = vadd.f32 %v2229, %v2232
        %vm2234 = vweird.f32 %v2037
        %vm2235 = vweird.f32 %v2229
        %vm2236 = vmor %vm2234, %vm2235
        %v2237 = vsel %vm2236, %v2229, %v2233
        %v2238 = vand.u32 2147483647, %v2037
        %vm2239 = vcmp.eq.f32.partialorder %v2238, 8.507059e+37
        %v2240 = vand.u32 %v2037, 2147483648
        %v2241 = vor.u32 1.1754944e-38, %v2240
        %v2242 = vsel %vm2239, %v2241, %v2237
        %v2243 = vmul.f32 1.0, %v2242
        %v2244 = vrcp.pop %v2038
        %v2245 = vmul.f32 %v2038, %v2244
        %v2246 = vsub.f32 1.0, %v2245
        %v2247 = vmul.f32 %v2244, %v2246
        %v2248 = vadd.f32 %v2244, %v2247
        %vm2249 = vweird.f32 %v2038
        %vm2250 = vweird.f32 %v2244
        %vm2251 = vmor %vm2249, %vm2250
        %v2252 = vsel %vm2251, %v2244, %v2248
        %v2253 = vand.u32 2147483647, %v2038
        %vm2254 = vcmp.eq.f32.partialorder %v2253, 8.507059e+37
        %v2255 = vand.u32 %v2038, 2147483648
        %v2256 = vor.u32 1.1754944e-38, %v2255
        %v2257 = vsel %vm2254, %v2256, %v2252
        %v2258 = vmul.f32 1.0, %v2257
        %v2259 = vrcp.pop %v2039
        %v2260 = vmul.f32 %v2039, %v2259
        %v2261 = vsub.f32 1.0, %v2260
        %v2262 = vmul.f32 %v2259, %v2261
        %v2263 = vadd.f32 %v2259, %v2262
        %vm2264 = vweird.f32 %v2039
        %vm2265 = vweird.f32 %v2259
        %vm2266 = vmor %vm2264, %vm2265
        %v2267 = vsel %vm2266, %v2259, %v2263
        %v2268 = vand.u32 2147483647, %v2039
        %vm2269 = vcmp.eq.f32.partialorder %v2268, 8.507059e+37
        %v2270 = vand.u32 %v2039, 2147483648
        %v2271 = vor.u32 1.1754944e-38, %v2270
        %v2272 = vsel %vm2269, %v2271, %v2267
        %v2273 = vmul.f32 1.0, %v2272
        %v2274 = vrcp.pop %v2040
        %v2275 = vmul.f32 %v2040, %v2274
        %v2276 = vsub.f32 1.0, %v2275
        %v2277 = vmul.f32 %v2274, %v2276
        %v2278 = vadd.f32 %v2274, %v2277
        %vm2279 = vweird.f32 %v2040
        %vm2280 = vweird.f32 %v2274
        %vm2281 = vmor %vm2279, %vm2280
        %v2282 = vsel %vm2281, %v2274, %v2278
        %v2283 = vand.u32 2147483647, %v2040
        %vm2284 = vcmp.eq.f32.partialorder %v2283, 8.507059e+37
        %v2285 = vand.u32 %v2040, 2147483648
        %v2286 = vor.u32 1.1754944e-38, %v2285
        %v2287 = vsel %vm2284, %v2286, %v2282
        %v2288 = vmul.f32 1.0, %v2287
        %v2289 = vrcp.pop %v2041
        %v2290 = vmul.f32 %v2041, %v2289
        %v2291 = vsub.f32 1.0, %v2290
        %v2292 = vmul.f32 %v2289, %v2291
        %v2293 = vadd.f32 %v2289, %v2292
        %vm2294 = vweird.f32 %v2041
        %vm2295 = vweird.f32 %v2289
        %vm2296 = vmor %vm2294, %vm2295
        %v2297 = vsel %vm2296, %v2289, %v2293
        %v2298 = vand.u32 2147483647, %v2041
        %vm2299 = vcmp.eq.f32.partialorder %v2298, 8.507059e+37
        %v2300 = vand.u32 %v2041, 2147483648
        %v2301 = vor.u32 1.1754944e-38, %v2300
        %v2302 = vsel %vm2299, %v2301, %v2297
        %v2303 = vmul.f32 1.0, %v2302
        %v2304 = vrcp.pop %v2042
        %v2305 = vmul.f32 %v2042, %v2304
        %v2306 = vsub.f32 1.0, %v2305
        %v2307 = vmul.f32 %v2304, %v2306
        %v2308 = vadd.f32 %v2304, %v2307
        %vm2309 = vweird.f32 %v2042
        %vm2310 = vweird.f32 %v2304
        %vm2311 = vmor %vm2309, %vm2310
        %v2312 = vsel %vm2311, %v2304, %v2308
        %v2313 = vand.u32 2147483647, %v2042
        %vm2314 = vcmp.eq.f32.partialorder %v2313, 8.507059e+37
        %v2315 = vand.u32 %v2042, 2147483648
        %v2316 = vor.u32 1.1754944e-38, %v2315
        %v2317 = vsel %vm2314, %v2316, %v2312
        %v2318 = vmul.f32 1.0, %v2317
        %v2319 = vrcp.pop %v2043
        %v2320 = vmul.f32 %v2043, %v2319
        %v2321 = vsub.f32 1.0, %v2320
        %v2322 = vmul.f32 %v2319, %v2321
        %v2323 = vadd.f32 %v2319, %v2322
        %vm2324 = vweird.f32 %v2043
        %vm2325 = vweird.f32 %v2319
        %vm2326 = vmor %vm2324, %vm2325
        %v2327 = vsel %vm2326, %v2319, %v2323
        %v2328 = vand.u32 2147483647, %v2043
        %vm2329 = vcmp.eq.f32.partialorder %v2328, 8.507059e+37
        %v2330 = vand.u32 %v2043, 2147483648
        %v2331 = vor.u32 1.1754944e-38, %v2330
        %v2332 = vsel %vm2329, %v2331, %v2327
        %v2333 = vmul.f32 1.0, %v2332
        %v2334 = vrcp.pop %v2044
        %v2335 = vmul.f32 %v2044, %v2334
        %v2336 = vsub.f32 1.0, %v2335
        %v2337 = vmul.f32 %v2334, %v2336
        %v2338 = vadd.f32 %v2334, %v2337
        %vm2339 = vweird.f32 %v2044
        %vm2340 = vweird.f32 %v2334
        %vm2341 = vmor %vm2339, %vm2340
        %v2342 = vsel %vm2341, %v2334, %v2338
        %v2343 = vand.u32 2147483647, %v2044
        %vm2344 = vcmp.eq.f32.partialorder %v2343, 8.507059e+37
        %v2345 = vand.u32 %v2044, 2147483648
        %v2346 = vor.u32 1.1754944e-38, %v2345
        %v2347 = vsel %vm2344, %v2346, %v2342
        %v2348 = vmul.f32 1.0, %v2347
        %v2349 = vrcp.pop %v2045
        %v2350 = vmul.f32 %v2045, %v2349
        %v2351 = vsub.f32 1.0, %v2350
        %v2352 = vmul.f32 %v2349, %v2351
        %v2353 = vadd.f32 %v2349, %v2352
        %vm2354 = vweird.f32 %v2045
        %vm2355 = vweird.f32 %v2349
        %vm2356 = vmor %vm2354, %vm2355
        %v2357 = vsel %vm2356, %v2349, %v2353
        %v2358 = vand.u32 2147483647, %v2045
        %vm2359 = vcmp.eq.f32.partialorder %v2358, 8.507059e+37
        %v2360 = vand.u32 %v2045, 2147483648
        %v2361 = vor.u32 1.1754944e-38, %v2360
        %v2362 = vsel %vm2359, %v2361, %v2357
        %v2363 = vmul.f32 1.0, %v2362
        %v2364 = vrcp.pop %v2046
        %v2365 = vmul.f32 %v2046, %v2364
        %v2366 = vsub.f32 1.0, %v2365
        %v2367 = vmul.f32 %v2364, %v2366
        %v2368 = vadd.f32 %v2364, %v2367
        %vm2369 = vweird.f32 %v2046
        %vm2370 = vweird.f32 %v2364
        %vm2371 = vmor %vm2369, %vm2370
        %v2372 = vsel %vm2371, %v2364, %v2368
        %v2373 = vand.u32 2147483647, %v2046
        %vm2374 = vcmp.eq.f32.partialorder %v2373, 8.507059e+37
        %v2375 = vand.u32 %v2046, 2147483648
        %v2376 = vor.u32 1.1754944e-38, %v2375
        %v2377 = vsel %vm2374, %v2376, %v2372
        %v2378 = vmul.f32 1.0, %v2377
        %v2379 = vrcp.pop %v2047
        %v2380 = vmul.f32 %v2047, %v2379
        %v2381 = vsub.f32 1.0, %v2380
        %v2382 = vmul.f32 %v2379, %v2381
        %v2383 = vadd.f32 %v2379, %v2382
        %vm2384 = vweird.f32 %v2047
        %vm2385 = vweird.f32 %v2379
        %vm2386 = vmor %vm2384, %vm2385
        %v2387 = vsel %vm2386, %v2379, %v2383
        %v2388 = vand.u32 2147483647, %v2047
        %vm2389 = vcmp.eq.f32.partialorder %v2388, 8.507059e+37
        %v2390 = vand.u32 %v2047, 2147483648
        %v2391 = vor.u32 1.1754944e-38, %v2390
        %v2392 = vsel %vm2389, %v2391, %v2387
        %v2393 = vmul.f32 1.0, %v2392
        %v2394 = vrcp.pop %v2048
        %v2395 = vmul.f32 %v2048, %v2394
        %v2396 = vsub.f32 1.0, %v2395
        %v2397 = vmul.f32 %v2394, %v2396
        %v2398 = vadd.f32 %v2394, %v2397
        %vm2399 = vweird.f32 %v2048
        %vm2400 = vweird.f32 %v2394
        %vm2401 = vmor %vm2399, %vm2400
        %v2402 = vsel %vm2401, %v2394, %v2398
        %v2403 = vand.u32 2147483647, %v2048
        %vm2404 = vcmp.eq.f32.partialorder %v2403, 8.507059e+37
        %v2405 = vand.u32 %v2048, 2147483648
        %v2406 = vor.u32 1.1754944e-38, %v2405
        %v2407 = vsel %vm2404, %v2406, %v2402
        %v2408 = vmul.f32 1.0, %v2407
        %v2409 = vadd.f32 %v1325, %v2063
        %v2410 = vadd.f32 %v1326, %v2078
        %v2411 = vadd.f32 %v1327, %v2093
        %v2412 = vadd.f32 %v1328, %v2108
        %v2413 = vadd.f32 %v1329, %v2123
        %v2414 = vadd.f32 %v1330, %v2138
        %v2415 = vadd.f32 %v1331, %v2153
        %v2416 = vadd.f32 %v1332, %v2168
        %v2417 = vadd.f32 %v1333, %v2183
        %v2418 = vadd.f32 %v1334, %v2198
        %v2419 = vadd.f32 %v1335, %v2213
        %v2420 = vadd.f32 %v1336, %v2228
        %v2421 = vadd.f32 %v1337, %v2243
        %v2422 = vadd.f32 %v1338, %v2258
        %v2423 = vadd.f32 %v1339, %v2273
        %v2424 = vadd.f32 %v1340, %v2288
        %v2425 = vadd.f32 %v1341, %v2303
        %v2426 = vadd.f32 %v1342, %v2318
        %v2427 = vadd.f32 %v1343, %v2333
        %v2428 = vadd.f32 %v1344, %v2348
        %v2429 = vadd.f32 %v1345, %v2363
        %v2430 = vadd.f32 %v1346, %v2378
        %v2431 = vadd.f32 %v1347, %v2393
        %v2432 = vadd.f32 %v1348, %v2408
        %s2433 = scalar_lea.vmem %s1, 32
        %v2434 = vld [vmem:[%s2433] sm:$0xff]
        %v2435 = vld [vmem:[%s2433 + $0x8] sm:$0xff]
        %2436 = vmatpush.msra.mxu0 0.0
        %2437 = vmatpush.msra.mxu0 0.0
        %2438 = vmatpush.msra.mxu0 0.0
        %2439 = vmatpush.msra.mxu0 0.0
        %2440 = vmatpush.msra.mxu0 0.0
        %2441 = vmatpush.msra.mxu0 0.0
        %2442 = vmatpush.msra.mxu0 0.0
        %2443 = vmatpush.msra.mxu0 0.0
        %2444 = vmatpush.msra.mxu0 0.0
        %2445 = vmatpush.msra.mxu0 0.0
        %2446 = vmatpush.msra.mxu0 0.0
        %2447 = vmatpush.msra.mxu0 0.0
        %2448 = vmatpush.msra.mxu0 0.0
        %2449 = vmatpush.msra.mxu0 0.0
        %2450 = vmatpush.msra.mxu0 %v2435
        %2451 = vmatpush.msra.mxu0 %v2434
        %2452 = vmatmul.f32.gmra.mxu0 %v197
        %v2453 = vpop.f32.mrf.mxu0
        %v2454 = vadd.f32 0.0, %v2453
        %2455 = vmatmul.f32.gmra.mxu0 %v200
        %v2456 = vpop.f32.mrf.mxu0
        %v2457 = vadd.f32 0.0, %v2456
        %2458 = vmatmul.f32.gmra.mxu0 %v203
        %v2459 = vpop.f32.mrf.mxu0
        %v2460 = vadd.f32 0.0, %v2459
        %2461 = vmatmul.f32.gmra.mxu0 %v206
        %v2462 = vpop.f32.mrf.mxu0
        %v2463 = vadd.f32 0.0, %v2462
        %2464 = vmatmul.f32.gmra.mxu0 %v209
        %v2465 = vpop.f32.mrf.mxu0
        %v2466 = vadd.f32 0.0, %v2465
        %2467 = vmatmul.f32.gmra.mxu0 %v212
        %v2468 = vpop.f32.mrf.mxu0
        %v2469 = vadd.f32 0.0, %v2468
        %2470 = vmatmul.f32.gmra.mxu0 %v215
        %v2471 = vpop.f32.mrf.mxu0
        %v2472 = vadd.f32 0.0, %v2471
        %2473 = vmatmul.f32.gmra.mxu0 %v218
        %v2474 = vpop.f32.mrf.mxu0
        %v2475 = vadd.f32 0.0, %v2474
        %2476 = vmatmul.f32.gmra.mxu0 %v221
        %v2477 = vpop.f32.mrf.mxu0
        %v2478 = vadd.f32 0.0, %v2477
        %2479 = vmatmul.f32.gmra.mxu0 %v224
        %v2480 = vpop.f32.mrf.mxu0
        %v2481 = vadd.f32 0.0, %v2480
        %2482 = vmatmul.f32.gmra.mxu0 %v227
        %v2483 = vpop.f32.mrf.mxu0
        %v2484 = vadd.f32 0.0, %v2483
        %2485 = vmatmul.f32.gmra.mxu0 %v230
        %v2486 = vpop.f32.mrf.mxu0
        %v2487 = vadd.f32 0.0, %v2486
        %2488 = vmatmul.f32.gmra.mxu0 %v233
        %v2489 = vpop.f32.mrf.mxu0
        %v2490 = vadd.f32 0.0, %v2489
        %2491 = vmatmul.f32.gmra.mxu0 %v236
        %v2492 = vpop.f32.mrf.mxu0
        %v2493 = vadd.f32 0.0, %v2492
        %2494 = vmatmul.f32.gmra.mxu0 %v239
        %v2495 = vpop.f32.mrf.mxu0
        %v2496 = vadd.f32 0.0, %v2495
        %2497 = vmatmul.f32.gmra.mxu0 %v242
        %v2498 = vpop.f32.mrf.mxu0
        %v2499 = vadd.f32 0.0, %v2498
        %2500 = vmatmul.f32.gmra.mxu0 %v245
        %v2501 = vpop.f32.mrf.mxu0
        %v2502 = vadd.f32 0.0, %v2501
        %2503 = vmatmul.f32.gmra.mxu0 %v248
        %v2504 = vpop.f32.mrf.mxu0
        %v2505 = vadd.f32 0.0, %v2504
        %2506 = vmatmul.f32.gmra.mxu0 %v251
        %v2507 = vpop.f32.mrf.mxu0
        %v2508 = vadd.f32 0.0, %v2507
        %2509 = vmatmul.f32.gmra.mxu0 %v254
        %v2510 = vpop.f32.mrf.mxu0
        %v2511 = vadd.f32 0.0, %v2510
        %2512 = vmatmul.f32.gmra.mxu0 %v257
        %v2513 = vpop.f32.mrf.mxu0
        %v2514 = vadd.f32 0.0, %v2513
        %2515 = vmatmul.f32.gmra.mxu0 %v260
        %v2516 = vpop.f32.mrf.mxu0
        %v2517 = vadd.f32 0.0, %v2516
        %2518 = vmatmul.f32.gmra.mxu0 %v263
        %v2519 = vpop.f32.mrf.mxu0
        %v2520 = vadd.f32 0.0, %v2519
        %2521 = vmatmul.f32.gmra.mxu0 %v266
        %v2522 = vpop.f32.mrf.mxu0
        %v2523 = vadd.f32 0.0, %v2522
        %2524 = vdwg.mxu0
        %s2525 = scalar_lea.vmem %s2, 32
        %v2526 = vld [vmem:[%s2525] sm:$0xff]
        %v2527 = vld [vmem:[%s2525 + $0x8] sm:$0xff]
        %2528 = vmatpush.msra.mxu0 0.0
        %2529 = vmatpush.msra.mxu0 0.0
        %2530 = vmatpush.msra.mxu0 0.0
        %2531 = vmatpush.msra.mxu0 0.0
        %2532 = vmatpush.msra.mxu0 0.0
        %2533 = vmatpush.msra.mxu0 0.0
        %2534 = vmatpush.msra.mxu0 0.0
        %2535 = vmatpush.msra.mxu0 0.0
        %2536 = vmatpush.msra.mxu0 0.0
        %2537 = vmatpush.msra.mxu0 0.0
        %2538 = vmatpush.msra.mxu0 0.0
        %2539 = vmatpush.msra.mxu0 0.0
        %2540 = vmatpush.msra.mxu0 0.0
        %2541 = vmatpush.msra.mxu0 0.0
        %2542 = vmatpush.msra.mxu0 %v2527
        %2543 = vmatpush.msra.mxu0 %v2526
        %2544 = vmatmul.f32.gmra.mxu0 %v197
        %v2545 = vpop.f32.mrf.mxu0
        %v2546 = vadd.f32 0.0, %v2545
        %2547 = vmatmul.f32.gmra.mxu0 %v200
        %v2548 = vpop.f32.mrf.mxu0
        %v2549 = vadd.f32 0.0, %v2548
        %2550 = vmatmul.f32.gmra.mxu0 %v203
        %v2551 = vpop.f32.mrf.mxu0
        %v2552 = vadd.f32 0.0, %v2551
        %2553 = vmatmul.f32.gmra.mxu0 %v206
        %v2554 = vpop.f32.mrf.mxu0
        %v2555 = vadd.f32 0.0, %v2554
        %2556 = vmatmul.f32.gmra.mxu0 %v209
        %v2557 = vpop.f32.mrf.mxu0
        %v2558 = vadd.f32 0.0, %v2557
        %2559 = vmatmul.f32.gmra.mxu0 %v212
        %v2560 = vpop.f32.mrf.mxu0
        %v2561 = vadd.f32 0.0, %v2560
        %2562 = vmatmul.f32.gmra.mxu0 %v215
        %v2563 = vpop.f32.mrf.mxu0
        %v2564 = vadd.f32 0.0, %v2563
        %2565 = vmatmul.f32.gmra.mxu0 %v218
        %v2566 = vpop.f32.mrf.mxu0
        %v2567 = vadd.f32 0.0, %v2566
        %2568 = vmatmul.f32.gmra.mxu0 %v221
        %v2569 = vpop.f32.mrf.mxu0
        %v2570 = vadd.f32 0.0, %v2569
        %2571 = vmatmul.f32.gmra.mxu0 %v224
        %v2572 = vpop.f32.mrf.mxu0
        %v2573 = vadd.f32 0.0, %v2572
        %2574 = vmatmul.f32.gmra.mxu0 %v227
        %v2575 = vpop.f32.mrf.mxu0
        %v2576 = vadd.f32 0.0, %v2575
        %2577 = vmatmul.f32.gmra.mxu0 %v230
        %v2578 = vpop.f32.mrf.mxu0
        %v2579 = vadd.f32 0.0, %v2578
        %2580 = vmatmul.f32.gmra.mxu0 %v233
        %v2581 = vpop.f32.mrf.mxu0
        %v2582 = vadd.f32 0.0, %v2581
        %2583 = vmatmul.f32.gmra.mxu0 %v236
        %v2584 = vpop.f32.mrf.mxu0
        %v2585 = vadd.f32 0.0, %v2584
        %2586 = vmatmul.f32.gmra.mxu0 %v239
        %v2587 = vpop.f32.mrf.mxu0
        %v2588 = vadd.f32 0.0, %v2587
        %2589 = vmatmul.f32.gmra.mxu0 %v242
        %v2590 = vpop.f32.mrf.mxu0
        %v2591 = vadd.f32 0.0, %v2590
        %2592 = vmatmul.f32.gmra.mxu0 %v245
        %v2593 = vpop.f32.mrf.mxu0
        %v2594 = vadd.f32 0.0, %v2593
        %2595 = vmatmul.f32.gmra.mxu0 %v248
        %v2596 = vpop.f32.mrf.mxu0
        %v2597 = vadd.f32 0.0, %v2596
        %2598 = vmatmul.f32.gmra.mxu0 %v251
        %v2599 = vpop.f32.mrf.mxu0
        %v2600 = vadd.f32 0.0, %v2599
        %2601 = vmatmul.f32.gmra.mxu0 %v254
        %v2602 = vpop.f32.mrf.mxu0
        %v2603 = vadd.f32 0.0, %v2602
        %2604 = vmatmul.f32.gmra.mxu0 %v257
        %v2605 = vpop.f32.mrf.mxu0
        %v2606 = vadd.f32 0.0, %v2605
        %2607 = vmatmul.f32.gmra.mxu0 %v260
        %v2608 = vpop.f32.mrf.mxu0
        %v2609 = vadd.f32 0.0, %v2608
        %2610 = vmatmul.f32.gmra.mxu0 %v263
        %v2611 = vpop.f32.mrf.mxu0
        %v2612 = vadd.f32 0.0, %v2611
        %2613 = vmatmul.f32.gmra.mxu0 %v266
        %v2614 = vpop.f32.mrf.mxu0
        %v2615 = vadd.f32 0.0, %v2614
        %2616 = vdwg.mxu0
        %v2618 = vsel %vm448, %v2454, 0
        %v2621 = vsel %vm448, %v2457, 0
        %v2624 = vsel %vm448, %v2546, 0
        %v2627 = vsel %vm448, %v2549, 0
        %2629 = vmatpush.xpose.msra.mxu0 0.0
        %2630 = vmatpush.xpose.msra.mxu0 0.0
        %2631 = vmatpush.xpose.msra.mxu0 0.0
        %2632 = vmatpush.xpose.msra.mxu0 0.0
        %2633 = vmatpush.xpose.msra.mxu0 0.0
        %2634 = vmatpush.xpose.msra.mxu0 0.0
        %2635 = vmatpush.xpose.msra.mxu0 0.0
        %2636 = vmatpush.xpose.msra.mxu0 0.0
        %2637 = vmatpush.xpose.msra.mxu0 0.0
        %2638 = vmatpush.xpose.msra.mxu0 0.0
        %2639 = vmatpush.xpose.msra.mxu0 0.0
        %2640 = vmatpush.xpose.msra.mxu0 0.0
        %2641 = vmatpush.xpose.msra.mxu0 0.0
        %2642 = vmatpush.xpose.msra.mxu0 0.0
        %2643 = vmatpush.xpose.msra.mxu0 %v2627
        %2644 = vmatpush.xpose.msra.mxu0 %v2624
        %2645 = vmatmul.f32.gmra.mxu0 %v2618
        %v2646 = vpop.f32.mrf.mxu0
        %v2647 = vadd.f32 0.0, %v2646
        %2648 = vmatmul.f32.gmra.mxu0 %v2621
        %v2649 = vpop.f32.mrf.mxu0
        %v2650 = vadd.f32 0.0, %v2649
        %2651 = vdwg.mxu0
        %v2653 = vsel %vm448, %v2460, 0
        %v2656 = vsel %vm448, %v2463, 0
        %v2659 = vsel %vm448, %v2552, 0
        %v2662 = vsel %vm448, %v2555, 0
        %2664 = vmatpush.xpose.msra.mxu0 0.0
        %2665 = vmatpush.xpose.msra.mxu0 0.0
        %2666 = vmatpush.xpose.msra.mxu0 0.0
        %2667 = vmatpush.xpose.msra.mxu0 0.0
        %2668 = vmatpush.xpose.msra.mxu0 0.0
        %2669 = vmatpush.xpose.msra.mxu0 0.0
        %2670 = vmatpush.xpose.msra.mxu0 0.0
        %2671 = vmatpush.xpose.msra.mxu0 0.0
        %2672 = vmatpush.xpose.msra.mxu0 0.0
        %2673 = vmatpush.xpose.msra.mxu0 0.0
        %2674 = vmatpush.xpose.msra.mxu0 0.0
        %2675 = vmatpush.xpose.msra.mxu0 0.0
        %2676 = vmatpush.xpose.msra.mxu0 0.0
        %2677 = vmatpush.xpose.msra.mxu0 0.0
        %2678 = vmatpush.xpose.msra.mxu0 %v2662
        %2679 = vmatpush.xpose.msra.mxu0 %v2659
        %2680 = vmatmul.f32.gmra.mxu0 %v2653
        %v2681 = vpop.f32.mrf.mxu0
        %v2682 = vadd.f32 0.0, %v2681
        %2683 = vmatmul.f32.gmra.mxu0 %v2656
        %v2684 = vpop.f32.mrf.mxu0
        %v2685 = vadd.f32 0.0, %v2684
        %2686 = vdwg.mxu0
        %v2688 = vsel %vm448, %v2466, 0
        %v2691 = vsel %vm448, %v2469, 0
        %v2694 = vsel %vm448, %v2558, 0
        %v2697 = vsel %vm448, %v2561, 0
        %2699 = vmatpush.xpose.msra.mxu0 0.0
        %2700 = vmatpush.xpose.msra.mxu0 0.0
        %2701 = vmatpush.xpose.msra.mxu0 0.0
        %2702 = vmatpush.xpose.msra.mxu0 0.0
        %2703 = vmatpush.xpose.msra.mxu0 0.0
        %2704 = vmatpush.xpose.msra.mxu0 0.0
        %2705 = vmatpush.xpose.msra.mxu0 0.0
        %2706 = vmatpush.xpose.msra.mxu0 0.0
        %2707 = vmatpush.xpose.msra.mxu0 0.0
        %2708 = vmatpush.xpose.msra.mxu0 0.0
        %2709 = vmatpush.xpose.msra.mxu0 0.0
        %2710 = vmatpush.xpose.msra.mxu0 0.0
        %2711 = vmatpush.xpose.msra.mxu0 0.0
        %2712 = vmatpush.xpose.msra.mxu0 0.0
        %2713 = vmatpush.xpose.msra.mxu0 %v2697
        %2714 = vmatpush.xpose.msra.mxu0 %v2694
        %2715 = vmatmul.f32.gmra.mxu0 %v2688
        %v2716 = vpop.f32.mrf.mxu0
        %v2717 = vadd.f32 0.0, %v2716
        %2718 = vmatmul.f32.gmra.mxu0 %v2691
        %v2719 = vpop.f32.mrf.mxu0
        %v2720 = vadd.f32 0.0, %v2719
        %2721 = vdwg.mxu0
        %v2723 = vsel %vm448, %v2472, 0
        %v2726 = vsel %vm448, %v2475, 0
        %v2729 = vsel %vm448, %v2564, 0
        %v2732 = vsel %vm448, %v2567, 0
        %2734 = vmatpush.xpose.msra.mxu0 0.0
        %2735 = vmatpush.xpose.msra.mxu0 0.0
        %2736 = vmatpush.xpose.msra.mxu0 0.0
        %2737 = vmatpush.xpose.msra.mxu0 0.0
        %2738 = vmatpush.xpose.msra.mxu0 0.0
        %2739 = vmatpush.xpose.msra.mxu0 0.0
        %2740 = vmatpush.xpose.msra.mxu0 0.0
        %2741 = vmatpush.xpose.msra.mxu0 0.0
        %2742 = vmatpush.xpose.msra.mxu0 0.0
        %2743 = vmatpush.xpose.msra.mxu0 0.0
        %2744 = vmatpush.xpose.msra.mxu0 0.0
        %2745 = vmatpush.xpose.msra.mxu0 0.0
        %2746 = vmatpush.xpose.msra.mxu0 0.0
        %2747 = vmatpush.xpose.msra.mxu0 0.0
        %2748 = vmatpush.xpose.msra.mxu0 %v2732
        %2749 = vmatpush.xpose.msra.mxu0 %v2729
        %2750 = vmatmul.f32.gmra.mxu0 %v2723
        %v2751 = vpop.f32.mrf.mxu0
        %v2752 = vadd.f32 0.0, %v2751
        %2753 = vmatmul.f32.gmra.mxu0 %v2726
        %v2754 = vpop.f32.mrf.mxu0
        %v2755 = vadd.f32 0.0, %v2754
        %2756 = vdwg.mxu0
        %v2758 = vsel %vm448, %v2478, 0
        %v2761 = vsel %vm448, %v2481, 0
        %v2764 = vsel %vm448, %v2570, 0
        %v2767 = vsel %vm448, %v2573, 0
        %2769 = vmatpush.xpose.msra.mxu0 0.0
        %2770 = vmatpush.xpose.msra.mxu0 0.0
        %2771 = vmatpush.xpose.msra.mxu0 0.0
        %2772 = vmatpush.xpose.msra.mxu0 0.0
        %2773 = vmatpush.xpose.msra.mxu0 0.0
        %2774 = vmatpush.xpose.msra.mxu0 0.0
        %2775 = vmatpush.xpose.msra.mxu0 0.0
        %2776 = vmatpush.xpose.msra.mxu0 0.0
        %2777 = vmatpush.xpose.msra.mxu0 0.0
        %2778 = vmatpush.xpose.msra.mxu0 0.0
        %2779 = vmatpush.xpose.msra.mxu0 0.0
        %2780 = vmatpush.xpose.msra.mxu0 0.0
        %2781 = vmatpush.xpose.msra.mxu0 0.0
        %2782 = vmatpush.xpose.msra.mxu0 0.0
        %2783 = vmatpush.xpose.msra.mxu0 %v2767
        %2784 = vmatpush.xpose.msra.mxu0 %v2764
        %2785 = vmatmul.f32.gmra.mxu0 %v2758
        %v2786 = vpop.f32.mrf.mxu0
        %v2787 = vadd.f32 0.0, %v2786
        %2788 = vmatmul.f32.gmra.mxu0 %v2761
        %v2789 = vpop.f32.mrf.mxu0
        %v2790 = vadd.f32 0.0, %v2789
        %2791 = vdwg.mxu0
        %v2793 = vsel %vm448, %v2484, 0
        %v2796 = vsel %vm448, %v2487, 0
        %v2799 = vsel %vm448, %v2576, 0
        %v2802 = vsel %vm448, %v2579, 0
        %2804 = vmatpush.xpose.msra.mxu0 0.0
        %2805 = vmatpush.xpose.msra.mxu0 0.0
        %2806 = vmatpush.xpose.msra.mxu0 0.0
        %2807 = vmatpush.xpose.msra.mxu0 0.0
        %2808 = vmatpush.xpose.msra.mxu0 0.0
        %2809 = vmatpush.xpose.msra.mxu0 0.0
        %2810 = vmatpush.xpose.msra.mxu0 0.0
        %2811 = vmatpush.xpose.msra.mxu0 0.0
        %2812 = vmatpush.xpose.msra.mxu0 0.0
        %2813 = vmatpush.xpose.msra.mxu0 0.0
        %2814 = vmatpush.xpose.msra.mxu0 0.0
        %2815 = vmatpush.xpose.msra.mxu0 0.0
        %2816 = vmatpush.xpose.msra.mxu0 0.0
        %2817 = vmatpush.xpose.msra.mxu0 0.0
        %2818 = vmatpush.xpose.msra.mxu0 %v2802
        %2819 = vmatpush.xpose.msra.mxu0 %v2799
        %2820 = vmatmul.f32.gmra.mxu0 %v2793
        %v2821 = vpop.f32.mrf.mxu0
        %v2822 = vadd.f32 0.0, %v2821
        %2823 = vmatmul.f32.gmra.mxu0 %v2796
        %v2824 = vpop.f32.mrf.mxu0
        %v2825 = vadd.f32 0.0, %v2824
        %2826 = vdwg.mxu0
        %v2828 = vsel %vm448, %v2490, 0
        %v2831 = vsel %vm448, %v2493, 0
        %v2834 = vsel %vm448, %v2582, 0
        %v2837 = vsel %vm448, %v2585, 0
        %2839 = vmatpush.xpose.msra.mxu0 0.0
        %2840 = vmatpush.xpose.msra.mxu0 0.0
        %2841 = vmatpush.xpose.msra.mxu0 0.0
        %2842 = vmatpush.xpose.msra.mxu0 0.0
        %2843 = vmatpush.xpose.msra.mxu0 0.0
        %2844 = vmatpush.xpose.msra.mxu0 0.0
        %2845 = vmatpush.xpose.msra.mxu0 0.0
        %2846 = vmatpush.xpose.msra.mxu0 0.0
        %2847 = vmatpush.xpose.msra.mxu0 0.0
        %2848 = vmatpush.xpose.msra.mxu0 0.0
        %2849 = vmatpush.xpose.msra.mxu0 0.0
        %2850 = vmatpush.xpose.msra.mxu0 0.0
        %2851 = vmatpush.xpose.msra.mxu0 0.0
        %2852 = vmatpush.xpose.msra.mxu0 0.0
        %2853 = vmatpush.xpose.msra.mxu0 %v2837
        %2854 = vmatpush.xpose.msra.mxu0 %v2834
        %2855 = vmatmul.f32.gmra.mxu0 %v2828
        %v2856 = vpop.f32.mrf.mxu0
        %v2857 = vadd.f32 0.0, %v2856
        %2858 = vmatmul.f32.gmra.mxu0 %v2831
        %v2859 = vpop.f32.mrf.mxu0
        %v2860 = vadd.f32 0.0, %v2859
        %2861 = vdwg.mxu0
        %v2863 = vsel %vm448, %v2496, 0
        %v2866 = vsel %vm448, %v2499, 0
        %v2869 = vsel %vm448, %v2588, 0
        %v2872 = vsel %vm448, %v2591, 0
        %2874 = vmatpush.xpose.msra.mxu0 0.0
        %2875 = vmatpush.xpose.msra.mxu0 0.0
        %2876 = vmatpush.xpose.msra.mxu0 0.0
        %2877 = vmatpush.xpose.msra.mxu0 0.0
        %2878 = vmatpush.xpose.msra.mxu0 0.0
        %2879 = vmatpush.xpose.msra.mxu0 0.0
        %2880 = vmatpush.xpose.msra.mxu0 0.0
        %2881 = vmatpush.xpose.msra.mxu0 0.0
        %2882 = vmatpush.xpose.msra.mxu0 0.0
        %2883 = vmatpush.xpose.msra.mxu0 0.0
        %2884 = vmatpush.xpose.msra.mxu0 0.0
        %2885 = vmatpush.xpose.msra.mxu0 0.0
        %2886 = vmatpush.xpose.msra.mxu0 0.0
        %2887 = vmatpush.xpose.msra.mxu0 0.0
        %2888 = vmatpush.xpose.msra.mxu0 %v2872
        %2889 = vmatpush.xpose.msra.mxu0 %v2869
        %2890 = vmatmul.f32.gmra.mxu0 %v2863
        %v2891 = vpop.f32.mrf.mxu0
        %v2892 = vadd.f32 0.0, %v2891
        %2893 = vmatmul.f32.gmra.mxu0 %v2866
        %v2894 = vpop.f32.mrf.mxu0
        %v2895 = vadd.f32 0.0, %v2894
        %2896 = vdwg.mxu0
        %v2898 = vsel %vm448, %v2502, 0
        %v2901 = vsel %vm448, %v2505, 0
        %v2904 = vsel %vm448, %v2594, 0
        %v2907 = vsel %vm448, %v2597, 0
        %2909 = vmatpush.xpose.msra.mxu0 0.0
        %2910 = vmatpush.xpose.msra.mxu0 0.0
        %2911 = vmatpush.xpose.msra.mxu0 0.0
        %2912 = vmatpush.xpose.msra.mxu0 0.0
        %2913 = vmatpush.xpose.msra.mxu0 0.0
        %2914 = vmatpush.xpose.msra.mxu0 0.0
        %2915 = vmatpush.xpose.msra.mxu0 0.0
        %2916 = vmatpush.xpose.msra.mxu0 0.0
        %2917 = vmatpush.xpose.msra.mxu0 0.0
        %2918 = vmatpush.xpose.msra.mxu0 0.0
        %2919 = vmatpush.xpose.msra.mxu0 0.0
        %2920 = vmatpush.xpose.msra.mxu0 0.0
        %2921 = vmatpush.xpose.msra.mxu0 0.0
        %2922 = vmatpush.xpose.msra.mxu0 0.0
        %2923 = vmatpush.xpose.msra.mxu0 %v2907
        %2924 = vmatpush.xpose.msra.mxu0 %v2904
        %2925 = vmatmul.f32.gmra.mxu0 %v2898
        %v2926 = vpop.f32.mrf.mxu0
        %v2927 = vadd.f32 0.0, %v2926
        %2928 = vmatmul.f32.gmra.mxu0 %v2901
        %v2929 = vpop.f32.mrf.mxu0
        %v2930 = vadd.f32 0.0, %v2929
        %2931 = vdwg.mxu0
        %v2933 = vsel %vm448, %v2508, 0
        %v2936 = vsel %vm448, %v2511, 0
        %v2939 = vsel %vm448, %v2600, 0
        %v2942 = vsel %vm448, %v2603, 0
        %2944 = vmatpush.xpose.msra.mxu0 0.0
        %2945 = vmatpush.xpose.msra.mxu0 0.0
        %2946 = vmatpush.xpose.msra.mxu0 0.0
        %2947 = vmatpush.xpose.msra.mxu0 0.0
        %2948 = vmatpush.xpose.msra.mxu0 0.0
        %2949 = vmatpush.xpose.msra.mxu0 0.0
        %2950 = vmatpush.xpose.msra.mxu0 0.0
        %2951 = vmatpush.xpose.msra.mxu0 0.0
        %2952 = vmatpush.xpose.msra.mxu0 0.0
        %2953 = vmatpush.xpose.msra.mxu0 0.0
        %2954 = vmatpush.xpose.msra.mxu0 0.0
        %2955 = vmatpush.xpose.msra.mxu0 0.0
        %2956 = vmatpush.xpose.msra.mxu0 0.0
        %2957 = vmatpush.xpose.msra.mxu0 0.0
        %2958 = vmatpush.xpose.msra.mxu0 %v2942
        %2959 = vmatpush.xpose.msra.mxu0 %v2939
        %2960 = vmatmul.f32.gmra.mxu0 %v2933
        %v2961 = vpop.f32.mrf.mxu0
        %v2962 = vadd.f32 0.0, %v2961
        %2963 = vmatmul.f32.gmra.mxu0 %v2936
        %v2964 = vpop.f32.mrf.mxu0
        %v2965 = vadd.f32 0.0, %v2964
        %2966 = vdwg.mxu0
        %v2968 = vsel %vm448, %v2514, 0
        %v2971 = vsel %vm448, %v2517, 0
        %v2974 = vsel %vm448, %v2606, 0
        %v2977 = vsel %vm448, %v2609, 0
        %2979 = vmatpush.xpose.msra.mxu0 0.0
        %2980 = vmatpush.xpose.msra.mxu0 0.0
        %2981 = vmatpush.xpose.msra.mxu0 0.0
        %2982 = vmatpush.xpose.msra.mxu0 0.0
        %2983 = vmatpush.xpose.msra.mxu0 0.0
        %2984 = vmatpush.xpose.msra.mxu0 0.0
        %2985 = vmatpush.xpose.msra.mxu0 0.0
        %2986 = vmatpush.xpose.msra.mxu0 0.0
        %2987 = vmatpush.xpose.msra.mxu0 0.0
        %2988 = vmatpush.xpose.msra.mxu0 0.0
        %2989 = vmatpush.xpose.msra.mxu0 0.0
        %2990 = vmatpush.xpose.msra.mxu0 0.0
        %2991 = vmatpush.xpose.msra.mxu0 0.0
        %2992 = vmatpush.xpose.msra.mxu0 0.0
        %2993 = vmatpush.xpose.msra.mxu0 %v2977
        %2994 = vmatpush.xpose.msra.mxu0 %v2974
        %2995 = vmatmul.f32.gmra.mxu0 %v2968
        %v2996 = vpop.f32.mrf.mxu0
        %v2997 = vadd.f32 0.0, %v2996
        %2998 = vmatmul.f32.gmra.mxu0 %v2971
        %v2999 = vpop.f32.mrf.mxu0
        %v3000 = vadd.f32 0.0, %v2999
        %3001 = vdwg.mxu0
        %v3003 = vsel %vm448, %v2520, 0
        %v3006 = vsel %vm448, %v2523, 0
        %v3009 = vsel %vm448, %v2612, 0
        %v3012 = vsel %vm448, %v2615, 0
        %3014 = vmatpush.xpose.msra.mxu0 0.0
        %3015 = vmatpush.xpose.msra.mxu0 0.0
        %3016 = vmatpush.xpose.msra.mxu0 0.0
        %3017 = vmatpush.xpose.msra.mxu0 0.0
        %3018 = vmatpush.xpose.msra.mxu0 0.0
        %3019 = vmatpush.xpose.msra.mxu0 0.0
        %3020 = vmatpush.xpose.msra.mxu0 0.0
        %3021 = vmatpush.xpose.msra.mxu0 0.0
        %3022 = vmatpush.xpose.msra.mxu0 0.0
        %3023 = vmatpush.xpose.msra.mxu0 0.0
        %3024 = vmatpush.xpose.msra.mxu0 0.0
        %3025 = vmatpush.xpose.msra.mxu0 0.0
        %3026 = vmatpush.xpose.msra.mxu0 0.0
        %3027 = vmatpush.xpose.msra.mxu0 0.0
        %3028 = vmatpush.xpose.msra.mxu0 %v3012
        %3029 = vmatpush.xpose.msra.mxu0 %v3009
        %3030 = vmatmul.f32.gmra.mxu0 %v3003
        %v3031 = vpop.f32.mrf.mxu0
        %v3032 = vadd.f32 0.0, %v3031
        %3033 = vmatmul.f32.gmra.mxu0 %v3006
        %v3034 = vpop.f32.mrf.mxu0
        %v3035 = vadd.f32 0.0, %v3034
        %3036 = vdwg.mxu0
        %v3037 = vsub.f32 0.0, %v2647
        %v3038 = vsub.f32 0.0, %v2650
        %v3039 = vsub.f32 0.0, %v2682
        %v3040 = vsub.f32 0.0, %v2685
        %v3041 = vsub.f32 0.0, %v2717
        %v3042 = vsub.f32 0.0, %v2720
        %v3043 = vsub.f32 0.0, %v2752
        %v3044 = vsub.f32 0.0, %v2755
        %v3045 = vsub.f32 0.0, %v2787
        %v3046 = vsub.f32 0.0, %v2790
        %v3047 = vsub.f32 0.0, %v2822
        %v3048 = vsub.f32 0.0, %v2825
        %v3049 = vsub.f32 0.0, %v2857
        %v3050 = vsub.f32 0.0, %v2860
        %v3051 = vsub.f32 0.0, %v2892
        %v3052 = vsub.f32 0.0, %v2895
        %v3053 = vsub.f32 0.0, %v2927
        %v3054 = vsub.f32 0.0, %v2930
        %v3055 = vsub.f32 0.0, %v2962
        %v3056 = vsub.f32 0.0, %v2965
        %v3057 = vsub.f32 0.0, %v2997
        %v3058 = vsub.f32 0.0, %v3000
        %v3059 = vsub.f32 0.0, %v3032
        %v3060 = vsub.f32 0.0, %v3035
        %v3061 = vmul.f32 %v3037, 1.442695
        %v3062 = vpow.pop %v3061
        %v3063 = vmul.f32 %v3038, 1.442695
        %v3064 = vpow.pop %v3063
        %v3065 = vmul.f32 %v3039, 1.442695
        %v3066 = vpow.pop %v3065
        %v3067 = vmul.f32 %v3040, 1.442695
        %v3068 = vpow.pop %v3067
        %v3069 = vmul.f32 %v3041, 1.442695
        %v3070 = vpow.pop %v3069
        %v3071 = vmul.f32 %v3042, 1.442695
        %v3072 = vpow.pop %v3071
        %v3073 = vmul.f32 %v3043, 1.442695
        %v3074 = vpow.pop %v3073
        %v3075 = vmul.f32 %v3044, 1.442695
        %v3076 = vpow.pop %v3075
        %v3077 = vmul.f32 %v3045, 1.442695
        %v3078 = vpow.pop %v3077
        %v3079 = vmul.f32 %v3046, 1.442695
        %v3080 = vpow.pop %v3079
        %v3081 = vmul.f32 %v3047, 1.442695
        %v3082 = vpow.pop %v3081
        %v3083 = vmul.f32 %v3048, 1.442695
        %v3084 = vpow.pop %v3083
        %v3085 = vmul.f32 %v3049, 1.442695
        %v3086 = vpow.pop %v3085
        %v3087 = vmul.f32 %v3050, 1.442695
        %v3088 = vpow.pop %v3087
        %v3089 = vmul.f32 %v3051, 1.442695
        %v3090 = vpow.pop %v3089
        %v3091 = vmul.f32 %v3052, 1.442695
        %v3092 = vpow.pop %v3091
        %v3093 = vmul.f32 %v3053, 1.442695
        %v3094 = vpow.pop %v3093
        %v3095 = vmul.f32 %v3054, 1.442695
        %v3096 = vpow.pop %v3095
        %v3097 = vmul.f32 %v3055, 1.442695
        %v3098 = vpow.pop %v3097
        %v3099 = vmul.f32 %v3056, 1.442695
        %v3100 = vpow.pop %v3099
        %v3101 = vmul.f32 %v3057, 1.442695
        %v3102 = vpow.pop %v3101
        %v3103 = vmul.f32 %v3058, 1.442695
        %v3104 = vpow.pop %v3103
        %v3105 = vmul.f32 %v3059, 1.442695
        %v3106 = vpow.pop %v3105
        %v3107 = vmul.f32 %v3060, 1.442695
        %v3108 = vpow.pop %v3107
        %v3109 = vadd.f32 %v3062, 1.0
        %v3110 = vadd.f32 %v3064, 1.0
        %v3111 = vadd.f32 %v3066, 1.0
        %v3112 = vadd.f32 %v3068, 1.0
        %v3113 = vadd.f32 %v3070, 1.0
        %v3114 = vadd.f32 %v3072, 1.0
        %v3115 = vadd.f32 %v3074, 1.0
        %v3116 = vadd.f32 %v3076, 1.0
        %v3117 = vadd.f32 %v3078, 1.0
        %v3118 = vadd.f32 %v3080, 1.0
        %v3119 = vadd.f32 %v3082, 1.0
        %v3120 = vadd.f32 %v3084, 1.0
        %v3121 = vadd.f32 %v3086, 1.0
        %v3122 = vadd.f32 %v3088, 1.0
        %v3123 = vadd.f32 %v3090, 1.0
        %v3124 = vadd.f32 %v3092, 1.0
        %v3125 = vadd.f32 %v3094, 1.0
        %v3126 = vadd.f32 %v3096, 1.0
        %v3127 = vadd.f32 %v3098, 1.0
        %v3128 = vadd.f32 %v3100, 1.0
        %v3129 = vadd.f32 %v3102, 1.0
        %v3130 = vadd.f32 %v3104, 1.0
        %v3131 = vadd.f32 %v3106, 1.0
        %v3132 = vadd.f32 %v3108, 1.0
        %v3133 = vrcp.pop %v3109
        %v3134 = vmul.f32 %v3109, %v3133
        %v3135 = vsub.f32 1.0, %v3134
        %v3136 = vmul.f32 %v3133, %v3135
        %v3137 = vadd.f32 %v3133, %v3136
        %vm3138 = vweird.f32 %v3109
        %vm3139 = vweird.f32 %v3133
        %vm3140 = vmor %vm3138, %vm3139
        %v3141 = vsel %vm3140, %v3133, %v3137
        %v3142 = vand.u32 2147483647, %v3109
        %vm3143 = vcmp.eq.f32.partialorder %v3142, 8.507059e+37
        %v3144 = vand.u32 %v3109, 2147483648
        %v3145 = vor.u32 1.1754944e-38, %v3144
        %v3146 = vsel %vm3143, %v3145, %v3141
        %v3147 = vmul.f32 1.0, %v3146
        %v3148 = vrcp.pop %v3110
        %v3149 = vmul.f32 %v3110, %v3148
        %v3150 = vsub.f32 1.0, %v3149
        %v3151 = vmul.f32 %v3148, %v3150
        %v3152 = vadd.f32 %v3148, %v3151
        %vm3153 = vweird.f32 %v3110
        %vm3154 = vweird.f32 %v3148
        %vm3155 = vmor %vm3153, %vm3154
        %v3156 = vsel %vm3155, %v3148, %v3152
        %v3157 = vand.u32 2147483647, %v3110
        %vm3158 = vcmp.eq.f32.partialorder %v3157, 8.507059e+37
        %v3159 = vand.u32 %v3110, 2147483648
        %v3160 = vor.u32 1.1754944e-38, %v3159
        %v3161 = vsel %vm3158, %v3160, %v3156
        %v3162 = vmul.f32 1.0, %v3161
        %v3163 = vrcp.pop %v3111
        %v3164 = vmul.f32 %v3111, %v3163
        %v3165 = vsub.f32 1.0, %v3164
        %v3166 = vmul.f32 %v3163, %v3165
        %v3167 = vadd.f32 %v3163, %v3166
        %vm3168 = vweird.f32 %v3111
        %vm3169 = vweird.f32 %v3163
        %vm3170 = vmor %vm3168, %vm3169
        %v3171 = vsel %vm3170, %v3163, %v3167
        %v3172 = vand.u32 2147483647, %v3111
        %vm3173 = vcmp.eq.f32.partialorder %v3172, 8.507059e+37
        %v3174 = vand.u32 %v3111, 2147483648
        %v3175 = vor.u32 1.1754944e-38, %v3174
        %v3176 = vsel %vm3173, %v3175, %v3171
        %v3177 = vmul.f32 1.0, %v3176
        %v3178 = vrcp.pop %v3112
        %v3179 = vmul.f32 %v3112, %v3178
        %v3180 = vsub.f32 1.0, %v3179
        %v3181 = vmul.f32 %v3178, %v3180
        %v3182 = vadd.f32 %v3178, %v3181
        %vm3183 = vweird.f32 %v3112
        %vm3184 = vweird.f32 %v3178
        %vm3185 = vmor %vm3183, %vm3184
        %v3186 = vsel %vm3185, %v3178, %v3182
        %v3187 = vand.u32 2147483647, %v3112
        %vm3188 = vcmp.eq.f32.partialorder %v3187, 8.507059e+37
        %v3189 = vand.u32 %v3112, 2147483648
        %v3190 = vor.u32 1.1754944e-38, %v3189
        %v3191 = vsel %vm3188, %v3190, %v3186
        %v3192 = vmul.f32 1.0, %v3191
        %v3193 = vrcp.pop %v3113
        %v3194 = vmul.f32 %v3113, %v3193
        %v3195 = vsub.f32 1.0, %v3194
        %v3196 = vmul.f32 %v3193, %v3195
        %v3197 = vadd.f32 %v3193, %v3196
        %vm3198 = vweird.f32 %v3113
        %vm3199 = vweird.f32 %v3193
        %vm3200 = vmor %vm3198, %vm3199
        %v3201 = vsel %vm3200, %v3193, %v3197
        %v3202 = vand.u32 2147483647, %v3113
        %vm3203 = vcmp.eq.f32.partialorder %v3202, 8.507059e+37
        %v3204 = vand.u32 %v3113, 2147483648
        %v3205 = vor.u32 1.1754944e-38, %v3204
        %v3206 = vsel %vm3203, %v3205, %v3201
        %v3207 = vmul.f32 1.0, %v3206
        %v3208 = vrcp.pop %v3114
        %v3209 = vmul.f32 %v3114, %v3208
        %v3210 = vsub.f32 1.0, %v3209
        %v3211 = vmul.f32 %v3208, %v3210
        %v3212 = vadd.f32 %v3208, %v3211
        %vm3213 = vweird.f32 %v3114
        %vm3214 = vweird.f32 %v3208
        %vm3215 = vmor %vm3213, %vm3214
        %v3216 = vsel %vm3215, %v3208, %v3212
        %v3217 = vand.u32 2147483647, %v3114
        %vm3218 = vcmp.eq.f32.partialorder %v3217, 8.507059e+37
        %v3219 = vand.u32 %v3114, 2147483648
        %v3220 = vor.u32 1.1754944e-38, %v3219
        %v3221 = vsel %vm3218, %v3220, %v3216
        %v3222 = vmul.f32 1.0, %v3221
        %v3223 = vrcp.pop %v3115
        %v3224 = vmul.f32 %v3115, %v3223
        %v3225 = vsub.f32 1.0, %v3224
        %v3226 = vmul.f32 %v3223, %v3225
        %v3227 = vadd.f32 %v3223, %v3226
        %vm3228 = vweird.f32 %v3115
        %vm3229 = vweird.f32 %v3223
        %vm3230 = vmor %vm3228, %vm3229
        %v3231 = vsel %vm3230, %v3223, %v3227
        %v3232 = vand.u32 2147483647, %v3115
        %vm3233 = vcmp.eq.f32.partialorder %v3232, 8.507059e+37
        %v3234 = vand.u32 %v3115, 2147483648
        %v3235 = vor.u32 1.1754944e-38, %v3234
        %v3236 = vsel %vm3233, %v3235, %v3231
        %v3237 = vmul.f32 1.0, %v3236
        %v3238 = vrcp.pop %v3116
        %v3239 = vmul.f32 %v3116, %v3238
        %v3240 = vsub.f32 1.0, %v3239
        %v3241 = vmul.f32 %v3238, %v3240
        %v3242 = vadd.f32 %v3238, %v3241
        %vm3243 = vweird.f32 %v3116
        %vm3244 = vweird.f32 %v3238
        %vm3245 = vmor %vm3243, %vm3244
        %v3246 = vsel %vm3245, %v3238, %v3242
        %v3247 = vand.u32 2147483647, %v3116
        %vm3248 = vcmp.eq.f32.partialorder %v3247, 8.507059e+37
        %v3249 = vand.u32 %v3116, 2147483648
        %v3250 = vor.u32 1.1754944e-38, %v3249
        %v3251 = vsel %vm3248, %v3250, %v3246
        %v3252 = vmul.f32 1.0, %v3251
        %v3253 = vrcp.pop %v3117
        %v3254 = vmul.f32 %v3117, %v3253
        %v3255 = vsub.f32 1.0, %v3254
        %v3256 = vmul.f32 %v3253, %v3255
        %v3257 = vadd.f32 %v3253, %v3256
        %vm3258 = vweird.f32 %v3117
        %vm3259 = vweird.f32 %v3253
        %vm3260 = vmor %vm3258, %vm3259
        %v3261 = vsel %vm3260, %v3253, %v3257
        %v3262 = vand.u32 2147483647, %v3117
        %vm3263 = vcmp.eq.f32.partialorder %v3262, 8.507059e+37
        %v3264 = vand.u32 %v3117, 2147483648
        %v3265 = vor.u32 1.1754944e-38, %v3264
        %v3266 = vsel %vm3263, %v3265, %v3261
        %v3267 = vmul.f32 1.0, %v3266
        %v3268 = vrcp.pop %v3118
        %v3269 = vmul.f32 %v3118, %v3268
        %v3270 = vsub.f32 1.0, %v3269
        %v3271 = vmul.f32 %v3268, %v3270
        %v3272 = vadd.f32 %v3268, %v3271
        %vm3273 = vweird.f32 %v3118
        %vm3274 = vweird.f32 %v3268
        %vm3275 = vmor %vm3273, %vm3274
        %v3276 = vsel %vm3275, %v3268, %v3272
        %v3277 = vand.u32 2147483647, %v3118
        %vm3278 = vcmp.eq.f32.partialorder %v3277, 8.507059e+37
        %v3279 = vand.u32 %v3118, 2147483648
        %v3280 = vor.u32 1.1754944e-38, %v3279
        %v3281 = vsel %vm3278, %v3280, %v3276
        %v3282 = vmul.f32 1.0, %v3281
        %v3283 = vrcp.pop %v3119
        %v3284 = vmul.f32 %v3119, %v3283
        %v3285 = vsub.f32 1.0, %v3284
        %v3286 = vmul.f32 %v3283, %v3285
        %v3287 = vadd.f32 %v3283, %v3286
        %vm3288 = vweird.f32 %v3119
        %vm3289 = vweird.f32 %v3283
        %vm3290 = vmor %vm3288, %vm3289
        %v3291 = vsel %vm3290, %v3283, %v3287
        %v3292 = vand.u32 2147483647, %v3119
        %vm3293 = vcmp.eq.f32.partialorder %v3292, 8.507059e+37
        %v3294 = vand.u32 %v3119, 2147483648
        %v3295 = vor.u32 1.1754944e-38, %v3294
        %v3296 = vsel %vm3293, %v3295, %v3291
        %v3297 = vmul.f32 1.0, %v3296
        %v3298 = vrcp.pop %v3120
        %v3299 = vmul.f32 %v3120, %v3298
        %v3300 = vsub.f32 1.0, %v3299
        %v3301 = vmul.f32 %v3298, %v3300
        %v3302 = vadd.f32 %v3298, %v3301
        %vm3303 = vweird.f32 %v3120
        %vm3304 = vweird.f32 %v3298
        %vm3305 = vmor %vm3303, %vm3304
        %v3306 = vsel %vm3305, %v3298, %v3302
        %v3307 = vand.u32 2147483647, %v3120
        %vm3308 = vcmp.eq.f32.partialorder %v3307, 8.507059e+37
        %v3309 = vand.u32 %v3120, 2147483648
        %v3310 = vor.u32 1.1754944e-38, %v3309
        %v3311 = vsel %vm3308, %v3310, %v3306
        %v3312 = vmul.f32 1.0, %v3311
        %v3313 = vrcp.pop %v3121
        %v3314 = vmul.f32 %v3121, %v3313
        %v3315 = vsub.f32 1.0, %v3314
        %v3316 = vmul.f32 %v3313, %v3315
        %v3317 = vadd.f32 %v3313, %v3316
        %vm3318 = vweird.f32 %v3121
        %vm3319 = vweird.f32 %v3313
        %vm3320 = vmor %vm3318, %vm3319
        %v3321 = vsel %vm3320, %v3313, %v3317
        %v3322 = vand.u32 2147483647, %v3121
        %vm3323 = vcmp.eq.f32.partialorder %v3322, 8.507059e+37
        %v3324 = vand.u32 %v3121, 2147483648
        %v3325 = vor.u32 1.1754944e-38, %v3324
        %v3326 = vsel %vm3323, %v3325, %v3321
        %v3327 = vmul.f32 1.0, %v3326
        %v3328 = vrcp.pop %v3122
        %v3329 = vmul.f32 %v3122, %v3328
        %v3330 = vsub.f32 1.0, %v3329
        %v3331 = vmul.f32 %v3328, %v3330
        %v3332 = vadd.f32 %v3328, %v3331
        %vm3333 = vweird.f32 %v3122
        %vm3334 = vweird.f32 %v3328
        %vm3335 = vmor %vm3333, %vm3334
        %v3336 = vsel %vm3335, %v3328, %v3332
        %v3337 = vand.u32 2147483647, %v3122
        %vm3338 = vcmp.eq.f32.partialorder %v3337, 8.507059e+37
        %v3339 = vand.u32 %v3122, 2147483648
        %v3340 = vor.u32 1.1754944e-38, %v3339
        %v3341 = vsel %vm3338, %v3340, %v3336
        %v3342 = vmul.f32 1.0, %v3341
        %v3343 = vrcp.pop %v3123
        %v3344 = vmul.f32 %v3123, %v3343
        %v3345 = vsub.f32 1.0, %v3344
        %v3346 = vmul.f32 %v3343, %v3345
        %v3347 = vadd.f32 %v3343, %v3346
        %vm3348 = vweird.f32 %v3123
        %vm3349 = vweird.f32 %v3343
        %vm3350 = vmor %vm3348, %vm3349
        %v3351 = vsel %vm3350, %v3343, %v3347
        %v3352 = vand.u32 2147483647, %v3123
        %vm3353 = vcmp.eq.f32.partialorder %v3352, 8.507059e+37
        %v3354 = vand.u32 %v3123, 2147483648
        %v3355 = vor.u32 1.1754944e-38, %v3354
        %v3356 = vsel %vm3353, %v3355, %v3351
        %v3357 = vmul.f32 1.0, %v3356
        %v3358 = vrcp.pop %v3124
        %v3359 = vmul.f32 %v3124, %v3358
        %v3360 = vsub.f32 1.0, %v3359
        %v3361 = vmul.f32 %v3358, %v3360
        %v3362 = vadd.f32 %v3358, %v3361
        %vm3363 = vweird.f32 %v3124
        %vm3364 = vweird.f32 %v3358
        %vm3365 = vmor %vm3363, %vm3364
        %v3366 = vsel %vm3365, %v3358, %v3362
        %v3367 = vand.u32 2147483647, %v3124
        %vm3368 = vcmp.eq.f32.partialorder %v3367, 8.507059e+37
        %v3369 = vand.u32 %v3124, 2147483648
        %v3370 = vor.u32 1.1754944e-38, %v3369
        %v3371 = vsel %vm3368, %v3370, %v3366
        %v3372 = vmul.f32 1.0, %v3371
        %v3373 = vrcp.pop %v3125
        %v3374 = vmul.f32 %v3125, %v3373
        %v3375 = vsub.f32 1.0, %v3374
        %v3376 = vmul.f32 %v3373, %v3375
        %v3377 = vadd.f32 %v3373, %v3376
        %vm3378 = vweird.f32 %v3125
        %vm3379 = vweird.f32 %v3373
        %vm3380 = vmor %vm3378, %vm3379
        %v3381 = vsel %vm3380, %v3373, %v3377
        %v3382 = vand.u32 2147483647, %v3125
        %vm3383 = vcmp.eq.f32.partialorder %v3382, 8.507059e+37
        %v3384 = vand.u32 %v3125, 2147483648
        %v3385 = vor.u32 1.1754944e-38, %v3384
        %v3386 = vsel %vm3383, %v3385, %v3381
        %v3387 = vmul.f32 1.0, %v3386
        %v3388 = vrcp.pop %v3126
        %v3389 = vmul.f32 %v3126, %v3388
        %v3390 = vsub.f32 1.0, %v3389
        %v3391 = vmul.f32 %v3388, %v3390
        %v3392 = vadd.f32 %v3388, %v3391
        %vm3393 = vweird.f32 %v3126
        %vm3394 = vweird.f32 %v3388
        %vm3395 = vmor %vm3393, %vm3394
        %v3396 = vsel %vm3395, %v3388, %v3392
        %v3397 = vand.u32 2147483647, %v3126
        %vm3398 = vcmp.eq.f32.partialorder %v3397, 8.507059e+37
        %v3399 = vand.u32 %v3126, 2147483648
        %v3400 = vor.u32 1.1754944e-38, %v3399
        %v3401 = vsel %vm3398, %v3400, %v3396
        %v3402 = vmul.f32 1.0, %v3401
        %v3403 = vrcp.pop %v3127
        %v3404 = vmul.f32 %v3127, %v3403
        %v3405 = vsub.f32 1.0, %v3404
        %v3406 = vmul.f32 %v3403, %v3405
        %v3407 = vadd.f32 %v3403, %v3406
        %vm3408 = vweird.f32 %v3127
        %vm3409 = vweird.f32 %v3403
        %vm3410 = vmor %vm3408, %vm3409
        %v3411 = vsel %vm3410, %v3403, %v3407
        %v3412 = vand.u32 2147483647, %v3127
        %vm3413 = vcmp.eq.f32.partialorder %v3412, 8.507059e+37
        %v3414 = vand.u32 %v3127, 2147483648
        %v3415 = vor.u32 1.1754944e-38, %v3414
        %v3416 = vsel %vm3413, %v3415, %v3411
        %v3417 = vmul.f32 1.0, %v3416
        %v3418 = vrcp.pop %v3128
        %v3419 = vmul.f32 %v3128, %v3418
        %v3420 = vsub.f32 1.0, %v3419
        %v3421 = vmul.f32 %v3418, %v3420
        %v3422 = vadd.f32 %v3418, %v3421
        %vm3423 = vweird.f32 %v3128
        %vm3424 = vweird.f32 %v3418
        %vm3425 = vmor %vm3423, %vm3424
        %v3426 = vsel %vm3425, %v3418, %v3422
        %v3427 = vand.u32 2147483647, %v3128
        %vm3428 = vcmp.eq.f32.partialorder %v3427, 8.507059e+37
        %v3429 = vand.u32 %v3128, 2147483648
        %v3430 = vor.u32 1.1754944e-38, %v3429
        %v3431 = vsel %vm3428, %v3430, %v3426
        %v3432 = vmul.f32 1.0, %v3431
        %v3433 = vrcp.pop %v3129
        %v3434 = vmul.f32 %v3129, %v3433
        %v3435 = vsub.f32 1.0, %v3434
        %v3436 = vmul.f32 %v3433, %v3435
        %v3437 = vadd.f32 %v3433, %v3436
        %vm3438 = vweird.f32 %v3129
        %vm3439 = vweird.f32 %v3433
        %vm3440 = vmor %vm3438, %vm3439
        %v3441 = vsel %vm3440, %v3433, %v3437
        %v3442 = vand.u32 2147483647, %v3129
        %vm3443 = vcmp.eq.f32.partialorder %v3442, 8.507059e+37
        %v3444 = vand.u32 %v3129, 2147483648
        %v3445 = vor.u32 1.1754944e-38, %v3444
        %v3446 = vsel %vm3443, %v3445, %v3441
        %v3447 = vmul.f32 1.0, %v3446
        %v3448 = vrcp.pop %v3130
        %v3449 = vmul.f32 %v3130, %v3448
        %v3450 = vsub.f32 1.0, %v3449
        %v3451 = vmul.f32 %v3448, %v3450
        %v3452 = vadd.f32 %v3448, %v3451
        %vm3453 = vweird.f32 %v3130
        %vm3454 = vweird.f32 %v3448
        %vm3455 = vmor %vm3453, %vm3454
        %v3456 = vsel %vm3455, %v3448, %v3452
        %v3457 = vand.u32 2147483647, %v3130
        %vm3458 = vcmp.eq.f32.partialorder %v3457, 8.507059e+37
        %v3459 = vand.u32 %v3130, 2147483648
        %v3460 = vor.u32 1.1754944e-38, %v3459
        %v3461 = vsel %vm3458, %v3460, %v3456
        %v3462 = vmul.f32 1.0, %v3461
        %v3463 = vrcp.pop %v3131
        %v3464 = vmul.f32 %v3131, %v3463
        %v3465 = vsub.f32 1.0, %v3464
        %v3466 = vmul.f32 %v3463, %v3465
        %v3467 = vadd.f32 %v3463, %v3466
        %vm3468 = vweird.f32 %v3131
        %vm3469 = vweird.f32 %v3463
        %vm3470 = vmor %vm3468, %vm3469
        %v3471 = vsel %vm3470, %v3463, %v3467
        %v3472 = vand.u32 2147483647, %v3131
        %vm3473 = vcmp.eq.f32.partialorder %v3472, 8.507059e+37
        %v3474 = vand.u32 %v3131, 2147483648
        %v3475 = vor.u32 1.1754944e-38, %v3474
        %v3476 = vsel %vm3473, %v3475, %v3471
        %v3477 = vmul.f32 1.0, %v3476
        %v3478 = vrcp.pop %v3132
        %v3479 = vmul.f32 %v3132, %v3478
        %v3480 = vsub.f32 1.0, %v3479
        %v3481 = vmul.f32 %v3478, %v3480
        %v3482 = vadd.f32 %v3478, %v3481
        %vm3483 = vweird.f32 %v3132
        %vm3484 = vweird.f32 %v3478
        %vm3485 = vmor %vm3483, %vm3484
        %v3486 = vsel %vm3485, %v3478, %v3482
        %v3487 = vand.u32 2147483647, %v3132
        %vm3488 = vcmp.eq.f32.partialorder %v3487, 8.507059e+37
        %v3489 = vand.u32 %v3132, 2147483648
        %v3490 = vor.u32 1.1754944e-38, %v3489
        %v3491 = vsel %vm3488, %v3490, %v3486
        %v3492 = vmul.f32 1.0, %v3491
        %v3493 = vadd.f32 %v2409, %v3147
        %v3494 = vadd.f32 %v2410, %v3162
        %v3495 = vadd.f32 %v2411, %v3177
        %v3496 = vadd.f32 %v2412, %v3192
        %v3497 = vadd.f32 %v2413, %v3207
        %v3498 = vadd.f32 %v2414, %v3222
        %v3499 = vadd.f32 %v2415, %v3237
        %v3500 = vadd.f32 %v2416, %v3252
        %v3501 = vadd.f32 %v2417, %v3267
        %v3502 = vadd.f32 %v2418, %v3282
        %v3503 = vadd.f32 %v2419, %v3297
        %v3504 = vadd.f32 %v2420, %v3312
        %v3505 = vadd.f32 %v2421, %v3327
        %v3506 = vadd.f32 %v2422, %v3342
        %v3507 = vadd.f32 %v2423, %v3357
        %v3508 = vadd.f32 %v2424, %v3372
        %v3509 = vadd.f32 %v2425, %v3387
        %v3510 = vadd.f32 %v2426, %v3402
        %v3511 = vadd.f32 %v2427, %v3417
        %v3512 = vadd.f32 %v2428, %v3432
        %v3513 = vadd.f32 %v2429, %v3447
        %v3514 = vadd.f32 %v2430, %v3462
        %v3515 = vadd.f32 %v2431, %v3477
        %v3516 = vadd.f32 %v2432, %v3492
        %s3517 = scalar_lea.vmem %s1, 48
        %v3518 = vld [vmem:[%s3517] sm:$0xff]
        %v3519 = vld [vmem:[%s3517 + $0x8] sm:$0xff]
        %3520 = vmatpush.msra.mxu0 0.0
        %3521 = vmatpush.msra.mxu0 0.0
        %3522 = vmatpush.msra.mxu0 0.0
        %3523 = vmatpush.msra.mxu0 0.0
        %3524 = vmatpush.msra.mxu0 0.0
        %3525 = vmatpush.msra.mxu0 0.0
        %3526 = vmatpush.msra.mxu0 0.0
        %3527 = vmatpush.msra.mxu0 0.0
        %3528 = vmatpush.msra.mxu0 0.0
        %3529 = vmatpush.msra.mxu0 0.0
        %3530 = vmatpush.msra.mxu0 0.0
        %3531 = vmatpush.msra.mxu0 0.0
        %3532 = vmatpush.msra.mxu0 0.0
        %3533 = vmatpush.msra.mxu0 0.0
        %3534 = vmatpush.msra.mxu0 %v3519
        %3535 = vmatpush.msra.mxu0 %v3518
        %3536 = vmatmul.f32.gmra.mxu0 %v197
        %v3537 = vpop.f32.mrf.mxu0
        %v3538 = vadd.f32 0.0, %v3537
        %3539 = vmatmul.f32.gmra.mxu0 %v200
        %v3540 = vpop.f32.mrf.mxu0
        %v3541 = vadd.f32 0.0, %v3540
        %3542 = vmatmul.f32.gmra.mxu0 %v203
        %v3543 = vpop.f32.mrf.mxu0
        %v3544 = vadd.f32 0.0, %v3543
        %3545 = vmatmul.f32.gmra.mxu0 %v206
        %v3546 = vpop.f32.mrf.mxu0
        %v3547 = vadd.f32 0.0, %v3546
        %3548 = vmatmul.f32.gmra.mxu0 %v209
        %v3549 = vpop.f32.mrf.mxu0
        %v3550 = vadd.f32 0.0, %v3549
        %3551 = vmatmul.f32.gmra.mxu0 %v212
        %v3552 = vpop.f32.mrf.mxu0
        %v3553 = vadd.f32 0.0, %v3552
        %3554 = vmatmul.f32.gmra.mxu0 %v215
        %v3555 = vpop.f32.mrf.mxu0
        %v3556 = vadd.f32 0.0, %v3555
        %3557 = vmatmul.f32.gmra.mxu0 %v218
        %v3558 = vpop.f32.mrf.mxu0
        %v3559 = vadd.f32 0.0, %v3558
        %3560 = vmatmul.f32.gmra.mxu0 %v221
        %v3561 = vpop.f32.mrf.mxu0
        %v3562 = vadd.f32 0.0, %v3561
        %3563 = vmatmul.f32.gmra.mxu0 %v224
        %v3564 = vpop.f32.mrf.mxu0
        %v3565 = vadd.f32 0.0, %v3564
        %3566 = vmatmul.f32.gmra.mxu0 %v227
        %v3567 = vpop.f32.mrf.mxu0
        %v3568 = vadd.f32 0.0, %v3567
        %3569 = vmatmul.f32.gmra.mxu0 %v230
        %v3570 = vpop.f32.mrf.mxu0
        %v3571 = vadd.f32 0.0, %v3570
        %3572 = vmatmul.f32.gmra.mxu0 %v233
        %v3573 = vpop.f32.mrf.mxu0
        %v3574 = vadd.f32 0.0, %v3573
        %3575 = vmatmul.f32.gmra.mxu0 %v236
        %v3576 = vpop.f32.mrf.mxu0
        %v3577 = vadd.f32 0.0, %v3576
        %3578 = vmatmul.f32.gmra.mxu0 %v239
        %v3579 = vpop.f32.mrf.mxu0
        %v3580 = vadd.f32 0.0, %v3579
        %3581 = vmatmul.f32.gmra.mxu0 %v242
        %v3582 = vpop.f32.mrf.mxu0
        %v3583 = vadd.f32 0.0, %v3582
        %3584 = vmatmul.f32.gmra.mxu0 %v245
        %v3585 = vpop.f32.mrf.mxu0
        %v3586 = vadd.f32 0.0, %v3585
        %3587 = vmatmul.f32.gmra.mxu0 %v248
        %v3588 = vpop.f32.mrf.mxu0
        %v3589 = vadd.f32 0.0, %v3588
        %3590 = vmatmul.f32.gmra.mxu0 %v251
        %v3591 = vpop.f32.mrf.mxu0
        %v3592 = vadd.f32 0.0, %v3591
        %3593 = vmatmul.f32.gmra.mxu0 %v254
        %v3594 = vpop.f32.mrf.mxu0
        %v3595 = vadd.f32 0.0, %v3594
        %3596 = vmatmul.f32.gmra.mxu0 %v257
        %v3597 = vpop.f32.mrf.mxu0
        %v3598 = vadd.f32 0.0, %v3597
        %3599 = vmatmul.f32.gmra.mxu0 %v260
        %v3600 = vpop.f32.mrf.mxu0
        %v3601 = vadd.f32 0.0, %v3600
        %3602 = vmatmul.f32.gmra.mxu0 %v263
        %v3603 = vpop.f32.mrf.mxu0
        %v3604 = vadd.f32 0.0, %v3603
        %3605 = vmatmul.f32.gmra.mxu0 %v266
        %v3606 = vpop.f32.mrf.mxu0
        %v3607 = vadd.f32 0.0, %v3606
        %3608 = vdwg.mxu0
        %s3609 = scalar_lea.vmem %s2, 48
        %v3610 = vld [vmem:[%s3609] sm:$0xff]
        %v3611 = vld [vmem:[%s3609 + $0x8] sm:$0xff]
        %3612 = vmatpush.msra.mxu0 0.0
        %3613 = vmatpush.msra.mxu0 0.0
        %3614 = vmatpush.msra.mxu0 0.0
        %3615 = vmatpush.msra.mxu0 0.0
        %3616 = vmatpush.msra.mxu0 0.0
        %3617 = vmatpush.msra.mxu0 0.0
        %3618 = vmatpush.msra.mxu0 0.0
        %3619 = vmatpush.msra.mxu0 0.0
        %3620 = vmatpush.msra.mxu0 0.0
        %3621 = vmatpush.msra.mxu0 0.0
        %3622 = vmatpush.msra.mxu0 0.0
        %3623 = vmatpush.msra.mxu0 0.0
        %3624 = vmatpush.msra.mxu0 0.0
        %3625 = vmatpush.msra.mxu0 0.0
        %3626 = vmatpush.msra.mxu0 %v3611
        %3627 = vmatpush.msra.mxu0 %v3610
        %3628 = vmatmul.f32.gmra.mxu0 %v197
        %v3629 = vpop.f32.mrf.mxu0
        %v3630 = vadd.f32 0.0, %v3629
        %3631 = vmatmul.f32.gmra.mxu0 %v200
        %v3632 = vpop.f32.mrf.mxu0
        %v3633 = vadd.f32 0.0, %v3632
        %3634 = vmatmul.f32.gmra.mxu0 %v203
        %v3635 = vpop.f32.mrf.mxu0
        %v3636 = vadd.f32 0.0, %v3635
        %3637 = vmatmul.f32.gmra.mxu0 %v206
        %v3638 = vpop.f32.mrf.mxu0
        %v3639 = vadd.f32 0.0, %v3638
        %3640 = vmatmul.f32.gmra.mxu0 %v209
        %v3641 = vpop.f32.mrf.mxu0
        %v3642 = vadd.f32 0.0, %v3641
        %3643 = vmatmul.f32.gmra.mxu0 %v212
        %v3644 = vpop.f32.mrf.mxu0
        %v3645 = vadd.f32 0.0, %v3644
        %3646 = vmatmul.f32.gmra.mxu0 %v215
        %v3647 = vpop.f32.mrf.mxu0
        %v3648 = vadd.f32 0.0, %v3647
        %3649 = vmatmul.f32.gmra.mxu0 %v218
        %v3650 = vpop.f32.mrf.mxu0
        %v3651 = vadd.f32 0.0, %v3650
        %3652 = vmatmul.f32.gmra.mxu0 %v221
        %v3653 = vpop.f32.mrf.mxu0
        %v3654 = vadd.f32 0.0, %v3653
        %3655 = vmatmul.f32.gmra.mxu0 %v224
        %v3656 = vpop.f32.mrf.mxu0
        %v3657 = vadd.f32 0.0, %v3656
        %3658 = vmatmul.f32.gmra.mxu0 %v227
        %v3659 = vpop.f32.mrf.mxu0
        %v3660 = vadd.f32 0.0, %v3659
        %3661 = vmatmul.f32.gmra.mxu0 %v230
        %v3662 = vpop.f32.mrf.mxu0
        %v3663 = vadd.f32 0.0, %v3662
        %3664 = vmatmul.f32.gmra.mxu0 %v233
        %v3665 = vpop.f32.mrf.mxu0
        %v3666 = vadd.f32 0.0, %v3665
        %3667 = vmatmul.f32.gmra.mxu0 %v236
        %v3668 = vpop.f32.mrf.mxu0
        %v3669 = vadd.f32 0.0, %v3668
        %3670 = vmatmul.f32.gmra.mxu0 %v239
        %v3671 = vpop.f32.mrf.mxu0
        %v3672 = vadd.f32 0.0, %v3671
        %3673 = vmatmul.f32.gmra.mxu0 %v242
        %v3674 = vpop.f32.mrf.mxu0
        %v3675 = vadd.f32 0.0, %v3674
        %3676 = vmatmul.f32.gmra.mxu0 %v245
        %v3677 = vpop.f32.mrf.mxu0
        %v3678 = vadd.f32 0.0, %v3677
        %3679 = vmatmul.f32.gmra.mxu0 %v248
        %v3680 = vpop.f32.mrf.mxu0
        %v3681 = vadd.f32 0.0, %v3680
        %3682 = vmatmul.f32.gmra.mxu0 %v251
        %v3683 = vpop.f32.mrf.mxu0
        %v3684 = vadd.f32 0.0, %v3683
        %3685 = vmatmul.f32.gmra.mxu0 %v254
        %v3686 = vpop.f32.mrf.mxu0
        %v3687 = vadd.f32 0.0, %v3686
        %3688 = vmatmul.f32.gmra.mxu0 %v257
        %v3689 = vpop.f32.mrf.mxu0
        %v3690 = vadd.f32 0.0, %v3689
        %3691 = vmatmul.f32.gmra.mxu0 %v260
        %v3692 = vpop.f32.mrf.mxu0
        %v3693 = vadd.f32 0.0, %v3692
        %3694 = vmatmul.f32.gmra.mxu0 %v263
        %v3695 = vpop.f32.mrf.mxu0
        %v3696 = vadd.f32 0.0, %v3695
        %3697 = vmatmul.f32.gmra.mxu0 %v266
        %v3698 = vpop.f32.mrf.mxu0
        %v3699 = vadd.f32 0.0, %v3698
        %3700 = vdwg.mxu0
        %v3702 = vsel %vm448, %v3538, 0
        %v3705 = vsel %vm448, %v3541, 0
        %v3708 = vsel %vm448, %v3630, 0
        %v3711 = vsel %vm448, %v3633, 0
        %3713 = vmatpush.xpose.msra.mxu0 0.0
        %3714 = vmatpush.xpose.msra.mxu0 0.0
        %3715 = vmatpush.xpose.msra.mxu0 0.0
        %3716 = vmatpush.xpose.msra.mxu0 0.0
        %3717 = vmatpush.xpose.msra.mxu0 0.0
        %3718 = vmatpush.xpose.msra.mxu0 0.0
        %3719 = vmatpush.xpose.msra.mxu0 0.0
        %3720 = vmatpush.xpose.msra.mxu0 0.0
        %3721 = vmatpush.xpose.msra.mxu0 0.0
        %3722 = vmatpush.xpose.msra.mxu0 0.0
        %3723 = vmatpush.xpose.msra.mxu0 0.0
        %3724 = vmatpush.xpose.msra.mxu0 0.0
        %3725 = vmatpush.xpose.msra.mxu0 0.0
        %3726 = vmatpush.xpose.msra.mxu0 0.0
        %3727 = vmatpush.xpose.msra.mxu0 %v3711
        %3728 = vmatpush.xpose.msra.mxu0 %v3708
        %3729 = vmatmul.f32.gmra.mxu0 %v3702
        %v3730 = vpop.f32.mrf.mxu0
        %v3731 = vadd.f32 0.0, %v3730
        %3732 = vmatmul.f32.gmra.mxu0 %v3705
        %v3733 = vpop.f32.mrf.mxu0
        %v3734 = vadd.f32 0.0, %v3733
        %3735 = vdwg.mxu0
        %v3737 = vsel %vm448, %v3544, 0
        %v3740 = vsel %vm448, %v3547, 0
        %v3743 = vsel %vm448, %v3636, 0
        %v3746 = vsel %vm448, %v3639, 0
        %3748 = vmatpush.xpose.msra.mxu0 0.0
        %3749 = vmatpush.xpose.msra.mxu0 0.0
        %3750 = vmatpush.xpose.msra.mxu0 0.0
        %3751 = vmatpush.xpose.msra.mxu0 0.0
        %3752 = vmatpush.xpose.msra.mxu0 0.0
        %3753 = vmatpush.xpose.msra.mxu0 0.0
        %3754 = vmatpush.xpose.msra.mxu0 0.0
        %3755 = vmatpush.xpose.msra.mxu0 0.0
        %3756 = vmatpush.xpose.msra.mxu0 0.0
        %3757 = vmatpush.xpose.msra.mxu0 0.0
        %3758 = vmatpush.xpose.msra.mxu0 0.0
        %3759 = vmatpush.xpose.msra.mxu0 0.0
        %3760 = vmatpush.xpose.msra.mxu0 0.0
        %3761 = vmatpush.xpose.msra.mxu0 0.0
        %3762 = vmatpush.xpose.msra.mxu0 %v3746
        %3763 = vmatpush.xpose.msra.mxu0 %v3743
        %3764 = vmatmul.f32.gmra.mxu0 %v3737
        %v3765 = vpop.f32.mrf.mxu0
        %v3766 = vadd.f32 0.0, %v3765
        %3767 = vmatmul.f32.gmra.mxu0 %v3740
        %v3768 = vpop.f32.mrf.mxu0
        %v3769 = vadd.f32 0.0, %v3768
        %3770 = vdwg.mxu0
        %v3772 = vsel %vm448, %v3550, 0
        %v3775 = vsel %vm448, %v3553, 0
        %v3778 = vsel %vm448, %v3642, 0
        %v3781 = vsel %vm448, %v3645, 0
        %3783 = vmatpush.xpose.msra.mxu0 0.0
        %3784 = vmatpush.xpose.msra.mxu0 0.0
        %3785 = vmatpush.xpose.msra.mxu0 0.0
        %3786 = vmatpush.xpose.msra.mxu0 0.0
        %3787 = vmatpush.xpose.msra.mxu0 0.0
        %3788 = vmatpush.xpose.msra.mxu0 0.0
        %3789 = vmatpush.xpose.msra.mxu0 0.0
        %3790 = vmatpush.xpose.msra.mxu0 0.0
        %3791 = vmatpush.xpose.msra.mxu0 0.0
        %3792 = vmatpush.xpose.msra.mxu0 0.0
        %3793 = vmatpush.xpose.msra.mxu0 0.0
        %3794 = vmatpush.xpose.msra.mxu0 0.0
        %3795 = vmatpush.xpose.msra.mxu0 0.0
        %3796 = vmatpush.xpose.msra.mxu0 0.0
        %3797 = vmatpush.xpose.msra.mxu0 %v3781
        %3798 = vmatpush.xpose.msra.mxu0 %v3778
        %3799 = vmatmul.f32.gmra.mxu0 %v3772
        %v3800 = vpop.f32.mrf.mxu0
        %v3801 = vadd.f32 0.0, %v3800
        %3802 = vmatmul.f32.gmra.mxu0 %v3775
        %v3803 = vpop.f32.mrf.mxu0
        %v3804 = vadd.f32 0.0, %v3803
        %3805 = vdwg.mxu0
        %v3807 = vsel %vm448, %v3556, 0
        %v3810 = vsel %vm448, %v3559, 0
        %v3813 = vsel %vm448, %v3648, 0
        %v3816 = vsel %vm448, %v3651, 0
        %3818 = vmatpush.xpose.msra.mxu0 0.0
        %3819 = vmatpush.xpose.msra.mxu0 0.0
        %3820 = vmatpush.xpose.msra.mxu0 0.0
        %3821 = vmatpush.xpose.msra.mxu0 0.0
        %3822 = vmatpush.xpose.msra.mxu0 0.0
        %3823 = vmatpush.xpose.msra.mxu0 0.0
        %3824 = vmatpush.xpose.msra.mxu0 0.0
        %3825 = vmatpush.xpose.msra.mxu0 0.0
        %3826 = vmatpush.xpose.msra.mxu0 0.0
        %3827 = vmatpush.xpose.msra.mxu0 0.0
        %3828 = vmatpush.xpose.msra.mxu0 0.0
        %3829 = vmatpush.xpose.msra.mxu0 0.0
        %3830 = vmatpush.xpose.msra.mxu0 0.0
        %3831 = vmatpush.xpose.msra.mxu0 0.0
        %3832 = vmatpush.xpose.msra.mxu0 %v3816
        %3833 = vmatpush.xpose.msra.mxu0 %v3813
        %3834 = vmatmul.f32.gmra.mxu0 %v3807
        %v3835 = vpop.f32.mrf.mxu0
        %v3836 = vadd.f32 0.0, %v3835
        %3837 = vmatmul.f32.gmra.mxu0 %v3810
        %v3838 = vpop.f32.mrf.mxu0
        %v3839 = vadd.f32 0.0, %v3838
        %3840 = vdwg.mxu0
        %v3842 = vsel %vm448, %v3562, 0
        %v3845 = vsel %vm448, %v3565, 0
        %v3848 = vsel %vm448, %v3654, 0
        %v3851 = vsel %vm448, %v3657, 0
        %3853 = vmatpush.xpose.msra.mxu0 0.0
        %3854 = vmatpush.xpose.msra.mxu0 0.0
        %3855 = vmatpush.xpose.msra.mxu0 0.0
        %3856 = vmatpush.xpose.msra.mxu0 0.0
        %3857 = vmatpush.xpose.msra.mxu0 0.0
        %3858 = vmatpush.xpose.msra.mxu0 0.0
        %3859 = vmatpush.xpose.msra.mxu0 0.0
        %3860 = vmatpush.xpose.msra.mxu0 0.0
        %3861 = vmatpush.xpose.msra.mxu0 0.0
        %3862 = vmatpush.xpose.msra.mxu0 0.0
        %3863 = vmatpush.xpose.msra.mxu0 0.0
        %3864 = vmatpush.xpose.msra.mxu0 0.0
        %3865 = vmatpush.xpose.msra.mxu0 0.0
        %3866 = vmatpush.xpose.msra.mxu0 0.0
        %3867 = vmatpush.xpose.msra.mxu0 %v3851
        %3868 = vmatpush.xpose.msra.mxu0 %v3848
        %3869 = vmatmul.f32.gmra.mxu0 %v3842
        %v3870 = vpop.f32.mrf.mxu0
        %v3871 = vadd.f32 0.0, %v3870
        %3872 = vmatmul.f32.gmra.mxu0 %v3845
        %v3873 = vpop.f32.mrf.mxu0
        %v3874 = vadd.f32 0.0, %v3873
        %3875 = vdwg.mxu0
        %v3877 = vsel %vm448, %v3568, 0
        %v3880 = vsel %vm448, %v3571, 0
        %v3883 = vsel %vm448, %v3660, 0
        %v3886 = vsel %vm448, %v3663, 0
        %3888 = vmatpush.xpose.msra.mxu0 0.0
        %3889 = vmatpush.xpose.msra.mxu0 0.0
        %3890 = vmatpush.xpose.msra.mxu0 0.0
        %3891 = vmatpush.xpose.msra.mxu0 0.0
        %3892 = vmatpush.xpose.msra.mxu0 0.0
        %3893 = vmatpush.xpose.msra.mxu0 0.0
        %3894 = vmatpush.xpose.msra.mxu0 0.0
        %3895 = vmatpush.xpose.msra.mxu0 0.0
        %3896 = vmatpush.xpose.msra.mxu0 0.0
        %3897 = vmatpush.xpose.msra.mxu0 0.0
        %3898 = vmatpush.xpose.msra.mxu0 0.0
        %3899 = vmatpush.xpose.msra.mxu0 0.0
        %3900 = vmatpush.xpose.msra.mxu0 0.0
        %3901 = vmatpush.xpose.msra.mxu0 0.0
        %3902 = vmatpush.xpose.msra.mxu0 %v3886
        %3903 = vmatpush.xpose.msra.mxu0 %v3883
        %3904 = vmatmul.f32.gmra.mxu0 %v3877
        %v3905 = vpop.f32.mrf.mxu0
        %v3906 = vadd.f32 0.0, %v3905
        %3907 = vmatmul.f32.gmra.mxu0 %v3880
        %v3908 = vpop.f32.mrf.mxu0
        %v3909 = vadd.f32 0.0, %v3908
        %3910 = vdwg.mxu0
        %v3912 = vsel %vm448, %v3574, 0
        %v3915 = vsel %vm448, %v3577, 0
        %v3918 = vsel %vm448, %v3666, 0
        %v3921 = vsel %vm448, %v3669, 0
        %3923 = vmatpush.xpose.msra.mxu0 0.0
        %3924 = vmatpush.xpose.msra.mxu0 0.0
        %3925 = vmatpush.xpose.msra.mxu0 0.0
        %3926 = vmatpush.xpose.msra.mxu0 0.0
        %3927 = vmatpush.xpose.msra.mxu0 0.0
        %3928 = vmatpush.xpose.msra.mxu0 0.0
        %3929 = vmatpush.xpose.msra.mxu0 0.0
        %3930 = vmatpush.xpose.msra.mxu0 0.0
        %3931 = vmatpush.xpose.msra.mxu0 0.0
        %3932 = vmatpush.xpose.msra.mxu0 0.0
        %3933 = vmatpush.xpose.msra.mxu0 0.0
        %3934 = vmatpush.xpose.msra.mxu0 0.0
        %3935 = vmatpush.xpose.msra.mxu0 0.0
        %3936 = vmatpush.xpose.msra.mxu0 0.0
        %3937 = vmatpush.xpose.msra.mxu0 %v3921
        %3938 = vmatpush.xpose.msra.mxu0 %v3918
        %3939 = vmatmul.f32.gmra.mxu0 %v3912
        %v3940 = vpop.f32.mrf.mxu0
        %v3941 = vadd.f32 0.0, %v3940
        %3942 = vmatmul.f32.gmra.mxu0 %v3915
        %v3943 = vpop.f32.mrf.mxu0
        %v3944 = vadd.f32 0.0, %v3943
        %3945 = vdwg.mxu0
        %v3947 = vsel %vm448, %v3580, 0
        %v3950 = vsel %vm448, %v3583, 0
        %v3953 = vsel %vm448, %v3672, 0
        %v3956 = vsel %vm448, %v3675, 0
        %3958 = vmatpush.xpose.msra.mxu0 0.0
        %3959 = vmatpush.xpose.msra.mxu0 0.0
        %3960 = vmatpush.xpose.msra.mxu0 0.0
        %3961 = vmatpush.xpose.msra.mxu0 0.0
        %3962 = vmatpush.xpose.msra.mxu0 0.0
        %3963 = vmatpush.xpose.msra.mxu0 0.0
        %3964 = vmatpush.xpose.msra.mxu0 0.0
        %3965 = vmatpush.xpose.msra.mxu0 0.0
        %3966 = vmatpush.xpose.msra.mxu0 0.0
        %3967 = vmatpush.xpose.msra.mxu0 0.0
        %3968 = vmatpush.xpose.msra.mxu0 0.0
        %3969 = vmatpush.xpose.msra.mxu0 0.0
        %3970 = vmatpush.xpose.msra.mxu0 0.0
        %3971 = vmatpush.xpose.msra.mxu0 0.0
        %3972 = vmatpush.xpose.msra.mxu0 %v3956
        %3973 = vmatpush.xpose.msra.mxu0 %v3953
        %3974 = vmatmul.f32.gmra.mxu0 %v3947
        %v3975 = vpop.f32.mrf.mxu0
        %v3976 = vadd.f32 0.0, %v3975
        %3977 = vmatmul.f32.gmra.mxu0 %v3950
        %v3978 = vpop.f32.mrf.mxu0
        %v3979 = vadd.f32 0.0, %v3978
        %3980 = vdwg.mxu0
        %v3982 = vsel %vm448, %v3586, 0
        %v3985 = vsel %vm448, %v3589, 0
        %v3988 = vsel %vm448, %v3678, 0
        %v3991 = vsel %vm448, %v3681, 0
        %3993 = vmatpush.xpose.msra.mxu0 0.0
        %3994 = vmatpush.xpose.msra.mxu0 0.0
        %3995 = vmatpush.xpose.msra.mxu0 0.0
        %3996 = vmatpush.xpose.msra.mxu0 0.0
        %3997 = vmatpush.xpose.msra.mxu0 0.0
        %3998 = vmatpush.xpose.msra.mxu0 0.0
        %3999 = vmatpush.xpose.msra.mxu0 0.0
        %4000 = vmatpush.xpose.msra.mxu0 0.0
        %4001 = vmatpush.xpose.msra.mxu0 0.0
        %4002 = vmatpush.xpose.msra.mxu0 0.0
        %4003 = vmatpush.xpose.msra.mxu0 0.0
        %4004 = vmatpush.xpose.msra.mxu0 0.0
        %4005 = vmatpush.xpose.msra.mxu0 0.0
        %4006 = vmatpush.xpose.msra.mxu0 0.0
        %4007 = vmatpush.xpose.msra.mxu0 %v3991
        %4008 = vmatpush.xpose.msra.mxu0 %v3988
        %4009 = vmatmul.f32.gmra.mxu0 %v3982
        %v4010 = vpop.f32.mrf.mxu0
        %v4011 = vadd.f32 0.0, %v4010
        %4012 = vmatmul.f32.gmra.mxu0 %v3985
        %v4013 = vpop.f32.mrf.mxu0
        %v4014 = vadd.f32 0.0, %v4013
        %4015 = vdwg.mxu0
        %v4017 = vsel %vm448, %v3592, 0
        %v4020 = vsel %vm448, %v3595, 0
        %v4023 = vsel %vm448, %v3684, 0
        %v4026 = vsel %vm448, %v3687, 0
        %4028 = vmatpush.xpose.msra.mxu0 0.0
        %4029 = vmatpush.xpose.msra.mxu0 0.0
        %4030 = vmatpush.xpose.msra.mxu0 0.0
        %4031 = vmatpush.xpose.msra.mxu0 0.0
        %4032 = vmatpush.xpose.msra.mxu0 0.0
        %4033 = vmatpush.xpose.msra.mxu0 0.0
        %4034 = vmatpush.xpose.msra.mxu0 0.0
        %4035 = vmatpush.xpose.msra.mxu0 0.0
        %4036 = vmatpush.xpose.msra.mxu0 0.0
        %4037 = vmatpush.xpose.msra.mxu0 0.0
        %4038 = vmatpush.xpose.msra.mxu0 0.0
        %4039 = vmatpush.xpose.msra.mxu0 0.0
        %4040 = vmatpush.xpose.msra.mxu0 0.0
        %4041 = vmatpush.xpose.msra.mxu0 0.0
        %4042 = vmatpush.xpose.msra.mxu0 %v4026
        %4043 = vmatpush.xpose.msra.mxu0 %v4023
        %4044 = vmatmul.f32.gmra.mxu0 %v4017
        %v4045 = vpop.f32.mrf.mxu0
        %v4046 = vadd.f32 0.0, %v4045
        %4047 = vmatmul.f32.gmra.mxu0 %v4020
        %v4048 = vpop.f32.mrf.mxu0
        %v4049 = vadd.f32 0.0, %v4048
        %4050 = vdwg.mxu0
        %v4052 = vsel %vm448, %v3598, 0
        %v4055 = vsel %vm448, %v3601, 0
        %v4058 = vsel %vm448, %v3690, 0
        %v4061 = vsel %vm448, %v3693, 0
        %4063 = vmatpush.xpose.msra.mxu0 0.0
        %4064 = vmatpush.xpose.msra.mxu0 0.0
        %4065 = vmatpush.xpose.msra.mxu0 0.0
        %4066 = vmatpush.xpose.msra.mxu0 0.0
        %4067 = vmatpush.xpose.msra.mxu0 0.0
        %4068 = vmatpush.xpose.msra.mxu0 0.0
        %4069 = vmatpush.xpose.msra.mxu0 0.0
        %4070 = vmatpush.xpose.msra.mxu0 0.0
        %4071 = vmatpush.xpose.msra.mxu0 0.0
        %4072 = vmatpush.xpose.msra.mxu0 0.0
        %4073 = vmatpush.xpose.msra.mxu0 0.0
        %4074 = vmatpush.xpose.msra.mxu0 0.0
        %4075 = vmatpush.xpose.msra.mxu0 0.0
        %4076 = vmatpush.xpose.msra.mxu0 0.0
        %4077 = vmatpush.xpose.msra.mxu0 %v4061
        %4078 = vmatpush.xpose.msra.mxu0 %v4058
        %4079 = vmatmul.f32.gmra.mxu0 %v4052
        %v4080 = vpop.f32.mrf.mxu0
        %v4081 = vadd.f32 0.0, %v4080
        %4082 = vmatmul.f32.gmra.mxu0 %v4055
        %v4083 = vpop.f32.mrf.mxu0
        %v4084 = vadd.f32 0.0, %v4083
        %4085 = vdwg.mxu0
        %v4087 = vsel %vm448, %v3604, 0
        %v4090 = vsel %vm448, %v3607, 0
        %v4093 = vsel %vm448, %v3696, 0
        %v4096 = vsel %vm448, %v3699, 0
        %4098 = vmatpush.xpose.msra.mxu0 0.0
        %4099 = vmatpush.xpose.msra.mxu0 0.0
        %4100 = vmatpush.xpose.msra.mxu0 0.0
        %4101 = vmatpush.xpose.msra.mxu0 0.0
        %4102 = vmatpush.xpose.msra.mxu0 0.0
        %4103 = vmatpush.xpose.msra.mxu0 0.0
        %4104 = vmatpush.xpose.msra.mxu0 0.0
        %4105 = vmatpush.xpose.msra.mxu0 0.0
        %4106 = vmatpush.xpose.msra.mxu0 0.0
        %4107 = vmatpush.xpose.msra.mxu0 0.0
        %4108 = vmatpush.xpose.msra.mxu0 0.0
        %4109 = vmatpush.xpose.msra.mxu0 0.0
        %4110 = vmatpush.xpose.msra.mxu0 0.0
        %4111 = vmatpush.xpose.msra.mxu0 0.0
        %4112 = vmatpush.xpose.msra.mxu0 %v4096
        %4113 = vmatpush.xpose.msra.mxu0 %v4093
        %4114 = vmatmul.f32.gmra.mxu0 %v4087
        %v4115 = vpop.f32.mrf.mxu0
        %v4116 = vadd.f32 0.0, %v4115
        %4117 = vmatmul.f32.gmra.mxu0 %v4090
        %v4118 = vpop.f32.mrf.mxu0
        %v4119 = vadd.f32 0.0, %v4118
        %4120 = vdwg.mxu0
        %v4121 = vsub.f32 0.0, %v3731
        %v4122 = vsub.f32 0.0, %v3734
        %v4123 = vsub.f32 0.0, %v3766
        %v4124 = vsub.f32 0.0, %v3769
        %v4125 = vsub.f32 0.0, %v3801
        %v4126 = vsub.f32 0.0, %v3804
        %v4127 = vsub.f32 0.0, %v3836
        %v4128 = vsub.f32 0.0, %v3839
        %v4129 = vsub.f32 0.0, %v3871
        %v4130 = vsub.f32 0.0, %v3874
        %v4131 = vsub.f32 0.0, %v3906
        %v4132 = vsub.f32 0.0, %v3909
        %v4133 = vsub.f32 0.0, %v3941
        %v4134 = vsub.f32 0.0, %v3944
        %v4135 = vsub.f32 0.0, %v3976
        %v4136 = vsub.f32 0.0, %v3979
        %v4137 = vsub.f32 0.0, %v4011
        %v4138 = vsub.f32 0.0, %v4014
        %v4139 = vsub.f32 0.0, %v4046
        %v4140 = vsub.f32 0.0, %v4049
        %v4141 = vsub.f32 0.0, %v4081
        %v4142 = vsub.f32 0.0, %v4084
        %v4143 = vsub.f32 0.0, %v4116
        %v4144 = vsub.f32 0.0, %v4119
        %v4145 = vmul.f32 %v4121, 1.442695
        %v4146 = vpow.pop %v4145
        %v4147 = vmul.f32 %v4122, 1.442695
        %v4148 = vpow.pop %v4147
        %v4149 = vmul.f32 %v4123, 1.442695
        %v4150 = vpow.pop %v4149
        %v4151 = vmul.f32 %v4124, 1.442695
        %v4152 = vpow.pop %v4151
        %v4153 = vmul.f32 %v4125, 1.442695
        %v4154 = vpow.pop %v4153
        %v4155 = vmul.f32 %v4126, 1.442695
        %v4156 = vpow.pop %v4155
        %v4157 = vmul.f32 %v4127, 1.442695
        %v4158 = vpow.pop %v4157
        %v4159 = vmul.f32 %v4128, 1.442695
        %v4160 = vpow.pop %v4159
        %v4161 = vmul.f32 %v4129, 1.442695
        %v4162 = vpow.pop %v4161
        %v4163 = vmul.f32 %v4130, 1.442695
        %v4164 = vpow.pop %v4163
        %v4165 = vmul.f32 %v4131, 1.442695
        %v4166 = vpow.pop %v4165
        %v4167 = vmul.f32 %v4132, 1.442695
        %v4168 = vpow.pop %v4167
        %v4169 = vmul.f32 %v4133, 1.442695
        %v4170 = vpow.pop %v4169
        %v4171 = vmul.f32 %v4134, 1.442695
        %v4172 = vpow.pop %v4171
        %v4173 = vmul.f32 %v4135, 1.442695
        %v4174 = vpow.pop %v4173
        %v4175 = vmul.f32 %v4136, 1.442695
        %v4176 = vpow.pop %v4175
        %v4177 = vmul.f32 %v4137, 1.442695
        %v4178 = vpow.pop %v4177
        %v4179 = vmul.f32 %v4138, 1.442695
        %v4180 = vpow.pop %v4179
        %v4181 = vmul.f32 %v4139, 1.442695
        %v4182 = vpow.pop %v4181
        %v4183 = vmul.f32 %v4140, 1.442695
        %v4184 = vpow.pop %v4183
        %v4185 = vmul.f32 %v4141, 1.442695
        %v4186 = vpow.pop %v4185
        %v4187 = vmul.f32 %v4142, 1.442695
        %v4188 = vpow.pop %v4187
        %v4189 = vmul.f32 %v4143, 1.442695
        %v4190 = vpow.pop %v4189
        %v4191 = vmul.f32 %v4144, 1.442695
        %v4192 = vpow.pop %v4191
        %v4193 = vadd.f32 %v4146, 1.0
        %v4194 = vadd.f32 %v4148, 1.0
        %v4195 = vadd.f32 %v4150, 1.0
        %v4196 = vadd.f32 %v4152, 1.0
        %v4197 = vadd.f32 %v4154, 1.0
        %v4198 = vadd.f32 %v4156, 1.0
        %v4199 = vadd.f32 %v4158, 1.0
        %v4200 = vadd.f32 %v4160, 1.0
        %v4201 = vadd.f32 %v4162, 1.0
        %v4202 = vadd.f32 %v4164, 1.0
        %v4203 = vadd.f32 %v4166, 1.0
        %v4204 = vadd.f32 %v4168, 1.0
        %v4205 = vadd.f32 %v4170, 1.0
        %v4206 = vadd.f32 %v4172, 1.0
        %v4207 = vadd.f32 %v4174, 1.0
        %v4208 = vadd.f32 %v4176, 1.0
        %v4209 = vadd.f32 %v4178, 1.0
        %v4210 = vadd.f32 %v4180, 1.0
        %v4211 = vadd.f32 %v4182, 1.0
        %v4212 = vadd.f32 %v4184, 1.0
        %v4213 = vadd.f32 %v4186, 1.0
        %v4214 = vadd.f32 %v4188, 1.0
        %v4215 = vadd.f32 %v4190, 1.0
        %v4216 = vadd.f32 %v4192, 1.0
        %v4217 = vrcp.pop %v4193
        %v4218 = vmul.f32 %v4193, %v4217
        %v4219 = vsub.f32 1.0, %v4218
        %v4220 = vmul.f32 %v4217, %v4219
        %v4221 = vadd.f32 %v4217, %v4220
        %vm4222 = vweird.f32 %v4193
        %vm4223 = vweird.f32 %v4217
        %vm4224 = vmor %vm4222, %vm4223
        %v4225 = vsel %vm4224, %v4217, %v4221
        %v4226 = vand.u32 2147483647, %v4193
        %vm4227 = vcmp.eq.f32.partialorder %v4226, 8.507059e+37
        %v4228 = vand.u32 %v4193, 2147483648
        %v4229 = vor.u32 1.1754944e-38, %v4228
        %v4230 = vsel %vm4227, %v4229, %v4225
        %v4231 = vmul.f32 1.0, %v4230
        %v4232 = vrcp.pop %v4194
        %v4233 = vmul.f32 %v4194, %v4232
        %v4234 = vsub.f32 1.0, %v4233
        %v4235 = vmul.f32 %v4232, %v4234
        %v4236 = vadd.f32 %v4232, %v4235
        %vm4237 = vweird.f32 %v4194
        %vm4238 = vweird.f32 %v4232
        %vm4239 = vmor %vm4237, %vm4238
        %v4240 = vsel %vm4239, %v4232, %v4236
        %v4241 = vand.u32 2147483647, %v4194
        %vm4242 = vcmp.eq.f32.partialorder %v4241, 8.507059e+37
        %v4243 = vand.u32 %v4194, 2147483648
        %v4244 = vor.u32 1.1754944e-38, %v4243
        %v4245 = vsel %vm4242, %v4244, %v4240
        %v4246 = vmul.f32 1.0, %v4245
        %v4247 = vrcp.pop %v4195
        %v4248 = vmul.f32 %v4195, %v4247
        %v4249 = vsub.f32 1.0, %v4248
        %v4250 = vmul.f32 %v4247, %v4249
        %v4251 = vadd.f32 %v4247, %v4250
        %vm4252 = vweird.f32 %v4195
        %vm4253 = vweird.f32 %v4247
        %vm4254 = vmor %vm4252, %vm4253
        %v4255 = vsel %vm4254, %v4247, %v4251
        %v4256 = vand.u32 2147483647, %v4195
        %vm4257 = vcmp.eq.f32.partialorder %v4256, 8.507059e+37
        %v4258 = vand.u32 %v4195, 2147483648
        %v4259 = vor.u32 1.1754944e-38, %v4258
        %v4260 = vsel %vm4257, %v4259, %v4255
        %v4261 = vmul.f32 1.0, %v4260
        %v4262 = vrcp.pop %v4196
        %v4263 = vmul.f32 %v4196, %v4262
        %v4264 = vsub.f32 1.0, %v4263
        %v4265 = vmul.f32 %v4262, %v4264
        %v4266 = vadd.f32 %v4262, %v4265
        %vm4267 = vweird.f32 %v4196
        %vm4268 = vweird.f32 %v4262
        %vm4269 = vmor %vm4267, %vm4268
        %v4270 = vsel %vm4269, %v4262, %v4266
        %v4271 = vand.u32 2147483647, %v4196
        %vm4272 = vcmp.eq.f32.partialorder %v4271, 8.507059e+37
        %v4273 = vand.u32 %v4196, 2147483648
        %v4274 = vor.u32 1.1754944e-38, %v4273
        %v4275 = vsel %vm4272, %v4274, %v4270
        %v4276 = vmul.f32 1.0, %v4275
        %v4277 = vrcp.pop %v4197
        %v4278 = vmul.f32 %v4197, %v4277
        %v4279 = vsub.f32 1.0, %v4278
        %v4280 = vmul.f32 %v4277, %v4279
        %v4281 = vadd.f32 %v4277, %v4280
        %vm4282 = vweird.f32 %v4197
        %vm4283 = vweird.f32 %v4277
        %vm4284 = vmor %vm4282, %vm4283
        %v4285 = vsel %vm4284, %v4277, %v4281
        %v4286 = vand.u32 2147483647, %v4197
        %vm4287 = vcmp.eq.f32.partialorder %v4286, 8.507059e+37
        %v4288 = vand.u32 %v4197, 2147483648
        %v4289 = vor.u32 1.1754944e-38, %v4288
        %v4290 = vsel %vm4287, %v4289, %v4285
        %v4291 = vmul.f32 1.0, %v4290
        %v4292 = vrcp.pop %v4198
        %v4293 = vmul.f32 %v4198, %v4292
        %v4294 = vsub.f32 1.0, %v4293
        %v4295 = vmul.f32 %v4292, %v4294
        %v4296 = vadd.f32 %v4292, %v4295
        %vm4297 = vweird.f32 %v4198
        %vm4298 = vweird.f32 %v4292
        %vm4299 = vmor %vm4297, %vm4298
        %v4300 = vsel %vm4299, %v4292, %v4296
        %v4301 = vand.u32 2147483647, %v4198
        %vm4302 = vcmp.eq.f32.partialorder %v4301, 8.507059e+37
        %v4303 = vand.u32 %v4198, 2147483648
        %v4304 = vor.u32 1.1754944e-38, %v4303
        %v4305 = vsel %vm4302, %v4304, %v4300
        %v4306 = vmul.f32 1.0, %v4305
        %v4307 = vrcp.pop %v4199
        %v4308 = vmul.f32 %v4199, %v4307
        %v4309 = vsub.f32 1.0, %v4308
        %v4310 = vmul.f32 %v4307, %v4309
        %v4311 = vadd.f32 %v4307, %v4310
        %vm4312 = vweird.f32 %v4199
        %vm4313 = vweird.f32 %v4307
        %vm4314 = vmor %vm4312, %vm4313
        %v4315 = vsel %vm4314, %v4307, %v4311
        %v4316 = vand.u32 2147483647, %v4199
        %vm4317 = vcmp.eq.f32.partialorder %v4316, 8.507059e+37
        %v4318 = vand.u32 %v4199, 2147483648
        %v4319 = vor.u32 1.1754944e-38, %v4318
        %v4320 = vsel %vm4317, %v4319, %v4315
        %v4321 = vmul.f32 1.0, %v4320
        %v4322 = vrcp.pop %v4200
        %v4323 = vmul.f32 %v4200, %v4322
        %v4324 = vsub.f32 1.0, %v4323
        %v4325 = vmul.f32 %v4322, %v4324
        %v4326 = vadd.f32 %v4322, %v4325
        %vm4327 = vweird.f32 %v4200
        %vm4328 = vweird.f32 %v4322
        %vm4329 = vmor %vm4327, %vm4328
        %v4330 = vsel %vm4329, %v4322, %v4326
        %v4331 = vand.u32 2147483647, %v4200
        %vm4332 = vcmp.eq.f32.partialorder %v4331, 8.507059e+37
        %v4333 = vand.u32 %v4200, 2147483648
        %v4334 = vor.u32 1.1754944e-38, %v4333
        %v4335 = vsel %vm4332, %v4334, %v4330
        %v4336 = vmul.f32 1.0, %v4335
        %v4337 = vrcp.pop %v4201
        %v4338 = vmul.f32 %v4201, %v4337
        %v4339 = vsub.f32 1.0, %v4338
        %v4340 = vmul.f32 %v4337, %v4339
        %v4341 = vadd.f32 %v4337, %v4340
        %vm4342 = vweird.f32 %v4201
        %vm4343 = vweird.f32 %v4337
        %vm4344 = vmor %vm4342, %vm4343
        %v4345 = vsel %vm4344, %v4337, %v4341
        %v4346 = vand.u32 2147483647, %v4201
        %vm4347 = vcmp.eq.f32.partialorder %v4346, 8.507059e+37
        %v4348 = vand.u32 %v4201, 2147483648
        %v4349 = vor.u32 1.1754944e-38, %v4348
        %v4350 = vsel %vm4347, %v4349, %v4345
        %v4351 = vmul.f32 1.0, %v4350
        %v4352 = vrcp.pop %v4202
        %v4353 = vmul.f32 %v4202, %v4352
        %v4354 = vsub.f32 1.0, %v4353
        %v4355 = vmul.f32 %v4352, %v4354
        %v4356 = vadd.f32 %v4352, %v4355
        %vm4357 = vweird.f32 %v4202
        %vm4358 = vweird.f32 %v4352
        %vm4359 = vmor %vm4357, %vm4358
        %v4360 = vsel %vm4359, %v4352, %v4356
        %v4361 = vand.u32 2147483647, %v4202
        %vm4362 = vcmp.eq.f32.partialorder %v4361, 8.507059e+37
        %v4363 = vand.u32 %v4202, 2147483648
        %v4364 = vor.u32 1.1754944e-38, %v4363
        %v4365 = vsel %vm4362, %v4364, %v4360
        %v4366 = vmul.f32 1.0, %v4365
        %v4367 = vrcp.pop %v4203
        %v4368 = vmul.f32 %v4203, %v4367
        %v4369 = vsub.f32 1.0, %v4368
        %v4370 = vmul.f32 %v4367, %v4369
        %v4371 = vadd.f32 %v4367, %v4370
        %vm4372 = vweird.f32 %v4203
        %vm4373 = vweird.f32 %v4367
        %vm4374 = vmor %vm4372, %vm4373
        %v4375 = vsel %vm4374, %v4367, %v4371
        %v4376 = vand.u32 2147483647, %v4203
        %vm4377 = vcmp.eq.f32.partialorder %v4376, 8.507059e+37
        %v4378 = vand.u32 %v4203, 2147483648
        %v4379 = vor.u32 1.1754944e-38, %v4378
        %v4380 = vsel %vm4377, %v4379, %v4375
        %v4381 = vmul.f32 1.0, %v4380
        %v4382 = vrcp.pop %v4204
        %v4383 = vmul.f32 %v4204, %v4382
        %v4384 = vsub.f32 1.0, %v4383
        %v4385 = vmul.f32 %v4382, %v4384
        %v4386 = vadd.f32 %v4382, %v4385
        %vm4387 = vweird.f32 %v4204
        %vm4388 = vweird.f32 %v4382
        %vm4389 = vmor %vm4387, %vm4388
        %v4390 = vsel %vm4389, %v4382, %v4386
        %v4391 = vand.u32 2147483647, %v4204
        %vm4392 = vcmp.eq.f32.partialorder %v4391, 8.507059e+37
        %v4393 = vand.u32 %v4204, 2147483648
        %v4394 = vor.u32 1.1754944e-38, %v4393
        %v4395 = vsel %vm4392, %v4394, %v4390
        %v4396 = vmul.f32 1.0, %v4395
        %v4397 = vrcp.pop %v4205
        %v4398 = vmul.f32 %v4205, %v4397
        %v4399 = vsub.f32 1.0, %v4398
        %v4400 = vmul.f32 %v4397, %v4399
        %v4401 = vadd.f32 %v4397, %v4400
        %vm4402 = vweird.f32 %v4205
        %vm4403 = vweird.f32 %v4397
        %vm4404 = vmor %vm4402, %vm4403
        %v4405 = vsel %vm4404, %v4397, %v4401
        %v4406 = vand.u32 2147483647, %v4205
        %vm4407 = vcmp.eq.f32.partialorder %v4406, 8.507059e+37
        %v4408 = vand.u32 %v4205, 2147483648
        %v4409 = vor.u32 1.1754944e-38, %v4408
        %v4410 = vsel %vm4407, %v4409, %v4405
        %v4411 = vmul.f32 1.0, %v4410
        %v4412 = vrcp.pop %v4206
        %v4413 = vmul.f32 %v4206, %v4412
        %v4414 = vsub.f32 1.0, %v4413
        %v4415 = vmul.f32 %v4412, %v4414
        %v4416 = vadd.f32 %v4412, %v4415
        %vm4417 = vweird.f32 %v4206
        %vm4418 = vweird.f32 %v4412
        %vm4419 = vmor %vm4417, %vm4418
        %v4420 = vsel %vm4419, %v4412, %v4416
        %v4421 = vand.u32 2147483647, %v4206
        %vm4422 = vcmp.eq.f32.partialorder %v4421, 8.507059e+37
        %v4423 = vand.u32 %v4206, 2147483648
        %v4424 = vor.u32 1.1754944e-38, %v4423
        %v4425 = vsel %vm4422, %v4424, %v4420
        %v4426 = vmul.f32 1.0, %v4425
        %v4427 = vrcp.pop %v4207
        %v4428 = vmul.f32 %v4207, %v4427
        %v4429 = vsub.f32 1.0, %v4428
        %v4430 = vmul.f32 %v4427, %v4429
        %v4431 = vadd.f32 %v4427, %v4430
        %vm4432 = vweird.f32 %v4207
        %vm4433 = vweird.f32 %v4427
        %vm4434 = vmor %vm4432, %vm4433
        %v4435 = vsel %vm4434, %v4427, %v4431
        %v4436 = vand.u32 2147483647, %v4207
        %vm4437 = vcmp.eq.f32.partialorder %v4436, 8.507059e+37
        %v4438 = vand.u32 %v4207, 2147483648
        %v4439 = vor.u32 1.1754944e-38, %v4438
        %v4440 = vsel %vm4437, %v4439, %v4435
        %v4441 = vmul.f32 1.0, %v4440
        %v4442 = vrcp.pop %v4208
        %v4443 = vmul.f32 %v4208, %v4442
        %v4444 = vsub.f32 1.0, %v4443
        %v4445 = vmul.f32 %v4442, %v4444
        %v4446 = vadd.f32 %v4442, %v4445
        %vm4447 = vweird.f32 %v4208
        %vm4448 = vweird.f32 %v4442
        %vm4449 = vmor %vm4447, %vm4448
        %v4450 = vsel %vm4449, %v4442, %v4446
        %v4451 = vand.u32 2147483647, %v4208
        %vm4452 = vcmp.eq.f32.partialorder %v4451, 8.507059e+37
        %v4453 = vand.u32 %v4208, 2147483648
        %v4454 = vor.u32 1.1754944e-38, %v4453
        %v4455 = vsel %vm4452, %v4454, %v4450
        %v4456 = vmul.f32 1.0, %v4455
        %v4457 = vrcp.pop %v4209
        %v4458 = vmul.f32 %v4209, %v4457
        %v4459 = vsub.f32 1.0, %v4458
        %v4460 = vmul.f32 %v4457, %v4459
        %v4461 = vadd.f32 %v4457, %v4460
        %vm4462 = vweird.f32 %v4209
        %vm4463 = vweird.f32 %v4457
        %vm4464 = vmor %vm4462, %vm4463
        %v4465 = vsel %vm4464, %v4457, %v4461
        %v4466 = vand.u32 2147483647, %v4209
        %vm4467 = vcmp.eq.f32.partialorder %v4466, 8.507059e+37
        %v4468 = vand.u32 %v4209, 2147483648
        %v4469 = vor.u32 1.1754944e-38, %v4468
        %v4470 = vsel %vm4467, %v4469, %v4465
        %v4471 = vmul.f32 1.0, %v4470
        %v4472 = vrcp.pop %v4210
        %v4473 = vmul.f32 %v4210, %v4472
        %v4474 = vsub.f32 1.0, %v4473
        %v4475 = vmul.f32 %v4472, %v4474
        %v4476 = vadd.f32 %v4472, %v4475
        %vm4477 = vweird.f32 %v4210
        %vm4478 = vweird.f32 %v4472
        %vm4479 = vmor %vm4477, %vm4478
        %v4480 = vsel %vm4479, %v4472, %v4476
        %v4481 = vand.u32 2147483647, %v4210
        %vm4482 = vcmp.eq.f32.partialorder %v4481, 8.507059e+37
        %v4483 = vand.u32 %v4210, 2147483648
        %v4484 = vor.u32 1.1754944e-38, %v4483
        %v4485 = vsel %vm4482, %v4484, %v4480
        %v4486 = vmul.f32 1.0, %v4485
        %v4487 = vrcp.pop %v4211
        %v4488 = vmul.f32 %v4211, %v4487
        %v4489 = vsub.f32 1.0, %v4488
        %v4490 = vmul.f32 %v4487, %v4489
        %v4491 = vadd.f32 %v4487, %v4490
        %vm4492 = vweird.f32 %v4211
        %vm4493 = vweird.f32 %v4487
        %vm4494 = vmor %vm4492, %vm4493
        %v4495 = vsel %vm4494, %v4487, %v4491
        %v4496 = vand.u32 2147483647, %v4211
        %vm4497 = vcmp.eq.f32.partialorder %v4496, 8.507059e+37
        %v4498 = vand.u32 %v4211, 2147483648
        %v4499 = vor.u32 1.1754944e-38, %v4498
        %v4500 = vsel %vm4497, %v4499, %v4495
        %v4501 = vmul.f32 1.0, %v4500
        %v4502 = vrcp.pop %v4212
        %v4503 = vmul.f32 %v4212, %v4502
        %v4504 = vsub.f32 1.0, %v4503
        %v4505 = vmul.f32 %v4502, %v4504
        %v4506 = vadd.f32 %v4502, %v4505
        %vm4507 = vweird.f32 %v4212
        %vm4508 = vweird.f32 %v4502
        %vm4509 = vmor %vm4507, %vm4508
        %v4510 = vsel %vm4509, %v4502, %v4506
        %v4511 = vand.u32 2147483647, %v4212
        %vm4512 = vcmp.eq.f32.partialorder %v4511, 8.507059e+37
        %v4513 = vand.u32 %v4212, 2147483648
        %v4514 = vor.u32 1.1754944e-38, %v4513
        %v4515 = vsel %vm4512, %v4514, %v4510
        %v4516 = vmul.f32 1.0, %v4515
        %v4517 = vrcp.pop %v4213
        %v4518 = vmul.f32 %v4213, %v4517
        %v4519 = vsub.f32 1.0, %v4518
        %v4520 = vmul.f32 %v4517, %v4519
        %v4521 = vadd.f32 %v4517, %v4520
        %vm4522 = vweird.f32 %v4213
        %vm4523 = vweird.f32 %v4517
        %vm4524 = vmor %vm4522, %vm4523
        %v4525 = vsel %vm4524, %v4517, %v4521
        %v4526 = vand.u32 2147483647, %v4213
        %vm4527 = vcmp.eq.f32.partialorder %v4526, 8.507059e+37
        %v4528 = vand.u32 %v4213, 2147483648
        %v4529 = vor.u32 1.1754944e-38, %v4528
        %v4530 = vsel %vm4527, %v4529, %v4525
        %v4531 = vmul.f32 1.0, %v4530
        %v4532 = vrcp.pop %v4214
        %v4533 = vmul.f32 %v4214, %v4532
        %v4534 = vsub.f32 1.0, %v4533
        %v4535 = vmul.f32 %v4532, %v4534
        %v4536 = vadd.f32 %v4532, %v4535
        %vm4537 = vweird.f32 %v4214
        %vm4538 = vweird.f32 %v4532
        %vm4539 = vmor %vm4537, %vm4538
        %v4540 = vsel %vm4539, %v4532, %v4536
        %v4541 = vand.u32 2147483647, %v4214
        %vm4542 = vcmp.eq.f32.partialorder %v4541, 8.507059e+37
        %v4543 = vand.u32 %v4214, 2147483648
        %v4544 = vor.u32 1.1754944e-38, %v4543
        %v4545 = vsel %vm4542, %v4544, %v4540
        %v4546 = vmul.f32 1.0, %v4545
        %v4547 = vrcp.pop %v4215
        %v4548 = vmul.f32 %v4215, %v4547
        %v4549 = vsub.f32 1.0, %v4548
        %v4550 = vmul.f32 %v4547, %v4549
        %v4551 = vadd.f32 %v4547, %v4550
        %vm4552 = vweird.f32 %v4215
        %vm4553 = vweird.f32 %v4547
        %vm4554 = vmor %vm4552, %vm4553
        %v4555 = vsel %vm4554, %v4547, %v4551
        %v4556 = vand.u32 2147483647, %v4215
        %vm4557 = vcmp.eq.f32.partialorder %v4556, 8.507059e+37
        %v4558 = vand.u32 %v4215, 2147483648
        %v4559 = vor.u32 1.1754944e-38, %v4558
        %v4560 = vsel %vm4557, %v4559, %v4555
        %v4561 = vmul.f32 1.0, %v4560
        %v4562 = vrcp.pop %v4216
        %v4563 = vmul.f32 %v4216, %v4562
        %v4564 = vsub.f32 1.0, %v4563
        %v4565 = vmul.f32 %v4562, %v4564
        %v4566 = vadd.f32 %v4562, %v4565
        %vm4567 = vweird.f32 %v4216
        %vm4568 = vweird.f32 %v4562
        %vm4569 = vmor %vm4567, %vm4568
        %v4570 = vsel %vm4569, %v4562, %v4566
        %v4571 = vand.u32 2147483647, %v4216
        %vm4572 = vcmp.eq.f32.partialorder %v4571, 8.507059e+37
        %v4573 = vand.u32 %v4216, 2147483648
        %v4574 = vor.u32 1.1754944e-38, %v4573
        %v4575 = vsel %vm4572, %v4574, %v4570
        %v4576 = vmul.f32 1.0, %v4575
        %v4577 = vadd.f32 %v3493, %v4231
        %v4578 = vadd.f32 %v3494, %v4246
        %v4579 = vadd.f32 %v3495, %v4261
        %v4580 = vadd.f32 %v3496, %v4276
        %v4581 = vadd.f32 %v3497, %v4291
        %v4582 = vadd.f32 %v3498, %v4306
        %v4583 = vadd.f32 %v3499, %v4321
        %v4584 = vadd.f32 %v3500, %v4336
        %v4585 = vadd.f32 %v3501, %v4351
        %v4586 = vadd.f32 %v3502, %v4366
        %v4587 = vadd.f32 %v3503, %v4381
        %v4588 = vadd.f32 %v3504, %v4396
        %v4589 = vadd.f32 %v3505, %v4411
        %v4590 = vadd.f32 %v3506, %v4426
        %v4591 = vadd.f32 %v3507, %v4441
        %v4592 = vadd.f32 %v3508, %v4456
        %v4593 = vadd.f32 %v3509, %v4471
        %v4594 = vadd.f32 %v3510, %v4486
        %v4595 = vadd.f32 %v3511, %v4501
        %v4596 = vadd.f32 %v3512, %v4516
        %v4597 = vadd.f32 %v3513, %v4531
        %v4598 = vadd.f32 %v3514, %v4546
        %v4599 = vadd.f32 %v3515, %v4561
        %v4600 = vadd.f32 %v3516, %v4576
        %v4601 = vmul.f32 %v4577, 0.25
        %v4602 = vmul.f32 %v4578, 0.25
        %v4603 = vmul.f32 %v4579, 0.25
        %v4604 = vmul.f32 %v4580, 0.25
        %v4605 = vmul.f32 %v4581, 0.25
        %v4606 = vmul.f32 %v4582, 0.25
        %v4607 = vmul.f32 %v4583, 0.25
        %v4608 = vmul.f32 %v4584, 0.25
        %v4609 = vmul.f32 %v4585, 0.25
        %v4610 = vmul.f32 %v4586, 0.25
        %v4611 = vmul.f32 %v4587, 0.25
        %v4612 = vmul.f32 %v4588, 0.25
        %v4613 = vmul.f32 %v4589, 0.25
        %v4614 = vmul.f32 %v4590, 0.25
        %v4615 = vmul.f32 %v4591, 0.25
        %v4616 = vmul.f32 %v4592, 0.25
        %v4617 = vmul.f32 %v4593, 0.25
        %v4618 = vmul.f32 %v4594, 0.25
        %v4619 = vmul.f32 %v4595, 0.25
        %v4620 = vmul.f32 %v4596, 0.25
        %v4621 = vmul.f32 %v4597, 0.25
        %v4622 = vmul.f32 %v4598, 0.25
        %v4623 = vmul.f32 %v4599, 0.25
        %v4624 = vmul.f32 %v4600, 0.25
        %4625 = vst.msk [vmem:[%s163] sm:$0xff] %vm195, %v4601
        %4626 = vst.msk [vmem:[%s163 + $0x8] sm:$0xff] %vm195, %v4602
        %4627 = vst.msk [vmem:[%s163 + $0x10] sm:$0xff] %vm195, %v4603
        %4628 = vst.msk [vmem:[%s163 + $0x18] sm:$0xff] %vm195, %v4604
        %4629 = vst.msk [vmem:[%s163 + $0x20] sm:$0xff] %vm195, %v4605
        %4630 = vst.msk [vmem:[%s163 + $0x28] sm:$0xff] %vm195, %v4606
        %4631 = vst.msk [vmem:[%s163 + $0x30] sm:$0xff] %vm195, %v4607
        %4632 = vst.msk [vmem:[%s163 + $0x38] sm:$0xff] %vm195, %v4608
        %4633 = vst.msk [vmem:[%s163 + $0x40] sm:$0xff] %vm195, %v4609
        %4634 = vst.msk [vmem:[%s163 + $0x48] sm:$0xff] %vm195, %v4610
        %4635 = vst.msk [vmem:[%s163 + $0x50] sm:$0xff] %vm195, %v4611
        %4636 = vst.msk [vmem:[%s163 + $0x58] sm:$0xff] %vm195, %v4612
        %4637 = vst.msk [vmem:[%s163 + $0x60] sm:$0xff] %vm195, %v4613
        %4638 = vst.msk [vmem:[%s163 + $0x68] sm:$0xff] %vm195, %v4614
        %4639 = vst.msk [vmem:[%s163 + $0x70] sm:$0xff] %vm195, %v4615
        %4640 = vst.msk [vmem:[%s163 + $0x78] sm:$0xff] %vm195, %v4616
        %4641 = vst.msk [vmem:[%s163 + $0x80] sm:$0xff] %vm195, %v4617
        %4642 = vst.msk [vmem:[%s163 + $0x88] sm:$0xff] %vm195, %v4618
        %4643 = vst.msk [vmem:[%s163 + $0x90] sm:$0xff] %vm195, %v4619
        %4644 = vst.msk [vmem:[%s163 + $0x98] sm:$0xff] %vm195, %v4620
        %4645 = vst.msk [vmem:[%s163 + $0xa0] sm:$0xff] %vm195, %v4621
        %4646 = vst.msk [vmem:[%s163 + $0xa8] sm:$0xff] %vm195, %v4622
        %4647 = vst.msk [vmem:[%s163 + $0xb0] sm:$0xff] %vm195, %v4623
        %4648 = vst.msk [vmem:[%s163 + $0xb8] sm:$0xff] %vm195, %v4624
        %s4649 = sand.u32 %s93, 1
        %s4650 = scalar_lea.sflag [#allocation3], %s4649
        %s4651 = sand.u32 %s93, 1
        %s4652 = smul.addr %s4651, 192
        %s4653 = scalar_lea.vmem [#allocation2], %s4652
        // Predicated region
        $region33: #{tpu_custom_call.1} parent=31 // pred_check
          %p4654 = pneg %p103
        $region34: #{tpu_custom_call.1} parent=31 // pred_check_branch
          %4656 = sbr.rel (%p4654) target = $region36
        $region35: #{tpu_custom_call.1} parent=31 // pred_region
          %4658 = vsyncadd %s4650, 0
          %s4659 = smul.addr %s17, 24
          %s4660 = smul.addr %s4659, 8
          %s4661 = scalar_lea.hbm %s3, %s4660
          %s4662 = sshll.u32 %s4653, 4
          %s4663 = int_to_ptr.vmem [resolvable:$true] %s4662
          %s4664 = sshll.u32 %s4661, 4
          %s4665 = int_to_ptr.hbm [resolvable:$true] %s4664
          %4670 = dma.vmem_to_hbm [thread:$0]  %s4663, 3072, %s4665, %s4650, 128, 128, 8
        $region36: #{tpu_custom_call.1} parent=31 // pred_fallthru
          _
      $region32: #{tpu_custom_call.1} parent=5 // pred_fallthru
        _
      %p4671 = scmp.le.s32.totalorder 2, %s12
      // Predicated region
      $region37: #{tpu_custom_call.1} parent=5 // pred_check
        %p4672 = pneg %p4671
      $region38: #{tpu_custom_call.1} parent=5 // pred_check_branch
        %4674 = sbr.rel (%p4672) target = $region40
      $region39: #{tpu_custom_call.1} parent=5 // pred_region
        %s4675 = ssub.s32 %s12, 2
        // Predicated region
        $region41: #{tpu_custom_call.1} parent=39 // pred_check
          %p4676 = pneg %p109
        $region42: #{tpu_custom_call.1} parent=39 // pred_check_branch
          %4678 = sbr.rel (%p4676) target = $region44
        $region43: #{tpu_custom_call.1} parent=39 // pred_region
          %s4679 = sand.u32 %s94, 1
          %s4680 = scalar_lea.sflag [#allocation3], %s4679
          %s4681 = sand.u32 %s94, 1
          %s4682 = smul.addr %s4681, 192
          %s4683 = scalar_lea.vmem [#allocation2], %s4682
          %4685 = dma.done %s4680, 3072
        $region44: #{tpu_custom_call.1} parent=39 // pred_fallthru
          _
      $region40: #{tpu_custom_call.1} parent=5 // pred_fallthru
        _
    $region6: #{tpu_custom_call.1} parent=1 // loop_footer
      %s16 = sadd.s32 1, %s12
    $region7: #{tpu_custom_call.1} parent=1 // loop_footer_branch
      %11 = sbr.rel target = $region3
    $region8: #{tpu_custom_call.1} parent=1 // loop_exit
      _
    %4686 = vsyncpa [#allocation3], 1
    %s4687 = scalar_lea.sflag [#allocation3], 1
    %4688 = vsyncpa %s4687, 1

</llo_original>
